<compile_context>
chip_gen: v7x
topology: tpu7x:2x2x1
jax: 0.10.0
libtpu: 0.0.40
codegen_flags: <defaults>
</compile_context>

<pallas_src>
import functools

import jax
import jax.numpy as jnp
from jax.experimental import pallas as pl
from jax.experimental.pallas import tpu as pltpu


# ------------------------------ small helpers -------------------------------

def _round_up(x, m):
    return ((x + m - 1) // m) * m


def _pad2(x, rows, cols):
    r, c = x.shape
    if r == rows and c == cols:
        return x
    return jnp.pad(x, ((0, rows - r), (0, cols - c)))


def _pad1(x, n):
    (m,) = x.shape
    if m == n:
        return x
    return jnp.pad(x, ((0, n - m),))


# ----------------------------- matmul kernels -------------------------------

def _matmul_kernel(*refs, activation, has_bias, has_res, k_tiled):
    """(K-tiled) matmul; optional bias / quick-GELU / residual fused in epilogue."""
    x_ref, w_ref = refs[0], refs[1]
    idx = 2
    b_ref = r_ref = None
    if has_bias:
        b_ref = refs[idx]; idx += 1
    if has_res:
        r_ref = refs[idx]; idx += 1
    o_ref = refs[idx]; idx += 1
    acc_ref = refs[idx] if k_tiled else None

    def epilogue(acc):
        y = acc
        if has_bias:
            y = y + b_ref[...]
        if activation == "gelu":                 # quick-GELU: y * sigmoid(1.702 y)
            y = y * jax.nn.sigmoid(1.702 * y)
        if has_res:
            y = y + r_ref[...].astype(jnp.float32)
        o_ref[...] = y.astype(o_ref.dtype)

    x = x_ref[...]
    if x.dtype != jnp.bfloat16:
        x = x.astype(jnp.bfloat16)               # bf16 MXU inputs, f32 accumulation

    if k_tiled:
        @pl.when(pl.program_id(2) == 0)
        def _():
            acc_ref[...] = jnp.zeros_like(acc_ref)

        acc_ref[...] += jnp.dot(x, w_ref[...], preferred_element_type=jnp.float32)

        @pl.when(pl.program_id(2) == pl.num_programs(2) - 1)
        def _():
            epilogue(acc_ref[...])
    else:
        epilogue(jnp.dot(x, w_ref[...], preferred_element_type=jnp.float32))


def linear(x2d, w, b=None, residual=None, activation=None, out_dtype=jnp.float32,
           tm_target=512, tn_target=512, tk_target=512):
    """y = x2d @ w [+ b] [quickGELU] [+ residual].  x2d:(M,K) w:(K,N)."""
    M, K = x2d.shape
    K2, N = w.shape
    assert K == K2

    tm = min(tm_target, _round_up(M, 8));   Mp = _round_up(M, tm)
    tn = min(tn_target, _round_up(N, 128)); Np = _round_up(N, tn)
    tk = min(tk_target, _round_up(K, 128)); Kp = _round_up(K, tk)
    k_tiled = (Kp // tk) > 1

    xp = _pad2(x2d, Mp, Kp)
    wp = _pad2(w, Kp, Np)

    if k_tiled:
        grid = (Mp // tm, Np // tn, Kp // tk)
        x_map = lambda i, j, k: (i, k)
        w_map = lambda i, j, k: (k, j)
        o_map = lambda i, j, k: (i, j)
        v_map = lambda i, j, k: (0, j)
        sem = ("parallel", "parallel", "arbitrary")
        scratch = [pltpu.VMEM((tm, tn), jnp.float32)]
    else:
        grid = (Mp // tm, Np // tn)
        x_map = lambda i, j: (i, 0)
        w_map = lambda i, j: (0, j)
        o_map = lambda i, j: (i, j)
        v_map = lambda i, j: (0, j)
        sem = ("parallel", "parallel")
        scratch = []

    in_specs = [pl.BlockSpec((tm, tk), x_map), pl.BlockSpec((tk, tn), w_map)]
    args = [xp, wp]
    if b is not None:
        in_specs.append(pl.BlockSpec((1, tn), v_map))
        args.append(_pad1(b, Np).reshape(1, Np))
    if residual is not None:
        in_specs.append(pl.BlockSpec((tm, tn), o_map))
        args.append(_pad2(residual, Mp, Np))

    kern = functools.partial(_matmul_kernel, activation=activation,
                             has_bias=b is not None, has_res=residual is not None,
                             k_tiled=k_tiled)
    out = pl.pallas_call(
        kern,
        grid=grid,
        out_shape=jax.ShapeDtypeStruct((Mp, Np), out_dtype),
        in_specs=in_specs,
        out_specs=pl.BlockSpec((tm, tn), o_map),
        scratch_shapes=scratch,
        compiler_params=pltpu.CompilerParams(dimension_semantics=sem),
    )(*args)
    return out[:M, :N]


# ------------------------- fused LayerNorm + linear --------------------------

def _ln_linear_kernel(x_ref, g_ref, bln_ref, w_ref, b_ref, o_ref, xn_ref, *,
                      eps, h_real, activation):
    """LN computed once per row tile (j==0), cached in bf16 VMEM scratch."""
    @pl.when(pl.program_id(1) == 0)
    def _():
        x = x_ref[...].astype(jnp.float32)               # (tm, Kp)
        kp = x.shape[1]
        mu = jnp.sum(x, axis=-1, keepdims=True) * (1.0 / h_real)
        xc = x - mu
        if kp != h_real:                                 # mask padded lanes
            lane = jax.lax.broadcasted_iota(jnp.int32, x.shape, 1)
            xc = jnp.where(lane < h_real, xc, 0.0)
        var = jnp.sum(xc * xc, axis=-1, keepdims=True) * (1.0 / h_real)
        xn = xc * jax.lax.rsqrt(var + eps) * g_ref[...] + bln_ref[...]
        xn_ref[...] = xn.astype(jnp.bfloat16)

    y = jnp.dot(xn_ref[...], w_ref[...], preferred_element_type=jnp.float32)
    y = y + b_ref[...]
    if activation == "gelu":
        y = y * jax.nn.sigmoid(1.702 * y)
    o_ref[...] = y.astype(o_ref.dtype)


def ln_linear(x2d, g, bln, w, b, activation=None, out_dtype=jnp.float32,
              eps=1e-5, tm_target=512, tn_target=512):
    """LayerNorm(x2d) @ w + b, fused; K (= hidden) lives in one block."""
    M, K = x2d.shape
    K2, N = w.shape
    assert K == K2

    Kp = _round_up(K, 128)
    tm = min(tm_target, _round_up(M, 8));   Mp = _round_up(M, tm)
    tn = min(tn_target, _round_up(N, 128)); Np = _round_up(N, tn)

    xp = _pad2(x2d, Mp, Kp)
    wp = _pad2(w, Kp, Np)
    gp = _pad1(g, Kp).reshape(1, Kp)
    blnp = _pad1(bln, Kp).reshape(1, Kp)
    bp = _pad1(b, Np).reshape(1, Np)

    kern = functools.partial(_ln_linear_kernel, eps=eps, h_real=K,
                             activation=activation)
    out = pl.pallas_call(
        kern,
        grid=(Mp // tm, Np // tn),
        out_shape=jax.ShapeDtypeStruct((Mp, Np), out_dtype),
        in_specs=[
            pl.BlockSpec((tm, Kp), lambda i, j: (i, 0)),   # j-invariant: no re-DMA
            pl.BlockSpec((1, Kp), lambda i, j: (0, 0)),
            pl.BlockSpec((1, Kp), lambda i, j: (0, 0)),
            pl.BlockSpec((Kp, tn), lambda i, j: (0, j)),
            pl.BlockSpec((1, tn), lambda i, j: (0, j)),
        ],
        out_specs=pl.BlockSpec((tm, tn), lambda i, j: (i, j)),
        scratch_shapes=[pltpu.VMEM((tm, Kp), jnp.bfloat16)],
        compiler_params=pltpu.CompilerParams(
            dimension_semantics=("parallel", "arbitrary")),   # scratch reused over j
    )(xp, gp, blnp, wp, bp)
    return out[:M, :N]


# --------------------------- standalone LayerNorm ----------------------------

def _layernorm_kernel(x_ref, g_ref, b_ref, o_ref, *, eps, h_real):
    x = x_ref[...].astype(jnp.float32)
    kp = x.shape[1]
    mu = jnp.sum(x, axis=-1, keepdims=True) * (1.0 / h_real)
    xc = x - mu
    if kp != h_real:
        lane = jax.lax.broadcasted_iota(jnp.int32, x.shape, 1)
        xc = jnp.where(lane < h_real, xc, 0.0)
    var = jnp.sum(xc * xc, axis=-1, keepdims=True) * (1.0 / h_real)
    o_ref[...] = (xc * jax.lax.rsqrt(var + eps) * g_ref[...] + b_ref[...]
                  ).astype(o_ref.dtype)


def layernorm(x2d, g, b, eps=1e-5, tm_target=512):
    M, H = x2d.shape
    Hp = _round_up(H, 128)
    tm = min(tm_target, _round_up(M, 8))
    Mp = _round_up(M, tm)

    xp = _pad2(x2d, Mp, Hp)
    gp = _pad1(g, Hp).reshape(1, Hp)
    bp = _pad1(b, Hp).reshape(1, Hp)

    kern = functools.partial(_layernorm_kernel, eps=eps, h_real=H)
    out = pl.pallas_call(
        kern,
        grid=(Mp // tm,),
        out_shape=jax.ShapeDtypeStruct((Mp, Hp), jnp.float32),
        in_specs=[
            pl.BlockSpec((tm, Hp), lambda i: (i, 0)),
            pl.BlockSpec((1, Hp), lambda i: (0, 0)),
            pl.BlockSpec((1, Hp), lambda i: (0, 0)),
        ],
        out_specs=pl.BlockSpec((tm, Hp), lambda i: (i, 0)),
        compiler_params=pltpu.CompilerParams(dimension_semantics=("parallel",)),
    )(xp, gp, bp)
    return out[:M, :H]


# -------------------------------- attention ----------------------------------

def _build_attn_bias(S, causal, mask_row):
    """Additive (S,S)/(1,S) bias built in-kernel (no (B,S,S) HBM DMA)."""
    bias = None
    if causal:
        qi = jax.lax.broadcasted_iota(jnp.int32, (S, S), 0)
        ki = jax.lax.broadcasted_iota(jnp.int32, (S, S), 1)
        bias = jnp.where(ki > qi, -1e9, 0.0).astype(jnp.float32)
    if mask_row is not None:                       # (1, S): 1 visible, 0 masked
        mb = (1.0 - mask_row) * jnp.float32(-1e9)
        bias = mb if bias is None else bias + mb
    return bias


def _attn_heads(q, k, v, bias, nh, hd, scale, out_dtype):
    """q,k,v: (S, nh*hd) bf16 slabs; returns (S, nh*hd) out_dtype."""
    outs = []
    for h in range(nh):                            # static unroll over heads
        qh = q[:, h * hd:(h + 1) * hd] * scale     # scale folded into q (S*hd mults)
        kh = k[:, h * hd:(h + 1) * hd]
        vh = v[:, h * hd:(h + 1) * hd]
        s = jax.lax.dot_general(qh, kh, (((1,), (1,)), ((), ())),
                                preferred_element_type=jnp.float32)
        if bias is not None:
            s = s + bias
        s = s - jnp.max(s, axis=-1, keepdims=True)
        p = jnp.exp(s)
        p = p * pl.reciprocal(jnp.sum(p, axis=-1, keepdims=True), approx=True)
        outs.append(jnp.dot(p.astype(vh.dtype), vh,
                            preferred_element_type=jnp.float32).astype(out_dtype))
    return jnp.concatenate(outs, axis=-1) if nh > 1 else outs[0]


def _attention_slab_kernel(qkv_ref, *rest, nh, hd, scale, causal, has_mask):
    """Per-batch attention on the full (S, 3H) QKV slab."""
    if has_mask:
        mask_ref, o_ref = rest
        mask_row = mask_ref[0]                     # (1, S)
    else:
        (o_ref,) = rest
        mask_row = None
    qkv = qkv_ref[0]                               # (S, 3H) bf16
    S = qkv.shape[0]
    H = nh * hd
    bias = _build_attn_bias(S, causal, mask_row)
    o_ref[0] = _attn_heads(qkv[:, :H], qkv[:, H:2 * H], qkv[:, 2 * H:],
                           bias, nh, hd, scale, o_ref.dtype)


def _attention_grouped_kernel(q_ref, k_ref, v_ref, *rest, nh_g, hd, scale,
                              causal, has_mask):
    """Per-(batch, head-group) attention; output columns are a 128-aligned slab."""
    if has_mask:
        mask_ref, o_ref = rest
        mask_row = mask_ref[0]
    else:
        (o_ref,) = rest
        mask_row = None
    S = q_ref.shape[1]
    bias = _build_attn_bias(S, causal, mask_row)
    o_ref[0] = _attn_heads(q_ref[0], k_ref[0], v_ref[0],
                           bias, nh_g, hd, scale, o_ref.dtype)


def attention_core(qkv, mask, num_heads, causal):
    """qkv: (B,S,3H) bf16; mask: (B,S) {0,1} or None -> (B,S,H) bf16."""
    B, S, H3 = qkv.shape
    H = H3 // 3
    hd = H // num_heads
    scale = 1.0 / (hd ** 0.5)
    has_mask = mask is not None
    mask3 = mask.astype(jnp.float32).reshape(B, 1, S) if has_mask else None

    # Head-group parallel axis (keeps both v7x TensorCores busy at small B).
    # Requires 128-aligned output column slabs; falls back to G=1 otherwise.
    G = 1
    for cand in range(num_heads, 1, -1):
        if num_heads % cand == 0 and (H // cand) % 128 == 0:
            G = cand
            break

    if G > 1:
        Hg = H // G
        nh_g = num_heads // G
        kern = functools.partial(_attention_grouped_kernel, nh_g=nh_g, hd=hd,
                                 scale=scale, causal=causal, has_mask=has_mask)
        in_specs = [
            pl.BlockSpec((1, S, Hg), lambda b, g: (b, 0, g)),
            pl.BlockSpec((1, S, Hg), lambda b, g: (b, 0, G + g)),
            pl.BlockSpec((1, S, Hg), lambda b, g: (b, 0, 2 * G + g)),
        ]
        args = [qkv, qkv, qkv]
        if has_mask:
            in_specs.append(pl.BlockSpec((1, 1, S), lambda b, g: (b, 0, 0)))
            args.append(mask3)
        return pl.pallas_call(
            kern,
            grid=(B, G),
            out_shape=jax.ShapeDtypeStruct((B, S, H), jnp.bfloat16),
            in_specs=in_specs,
            out_specs=pl.BlockSpec((1, S, Hg), lambda b, g: (b, 0, g)),
            compiler_params=pltpu.CompilerParams(
                dimension_semantics=("parallel", "parallel")),
        )(*args)

    kern = functools.partial(_attention_slab_kernel, nh=num_heads, hd=hd,
                             scale=scale, causal=causal, has_mask=has_mask)
    in_specs = [pl.BlockSpec((1, S, H3), lambda b: (b, 0, 0))]
    args = [qkv]
    if has_mask:
        in_specs.append(pl.BlockSpec((1, 1, S), lambda b: (b, 0, 0)))
        args.append(mask3)
    return pl.pallas_call(
        kern,
        grid=(B,),
        out_shape=jax.ShapeDtypeStruct((B, S, H), jnp.bfloat16),
        in_specs=in_specs,
        out_specs=pl.BlockSpec((1, S, H), lambda b: (b, 0, 0)),
        compiler_params=pltpu.CompilerParams(dimension_semantics=("parallel",)),
    )(*args)


# ------------------------------- L2 normalize --------------------------------

def _l2norm_kernel(x_ref, o_ref, *, eps):
    x = x_ref[...]
    n2 = jnp.sum(x * x, axis=-1, keepdims=True)
    o_ref[...] = x * jax.lax.rsqrt(n2 + eps)


def l2_normalize(x2d, eps=1e-12):
    M, D = x2d.shape
    Mp, Dp = _round_up(M, 8), _round_up(D, 128)
    xp = _pad2(x2d, Mp, Dp)
    out = pl.pallas_call(
        functools.partial(_l2norm_kernel, eps=eps),
        grid=(1,),
        out_shape=jax.ShapeDtypeStruct((Mp, Dp), jnp.float32),
        in_specs=[pl.BlockSpec((Mp, Dp), lambda i: (0, 0))],
        out_specs=pl.BlockSpec((Mp, Dp), lambda i: (0, 0)),
    )(xp)
    return out[:M, :D]


# ------------------------------ model pieces ---------------------------------

def encoder_layer(p, x2d, B, S, attn_mask, causal, num_heads):
    """One CLIPEncoderLayer on the flattened (B*S, H) residual stream (f32)."""
    H = x2d.shape[1]

    # fused LN1 + QKV projection (single (H, 3H) weight), bf16 output
    qkv = ln_linear(x2d, p["ln1_g"], p["ln1_b"], p["qkv_w"], p["qkv_b"],
                    out_dtype=jnp.bfloat16)                       # (B*S, 3H)
    attn = attention_core(qkv.reshape(B, S, 3 * H), attn_mask, num_heads, causal)
    # o-projection with residual add fused into the kernel epilogue
    x2d = linear(attn.reshape(B * S, H), p["o_w"], p["o_b"], residual=x2d)

    # fused LN2 + fc1 + quick-GELU (bf16), then fc2 with fused residual add
    m = ln_linear(x2d, p["ln2_g"], p["ln2_b"], p["fc1_w"], p["fc1_b"],
                  activation="gelu", out_dtype=jnp.bfloat16)
    x2d = linear(m, p["fc2_w"], p["fc2_b"], residual=x2d)
    return x2d


def vision_model(p, pixel_values, cfg):
    B, C, Himg, Wimg = pixel_values.shape
    ps = cfg["patch_size"]
    gh, gw = Himg // ps, Wimg // ps
    H = cfg["hidden"]

    # TODO(synk): im2col reshape/transpose left as XLA glue (no Pallas win here).
    patches = pixel_values.reshape(B, C, gh, ps, gw, ps)
    patches = patches.transpose(0, 2, 4, 1, 3, 5).reshape(B * gh * gw, C * ps * ps)
    patches = patches.astype(jnp.bfloat16)          # halve activation DMA bytes

    patch_embed = linear(patches, p["patch_w"]).reshape(B, gh * gw, H)
    cls = jnp.broadcast_to(p["class_emb"][None, None, :], (B, 1, H))
    x = jnp.concatenate([cls, patch_embed], axis=1)               # (B, S, H)
    x = x + p["pos_emb"][None, :, :]

    S = x.shape[1]
    x2d = layernorm(x.reshape(B * S, H), p["pre_ln_g"], p["pre_ln_b"])

    for lp in p["layers"]:
        x2d = encoder_layer(lp, x2d, B, S, None, False, cfg["num_heads"])

    cls_tok = x2d.reshape(B, S, H)[:, 0]                          # (B, H)
    return layernorm(cls_tok, p["post_ln_g"], p["post_ln_b"])


def text_model(p, input_ids, attention_mask, cfg):
    B, S = input_ids.shape
    H = cfg["hidden"]

    # TODO(synk): token-embedding gather left to XLA (data-dependent gather).
    x = jnp.take(p["tok_emb"], input_ids, axis=0)                 # (B, S, H)
    x = x + p["pos_emb"][None, :S, :]
    x2d = x.reshape(B * S, H)

    # causal + padding bias is built inside the attention kernel from this mask
    for lp in p["layers"]:
        x2d = encoder_layer(lp, x2d, B, S, attention_mask, True, cfg["num_heads"])

    x = layernorm(x2d, p["final_ln_g"], p["final_ln_b"]).reshape(B, S, H)

    # TODO(synk): EOT pooling (hidden state at max token id) kept as XLA gather.
    eot = jnp.argmax(input_ids, axis=-1)
    pooled = x[jnp.arange(B), eot]                                # (B, H)
    return pooled


def clip_forward(params, input_ids, attention_mask, pixel_values, cfg):
    vis = vision_model(params["vision"], pixel_values, cfg["vision"])
    vis = linear(vis, params["visual_proj"])                      # bias=False
    vis = l2_normalize(vis)

    text = text_model(params["text"], input_ids, attention_mask, cfg["text"])
    text = linear(text, params["text_proj"])                      # bias=False
    text = l2_normalize(text)
    # logit_scale exists as a parameter but (as in the reference forward) is
    # not applied; the forward returns CLIPOutput(text_embeds, image_embeds).
    return text, vis


# ------------------------------- param init ----------------------------------

def init_params(key, cfg):
    keys = iter(jax.random.split(key, 512))

    def nrm(shape, scale=0.02, dtype=jnp.float32):
        return (jax.random.normal(next(keys), shape, jnp.float32) * scale
                ).astype(dtype)

    bf16 = jnp.bfloat16

    def init_layer(H, inter):
        return dict(
            ln1_g=jnp.ones((H,), jnp.float32), ln1_b=jnp.zeros((H,), jnp.float32),
            # fused q/k/v projection: columns [0:H]=q, [H:2H]=k, [2H:3H]=v
            qkv_w=nrm((H, 3 * H), dtype=bf16), qkv_b=nrm((3 * H,)),
            o_w=nrm((H, H), dtype=bf16), o_b=nrm((H,)),
            ln2_g=jnp.ones((H,), jnp.float32), ln2_b=jnp.zeros((H,), jnp.float32),
            fc1_w=nrm((H, inter), dtype=bf16), fc1_b=nrm((inter,)),
            fc2_w=nrm((inter, H), dtype=bf16), fc2_b=nrm((H,)),
        )

    v = cfg["vision"]
    t = cfg["text"]
    num_patches = (v["image_size"] // v["patch_size"]) ** 2

    vision = dict(
        class_emb=nrm((v["hidden"],), 1.0),
        patch_w=nrm((3 * v["patch_size"] ** 2, v["hidden"]), dtype=bf16),
        pos_emb=nrm((num_patches + 1, v["hidden"])),
        pre_ln_g=jnp.ones((v["hidden"],), jnp.float32),
        pre_ln_b=jnp.zeros((v["hidden"],), jnp.float32),
        post_ln_g=jnp.ones((v["hidden"],), jnp.float32),
        post_ln_b=jnp.zeros((v["hidden"],), jnp.float32),
        layers=[init_layer(v["hidden"], v["intermediate"])
                for _ in range(v["num_layers"])],
    )
    text = dict(
        tok_emb=nrm((t["vocab"], t["hidden"])),
        pos_emb=nrm((t["max_pos"], t["hidden"])),
        final_ln_g=jnp.ones((t["hidden"],), jnp.float32),
        final_ln_b=jnp.zeros((t["hidden"],), jnp.float32),
        layers=[init_layer(t["hidden"], t["intermediate"])
                for _ in range(t["num_layers"])],
    )
    params = dict(
        vision=vision,
        text=text,
        visual_proj=nrm((v["hidden"], cfg["projection_dim"]), dtype=bf16),
        text_proj=nrm((t["hidden"], cfg["projection_dim"]), dtype=bf16),
        logit_scale=jnp.array(2.6592, jnp.float32),  # present but unused in forward
    )
    return params


# ---------------------------------- main --------------------------------------

if __name__ == "__main__":
    cfg = dict(
        projection_dim=16,
        vision=dict(image_size=16, patch_size=8, hidden=32, num_heads=4,
                    intermediate=64, num_layers=2),
        text=dict(vocab=64, max_pos=8, hidden=32, num_heads=4,
                  intermediate=64, num_layers=2),
    )

    key = jax.random.PRNGKey(0)
    kp, kpix, kids = jax.random.split(key, 3)

    params = init_params(kp, cfg)

    B, seq = 2, 8
    pixel_values = jax.random.normal(kpix, (B, 3, 16, 16), jnp.float32)  # NCHW
    input_ids = jax.random.randint(kids, (B, seq), 0, cfg["text"]["vocab"],
                                   dtype=jnp.int32)
    attention_mask = jnp.array([[1, 1, 1, 1, 1, 1, 0, 0],
                                [1, 1, 1, 1, 0, 0, 0, 0]], jnp.int32)

    fwd = jax.jit(functools.partial(clip_forward, cfg=cfg))
    text_embeds, image_embeds = fwd(params, input_ids, attention_mask,
                                    pixel_values)
    jax.block_until_ready((text_embeds, image_embeds))

    assert text_embeds.shape == (B, cfg["projection_dim"])
    assert image_embeds.shape == (B, cfg["projection_dim"])
    assert bool(jnp.all(jnp.isfinite(text_embeds)))
    assert bool(jnp.all(jnp.isfinite(image_embeds)))
    print("KERNEL_OK")
</pallas_src>

<mosaic_0001>
module attributes {stable_mosaic.version = 11 : i64} {
  func.func @_attention_slab_kernel(%arg0: i32, %arg1: memref<1x5x96xbf16, #tpu.memory_space<vmem>>, %arg2: memref<1x5x32xbf16, #tpu.memory_space<vmem>>) attributes {dimension_semantics = [#tpu.dimension_semantics<parallel>], iteration_bounds = array<i64: 2>, scalar_prefetch = 0 : i64, scratch_operands = 0 : i64, tpu.core_type = #tpu.core_type<tc>, window_params = [{transform_indices = @transform_0, window_bounds = array<i64: 1, 5, 96>}, {transform_indices = @transform_1, window_bounds = array<i64: 1, 5, 32>}]} {
    %c0 = arith.constant 0 : index
    %c0_0 = arith.constant 0 : index
    %c0_1 = arith.constant 0 : index
    %0 = vector.load %arg1[%c0, %c0_0, %c0_1] : memref<1x5x96xbf16, #tpu.memory_space<vmem>>, vector<1x5x96xbf16>
    %1 = vector.shape_cast %0 : vector<1x5x96xbf16> to vector<5x96xbf16>
    %2 = vector.extract_strided_slice %1 {offsets = [0, 0], sizes = [5, 32], strides = [1, 1]} : vector<5x96xbf16> to vector<5x32xbf16>
    %3 = vector.extract_strided_slice %1 {offsets = [0, 32], sizes = [5, 32], strides = [1, 1]} : vector<5x96xbf16> to vector<5x32xbf16>
    %4 = vector.extract_strided_slice %1 {offsets = [0, 64], sizes = [5, 32], strides = [1, 1]} : vector<5x96xbf16> to vector<5x32xbf16>
    %5 = vector.extract_strided_slice %2 {offsets = [0, 0], sizes = [5, 8], strides = [1, 1]} : vector<5x32xbf16> to vector<5x8xbf16>
    %cst = arith.constant 3.535160e-01 : bf16
    %6 = vector.broadcast %cst : bf16 to vector<5x8xbf16>
    %7 = arith.mulf %5, %6 : vector<5x8xbf16>
    %8 = vector.extract_strided_slice %3 {offsets = [0, 0], sizes = [5, 8], strides = [1, 1]} : vector<5x32xbf16> to vector<5x8xbf16>
    %9 = vector.extract_strided_slice %4 {offsets = [0, 0], sizes = [5, 8], strides = [1, 1]} : vector<5x32xbf16> to vector<5x8xbf16>
    %cst_2 = arith.constant dense<0.000000e+00> : vector<5x5xf32>
    %10 = tpu.matmul %7, %8, %cst_2 {dimension_numbers = #tpu.dot_dimension_numbers<[1], [1], [0], [0], [0, 0, 1, 0], [], []>} : vector<5x8xbf16>, vector<5x8xbf16>, vector<5x5xf32> -> vector<5x5xf32>
    %cst_3 = arith.constant dense<0xFF800000> : vector<5xf32>
    %11 = vector.multi_reduction <maximumf>, %10, %cst_3 [1] : vector<5x5xf32> to vector<5xf32>
    %12 = vector.shape_cast %11 : vector<5xf32> to vector<5x1xf32>
    %13 = vector.broadcast %12 : vector<5x1xf32> to vector<5x5xf32>
    %14 = arith.subf %10, %13 : vector<5x5xf32>
    %15 = math.exp %14 : vector<5x5xf32>
    %cst_4 = arith.constant dense<0.000000e+00> : vector<5xf32>
    %16 = vector.multi_reduction <add>, %15, %cst_4 [1] : vector<5x5xf32> to vector<5xf32>
    %17 = vector.shape_cast %16 : vector<5xf32> to vector<5x1xf32>
    %18 = tpu.reciprocal %17 {approx = true} : vector<5x1xf32> -> vector<5x1xf32>
    %19 = vector.broadcast %18 : vector<5x1xf32> to vector<5x5xf32>
    %20 = arith.mulf %15, %19 : vector<5x5xf32>
    %21 = arith.truncf %20 : vector<5x5xf32> to vector<5x5xbf16>
    %cst_5 = arith.constant dense<0.000000e+00> : vector<5x8xf32>
    %22 = tpu.matmul %21, %9, %cst_5 {dimension_numbers = #tpu.dot_dimension_numbers<[1], [0], [0], [1], [0, 0, 1, 1], [], []>} : vector<5x5xbf16>, vector<5x8xbf16>, vector<5x8xf32> -> vector<5x8xf32>
    %23 = arith.truncf %22 : vector<5x8xf32> to vector<5x8xbf16>
    %24 = vector.extract_strided_slice %2 {offsets = [0, 8], sizes = [5, 8], strides = [1, 1]} : vector<5x32xbf16> to vector<5x8xbf16>
    %cst_6 = arith.constant 3.535160e-01 : bf16
    %25 = vector.broadcast %cst_6 : bf16 to vector<5x8xbf16>
    %26 = arith.mulf %24, %25 : vector<5x8xbf16>
    %27 = vector.extract_strided_slice %3 {offsets = [0, 8], sizes = [5, 8], strides = [1, 1]} : vector<5x32xbf16> to vector<5x8xbf16>
    %28 = vector.extract_strided_slice %4 {offsets = [0, 8], sizes = [5, 8], strides = [1, 1]} : vector<5x32xbf16> to vector<5x8xbf16>
    %cst_7 = arith.constant dense<0.000000e+00> : vector<5x5xf32>
    %29 = tpu.matmul %26, %27, %cst_7 {dimension_numbers = #tpu.dot_dimension_numbers<[1], [1], [0], [0], [0, 0, 1, 0], [], []>} : vector<5x8xbf16>, vector<5x8xbf16>, vector<5x5xf32> -> vector<5x5xf32>
    %cst_8 = arith.constant dense<0xFF800000> : vector<5xf32>
    %30 = vector.multi_reduction <maximumf>, %29, %cst_8 [1] : vector<5x5xf32> to vector<5xf32>
    %31 = vector.shape_cast %30 : vector<5xf32> to vector<5x1xf32>
    %32 = vector.broadcast %31 : vector<5x1xf32> to vector<5x5xf32>
    %33 = arith.subf %29, %32 : vector<5x5xf32>
    %34 = math.exp %33 : vector<5x5xf32>
    %cst_9 = arith.constant dense<0.000000e+00> : vector<5xf32>
    %35 = vector.multi_reduction <add>, %34, %cst_9 [1] : vector<5x5xf32> to vector<5xf32>
    %36 = vector.shape_cast %35 : vector<5xf32> to vector<5x1xf32>
    %37 = tpu.reciprocal %36 {approx = true} : vector<5x1xf32> -> vector<5x1xf32>
    %38 = vector.broadcast %37 : vector<5x1xf32> to vector<5x5xf32>
    %39 = arith.mulf %34, %38 : vector<5x5xf32>
    %40 = arith.truncf %39 : vector<5x5xf32> to vector<5x5xbf16>
    %cst_10 = arith.constant dense<0.000000e+00> : vector<5x8xf32>
    %41 = tpu.matmul %40, %28, %cst_10 {dimension_numbers = #tpu.dot_dimension_numbers<[1], [0], [0], [1], [0, 0, 1, 1], [], []>} : vector<5x5xbf16>, vector<5x8xbf16>, vector<5x8xf32> -> vector<5x8xf32>
    %42 = arith.truncf %41 : vector<5x8xf32> to vector<5x8xbf16>
    %43 = vector.extract_strided_slice %2 {offsets = [0, 16], sizes = [5, 8], strides = [1, 1]} : vector<5x32xbf16> to vector<5x8xbf16>
    %cst_11 = arith.constant 3.535160e-01 : bf16
    %44 = vector.broadcast %cst_11 : bf16 to vector<5x8xbf16>
    %45 = arith.mulf %43, %44 : vector<5x8xbf16>
    %46 = vector.extract_strided_slice %3 {offsets = [0, 16], sizes = [5, 8], strides = [1, 1]} : vector<5x32xbf16> to vector<5x8xbf16>
    %47 = vector.extract_strided_slice %4 {offsets = [0, 16], sizes = [5, 8], strides = [1, 1]} : vector<5x32xbf16> to vector<5x8xbf16>
    %cst_12 = arith.constant dense<0.000000e+00> : vector<5x5xf32>
    %48 = tpu.matmul %45, %46, %cst_12 {dimension_numbers = #tpu.dot_dimension_numbers<[1], [1], [0], [0], [0, 0, 1, 0], [], []>} : vector<5x8xbf16>, vector<5x8xbf16>, vector<5x5xf32> -> vector<5x5xf32>
    %cst_13 = arith.constant dense<0xFF800000> : vector<5xf32>
    %49 = vector.multi_reduction <maximumf>, %48, %cst_13 [1] : vector<5x5xf32> to vector<5xf32>
    %50 = vector.shape_cast %49 : vector<5xf32> to vector<5x1xf32>
    %51 = vector.broadcast %50 : vector<5x1xf32> to vector<5x5xf32>
    %52 = arith.subf %48, %51 : vector<5x5xf32>
    %53 = math.exp %52 : vector<5x5xf32>
    %cst_14 = arith.constant dense<0.000000e+00> : vector<5xf32>
    %54 = vector.multi_reduction <add>, %53, %cst_14 [1] : vector<5x5xf32> to vector<5xf32>
    %55 = vector.shape_cast %54 : vector<5xf32> to vector<5x1xf32>
    %56 = tpu.reciprocal %55 {approx = true} : vector<5x1xf32> -> vector<5x1xf32>
    %57 = vector.broadcast %56 : vector<5x1xf32> to vector<5x5xf32>
    %58 = arith.mulf %53, %57 : vector<5x5xf32>
    %59 = arith.truncf %58 : vector<5x5xf32> to vector<5x5xbf16>
    %cst_15 = arith.constant dense<0.000000e+00> : vector<5x8xf32>
    %60 = tpu.matmul %59, %47, %cst_15 {dimension_numbers = #tpu.dot_dimension_numbers<[1], [0], [0], [1], [0, 0, 1, 1], [], []>} : vector<5x5xbf16>, vector<5x8xbf16>, vector<5x8xf32> -> vector<5x8xf32>
    %61 = arith.truncf %60 : vector<5x8xf32> to vector<5x8xbf16>
    %62 = vector.extract_strided_slice %2 {offsets = [0, 24], sizes = [5, 8], strides = [1, 1]} : vector<5x32xbf16> to vector<5x8xbf16>
    %cst_16 = arith.constant 3.535160e-01 : bf16
    %63 = vector.broadcast %cst_16 : bf16 to vector<5x8xbf16>
    %64 = arith.mulf %62, %63 : vector<5x8xbf16>
    %65 = vector.extract_strided_slice %3 {offsets = [0, 24], sizes = [5, 8], strides = [1, 1]} : vector<5x32xbf16> to vector<5x8xbf16>
    %66 = vector.extract_strided_slice %4 {offsets = [0, 24], sizes = [5, 8], strides = [1, 1]} : vector<5x32xbf16> to vector<5x8xbf16>
    %cst_17 = arith.constant dense<0.000000e+00> : vector<5x5xf32>
    %67 = tpu.matmul %64, %65, %cst_17 {dimension_numbers = #tpu.dot_dimension_numbers<[1], [1], [0], [0], [0, 0, 1, 0], [], []>} : vector<5x8xbf16>, vector<5x8xbf16>, vector<5x5xf32> -> vector<5x5xf32>
    %cst_18 = arith.constant dense<0xFF800000> : vector<5xf32>
    %68 = vector.multi_reduction <maximumf>, %67, %cst_18 [1] : vector<5x5xf32> to vector<5xf32>
    %69 = vector.shape_cast %68 : vector<5xf32> to vector<5x1xf32>
    %70 = vector.broadcast %69 : vector<5x1xf32> to vector<5x5xf32>
    %71 = arith.subf %67, %70 : vector<5x5xf32>
    %72 = math.exp %71 : vector<5x5xf32>
    %cst_19 = arith.constant dense<0.000000e+00> : vector<5xf32>
    %73 = vector.multi_reduction <add>, %72, %cst_19 [1] : vector<5x5xf32> to vector<5xf32>
    %74 = vector.shape_cast %73 : vector<5xf32> to vector<5x1xf32>
    %75 = tpu.reciprocal %74 {approx = true} : vector<5x1xf32> -> vector<5x1xf32>
    %76 = vector.broadcast %75 : vector<5x1xf32> to vector<5x5xf32>
    %77 = arith.mulf %72, %76 : vector<5x5xf32>
    %78 = arith.truncf %77 : vector<5x5xf32> to vector<5x5xbf16>
    %cst_20 = arith.constant dense<0.000000e+00> : vector<5x8xf32>
    %79 = tpu.matmul %78, %66, %cst_20 {dimension_numbers = #tpu.dot_dimension_numbers<[1], [0], [0], [1], [0, 0, 1, 1], [], []>} : vector<5x5xbf16>, vector<5x8xbf16>, vector<5x8xf32> -> vector<5x8xf32>
    %80 = arith.truncf %79 : vector<5x8xf32> to vector<5x8xbf16>
    %81 = tpu.concatenate %23, %42, %61, %80 in 1 : vector<5x8xbf16>, vector<5x8xbf16>, vector<5x8xbf16>, vector<5x8xbf16> -> vector<5x32xbf16>
    %c0_21 = arith.constant 0 : index
    %c0_22 = arith.constant 0 : index
    %c0_23 = arith.constant 0 : index
    %82 = vector.load %arg2[%c0_21, %c0_22, %c0_23] : memref<1x5x32xbf16, #tpu.memory_space<vmem>>, vector<1x5x32xbf16>
    %83 = vector.shape_cast %82 : vector<1x5x32xbf16> to vector<5x32xbf16>
    %84 = vector.shape_cast %81 : vector<5x32xbf16> to vector<1x5x32xbf16>
    tpu.vector_store %arg2[%c0_21, %c0_22, %c0_23], %84 {strides = array<i32>} : memref<1x5x32xbf16, #tpu.memory_space<vmem>>, vector<1x5x32xbf16>,
    return
  }
  func.func @transform_0(%arg0: i32) -> (i32, i32, i32) {
    %c0_i32 = arith.constant 0 : i32
    %c0_i32_0 = arith.constant 0 : i32
    %c0_i32_1 = arith.constant 0 : i32
    return %arg0, %c0_i32, %c0_i32_0 : i32, i32, i32
  }
  func.func @transform_1(%arg0: i32) -> (i32, i32, i32) {
    %c0_i32 = arith.constant 0 : i32
    %c0_i32_0 = arith.constant 0 : i32
    %c0_i32_1 = arith.constant 0 : i32
    return %arg0, %c0_i32, %c0_i32_0 : i32, i32, i32
  }
}

module attributes {stable_mosaic.version = 11 : i64} {
  func.func @_matmul_kernel(%arg0: i32, %arg1: i32, %arg2: memref<8x256xbf16, #tpu.memory_space<vmem>>, %arg3: memref<256x128xbf16, #tpu.memory_space<vmem>>, %arg4: memref<8x128xf32, #tpu.memory_space<vmem>>) attributes {dimension_semantics = [#tpu.dimension_semantics<parallel>, #tpu.dimension_semantics<parallel>], iteration_bounds = array<i64: 1, 1>, scalar_prefetch = 0 : i64, scratch_operands = 0 : i64, tpu.core_type = #tpu.core_type<tc>, window_params = [{transform_indices = @transform_0, window_bounds = array<i64: 8, 256>}, {transform_indices = @transform_1, window_bounds = array<i64: 256, 128>}, {transform_indices = @transform_2, window_bounds = array<i64: 8, 128>}]} {
    %c0 = arith.constant 0 : index
    %c0_0 = arith.constant 0 : index
    %0 = vector.load %arg2[%c0, %c0_0] : memref<8x256xbf16, #tpu.memory_space<vmem>>, vector<8x256xbf16>
    %c0_1 = arith.constant 0 : index
    %c0_2 = arith.constant 0 : index
    %1 = vector.load %arg3[%c0_1, %c0_2] : memref<256x128xbf16, #tpu.memory_space<vmem>>, vector<256x128xbf16>
    %cst = arith.constant dense<0.000000e+00> : vector<8x128xf32>
    %2 = tpu.matmul %0, %1, %cst {dimension_numbers = #tpu.dot_dimension_numbers<[1], [0], [0], [1], [0, 0, 1, 1], [], []>} : vector<8x256xbf16>, vector<256x128xbf16>, vector<8x128xf32> -> vector<8x128xf32>
    %c0_3 = arith.constant 0 : index
    %c0_4 = arith.constant 0 : index
    %3 = vector.load %arg4[%c0_3, %c0_4] : memref<8x128xf32, #tpu.memory_space<vmem>>, vector<8x128xf32>
    tpu.vector_store %arg4[%c0_3, %c0_4], %2 {strides = array<i32>} : memref<8x128xf32, #tpu.memory_space<vmem>>, vector<8x128xf32>,
    return
  }
  func.func @transform_0(%arg0: i32, %arg1: i32) -> (i32, i32) {
    %c0_i32 = arith.constant 0 : i32
    %c0_i32_0 = arith.constant 0 : i32
    return %arg0, %c0_i32 : i32, i32
  }
  func.func @transform_1(%arg0: i32, %arg1: i32) -> (i32, i32) {
    %c0_i32 = arith.constant 0 : i32
    %c0_i32_0 = arith.constant 0 : i32
    return %c0_i32, %arg1 : i32, i32
  }
  func.func @transform_2(%arg0: i32, %arg1: i32) -> (i32, i32) {
    %c0_i32 = arith.constant 0 : i32
    return %arg0, %arg1 : i32, i32
  }
}

module attributes {stable_mosaic.version = 11 : i64} {
  func.func @_layernorm_kernel(%arg0: i32, %arg1: memref<16x128xf32, #tpu.memory_space<vmem>>, %arg2: memref<1x128xf32, #tpu.memory_space<vmem>>, %arg3: memref<1x128xf32, #tpu.memory_space<vmem>>, %arg4: memref<16x128xf32, #tpu.memory_space<vmem>>) attributes {dimension_semantics = [#tpu.dimension_semantics<parallel>], iteration_bounds = array<i64: 1>, scalar_prefetch = 0 : i64, scratch_operands = 0 : i64, tpu.core_type = #tpu.core_type<tc>, window_params = [{transform_indices = @transform_0, window_bounds = array<i64: 16, 128>}, {pipeline_mode = #tpu.pipeline_mode<synchronous>, transform_indices = @transform_1, window_bounds = array<i64: 1, 128>}, {pipeline_mode = #tpu.pipeline_mode<synchronous>, transform_indices = @transform_2, window_bounds = array<i64: 1, 128>}, {transform_indices = @transform_3, window_bounds = array<i64: 16, 128>}]} {
    %c0 = arith.constant 0 : index
    %c0_0 = arith.constant 0 : index
    %0 = vector.load %arg1[%c0, %c0_0] : memref<16x128xf32, #tpu.memory_space<vmem>>, vector<16x128xf32>
    %cst = arith.constant dense<0.000000e+00> : vector<16xf32>
    %1 = vector.multi_reduction <add>, %0, %cst [1] : vector<16x128xf32> to vector<16xf32>
    %2 = vector.shape_cast %1 : vector<16xf32> to vector<16x1xf32>
    %cst_1 = arith.constant 3.125000e-02 : f32
    %3 = vector.broadcast %cst_1 : f32 to vector<16x1xf32>
    %4 = arith.mulf %2, %3 : vector<16x1xf32>
    %5 = vector.broadcast %4 : vector<16x1xf32> to vector<16x128xf32>
    %6 = arith.subf %0, %5 : vector<16x128xf32>
    %7 = tpu.iota {dimensions = array<i32: 1>} : vector<16x128xi32>
    %c32_i32 = arith.constant 32 : i32
    %8 = vector.broadcast %c32_i32 : i32 to vector<16x128xi32>
    %9 = arith.cmpi slt, %7, %8 : vector<16x128xi32>
    %cst_2 = arith.constant 0.000000e+00 : f32
    %10 = vector.broadcast %cst_2 : f32 to vector<16x128xf32>
    %11 = arith.select %9, %6, %10 : vector<16x128xi1>, vector<16x128xf32>
    %12 = arith.mulf %11, %11 : vector<16x128xf32>
    %cst_3 = arith.constant dense<0.000000e+00> : vector<16xf32>
    %13 = vector.multi_reduction <add>, %12, %cst_3 [1] : vector<16x128xf32> to vector<16xf32>
    %14 = vector.shape_cast %13 : vector<16xf32> to vector<16x1xf32>
    %cst_4 = arith.constant 3.125000e-02 : f32
    %15 = vector.broadcast %cst_4 : f32 to vector<16x1xf32>
    %16 = arith.mulf %14, %15 : vector<16x1xf32>
    %cst_5 = arith.constant 9.99999974E-6 : f32
    %17 = vector.broadcast %cst_5 : f32 to vector<16x1xf32>
    %18 = arith.addf %16, %17 : vector<16x1xf32>
    %19 = math.rsqrt %18 : vector<16x1xf32>
    %20 = vector.broadcast %19 : vector<16x1xf32> to vector<16x128xf32>
    %21 = arith.mulf %11, %20 : vector<16x128xf32>
    %c0_6 = arith.constant 0 : index
    %c0_7 = arith.constant 0 : index
    %22 = vector.load %arg2[%c0_6, %c0_7] : memref<1x128xf32, #tpu.memory_space<vmem>>, vector<1x128xf32>
    %23 = vector.broadcast %22 : vector<1x128xf32> to vector<16x128xf32>
    %24 = arith.mulf %21, %23 : vector<16x128xf32>
    %c0_8 = arith.constant 0 : index
    %c0_9 = arith.constant 0 : index
    %25 = vector.load %arg3[%c0_8, %c0_9] : memref<1x128xf32, #tpu.memory_space<vmem>>, vector<1x128xf32>
    %26 = vector.broadcast %25 : vector<1x128xf32> to vector<16x128xf32>
    %27 = arith.addf %24, %26 : vector<16x128xf32>
    %c0_10 = arith.constant 0 : index
    %c0_11 = arith.constant 0 : index
    %28 = vector.load %arg4[%c0_10, %c0_11] : memref<16x128xf32, #tpu.memory_space<vmem>>, vector<16x128xf32>
    tpu.vector_store %arg4[%c0_10, %c0_11], %27 {strides = array<i32>} : memref<16x128xf32, #tpu.memory_space<vmem>>, vector<16x128xf32>,
    return
  }
  func.func @transform_0(%arg0: i32) -> (i32, i32) {
    %c0_i32 = arith.constant 0 : i32
    %c0_i32_0 = arith.constant 0 : i32
    return %arg0, %c0_i32 : i32, i32
  }
  func.func @transform_1(%arg0: i32) -> (i32, i32) {
    %c0_i32 = arith.constant 0 : i32
    %c0_i32_0 = arith.constant 0 : i32
    %c0_i32_1 = arith.constant 0 : i32
    return %c0_i32, %c0_i32_0 : i32, i32
  }
  func.func @transform_2(%arg0: i32) -> (i32, i32) {
    %c0_i32 = arith.constant 0 : i32
    %c0_i32_0 = arith.constant 0 : i32
    %c0_i32_1 = arith.constant 0 : i32
    return %c0_i32, %c0_i32_0 : i32, i32
  }
  func.func @transform_3(%arg0: i32) -> (i32, i32) {
    %c0_i32 = arith.constant 0 : i32
    %c0_i32_0 = arith.constant 0 : i32
    return %arg0, %c0_i32 : i32, i32
  }
}

module attributes {stable_mosaic.version = 11 : i64} {
  func.func @_ln_linear_kernel(%arg0: i32, %arg1: i32, %arg2: memref<16x128xf32, #tpu.memory_space<vmem>>, %arg3: memref<1x128xf32, #tpu.memory_space<vmem>>, %arg4: memref<1x128xf32, #tpu.memory_space<vmem>>, %arg5: memref<128x128xbf16, #tpu.memory_space<vmem>>, %arg6: memref<1x128xf32, #tpu.memory_space<vmem>>, %arg7: memref<16x128xbf16, #tpu.memory_space<vmem>>, %arg8: memref<16x128xbf16, #tpu.memory_space<vmem>>) attributes {dimension_semantics = [#tpu.dimension_semantics<parallel>, #tpu.dimension_semantics<arbitrary>], iteration_bounds = array<i64: 1, 1>, scalar_prefetch = 0 : i64, scratch_operands = 1 : i64, tpu.core_type = #tpu.core_type<tc>, window_params = [{transform_indices = @transform_0, window_bounds = array<i64: 16, 128>}, {pipeline_mode = #tpu.pipeline_mode<synchronous>, transform_indices = @transform_1, window_bounds = array<i64: 1, 128>}, {pipeline_mode = #tpu.pipeline_mode<synchronous>, transform_indices = @transform_2, window_bounds = array<i64: 1, 128>}, {transform_indices = @transform_3, window_bounds = array<i64: 128, 128>}, {transform_indices = @transform_4, window_bounds = array<i64: 1, 128>}, {transform_indices = @transform_5, window_bounds = array<i64: 16, 128>}]} {
    %c0_i32 = arith.constant 0 : i32
    %0 = arith.cmpi eq, %arg1, %c0_i32 : i32
    %1 = arith.extui %0 : i1 to i32
    %c0_i32_0 = arith.constant 0 : i32
    %2 = arith.cmpi ne, %1, %c0_i32_0 : i32
    scf.if %2 {
      %c0_8 = arith.constant 0 : index
      %c0_9 = arith.constant 0 : index
      %11 = vector.load %arg2[%c0_8, %c0_9] : memref<16x128xf32, #tpu.memory_space<vmem>>, vector<16x128xf32>
      %cst_10 = arith.constant dense<0.000000e+00> : vector<16xf32>
      %12 = vector.multi_reduction <add>, %11, %cst_10 [1] : vector<16x128xf32> to vector<16xf32>
      %13 = vector.shape_cast %12 : vector<16xf32> to vector<16x1xf32>
      %cst_11 = arith.constant 3.125000e-02 : f32
      %14 = vector.broadcast %cst_11 : f32 to vector<16x1xf32>
      %15 = arith.mulf %13, %14 : vector<16x1xf32>
      %16 = vector.broadcast %15 : vector<16x1xf32> to vector<16x128xf32>
      %17 = arith.subf %11, %16 : vector<16x128xf32>
      %18 = tpu.iota {dimensions = array<i32: 1>} : vector<16x128xi32>
      %c32_i32 = arith.constant 32 : i32
      %19 = vector.broadcast %c32_i32 : i32 to vector<16x128xi32>
      %20 = arith.cmpi slt, %18, %19 : vector<16x128xi32>
      %cst_12 = arith.constant 0.000000e+00 : f32
      %21 = vector.broadcast %cst_12 : f32 to vector<16x128xf32>
      %22 = arith.select %20, %17, %21 : vector<16x128xi1>, vector<16x128xf32>
      %23 = arith.mulf %22, %22 : vector<16x128xf32>
      %cst_13 = arith.constant dense<0.000000e+00> : vector<16xf32>
      %24 = vector.multi_reduction <add>, %23, %cst_13 [1] : vector<16x128xf32> to vector<16xf32>
      %25 = vector.shape_cast %24 : vector<16xf32> to vector<16x1xf32>
      %cst_14 = arith.constant 3.125000e-02 : f32
      %26 = vector.broadcast %cst_14 : f32 to vector<16x1xf32>
      %27 = arith.mulf %25, %26 : vector<16x1xf32>
      %cst_15 = arith.constant 9.99999974E-6 : f32
      %28 = vector.broadcast %cst_15 : f32 to vector<16x1xf32>
      %29 = arith.addf %27, %28 : vector<16x1xf32>
      %30 = math.rsqrt %29 : vector<16x1xf32>
      %31 = vector.broadcast %30 : vector<16x1xf32> to vector<16x128xf32>
      %32 = arith.mulf %22, %31 : vector<16x128xf32>
      %c0_16 = arith.constant 0 : index
      %c0_17 = arith.constant 0 : index
      %33 = vector.load %arg3[%c0_16, %c0_17] : memref<1x128xf32, #tpu.memory_space<vmem>>, vector<1x128xf32>
      %34 = vector.broadcast %33 : vector<1x128xf32> to vector<16x128xf32>
      %35 = arith.mulf %32, %34 : vector<16x128xf32>
      %c0_18 = arith.constant 0 : index
      %c0_19 = arith.constant 0 : index
      %36 = vector.load %arg4[%c0_18, %c0_19] : memref<1x128xf32, #tpu.memory_space<vmem>>, vector<1x128xf32>
      %37 = vector.broadcast %36 : vector<1x128xf32> to vector<16x128xf32>
      %38 = arith.addf %35, %37 : vector<16x128xf32>
      %39 = arith.truncf %38 : vector<16x128xf32> to vector<16x128xbf16>
      %c0_20 = arith.constant 0 : index
      %c0_21 = arith.constant 0 : index
      %40 = vector.load %arg8[%c0_20, %c0_21] : memref<16x128xbf16, #tpu.memory_space<vmem>>, vector<16x128xbf16>
      tpu.vector_store %arg8[%c0_20, %c0_21], %39 {strides = array<i32>} : memref<16x128xbf16, #tpu.memory_space<vmem>>, vector<16x128xbf16>,
    } else {
    }
    %c0 = arith.constant 0 : index
    %c0_1 = arith.constant 0 : index
    %3 = vector.load %arg8[%c0, %c0_1] : memref<16x128xbf16, #tpu.memory_space<vmem>>, vector<16x128xbf16>
    %c0_2 = arith.constant 0 : index
    %c0_3 = arith.constant 0 : index
    %4 = vector.load %arg5[%c0_2, %c0_3] : memref<128x128xbf16, #tpu.memory_space<vmem>>, vector<128x128xbf16>
    %cst = arith.constant dense<0.000000e+00> : vector<16x128xf32>
    %5 = tpu.matmul %3, %4, %cst {dimension_numbers = #tpu.dot_dimension_numbers<[1], [0], [0], [1], [0, 0, 1, 1], [], []>} : vector<16x128xbf16>, vector<128x128xbf16>, vector<16x128xf32> -> vector<16x128xf32>
    %c0_4 = arith.constant 0 : index
    %c0_5 = arith.constant 0 : index
    %6 = vector.load %arg6[%c0_4, %c0_5] : memref<1x128xf32, #tpu.memory_space<vmem>>, vector<1x128xf32>
    %7 = vector.broadcast %6 : vector<1x128xf32> to vector<16x128xf32>
    %8 = arith.addf %5, %7 : vector<16x128xf32>
    %9 = arith.truncf %8 : vector<16x128xf32> to vector<16x128xbf16>
    %c0_6 = arith.constant 0 : index
    %c0_7 = arith.constant 0 : index
    %10 = vector.load %arg7[%c0_6, %c0_7] : memref<16x128xbf16, #tpu.memory_space<vmem>>, vector<16x128xbf16>
    tpu.vector_store %arg7[%c0_6, %c0_7], %9 {strides = array<i32>} : memref<16x128xbf16, #tpu.memory_space<vmem>>, vector<16x128xbf16>,
    return
  }
  func.func @transform_0(%arg0: i32, %arg1: i32) -> (i32, i32) {
    %c0_i32 = arith.constant 0 : i32
    %c0_i32_0 = arith.constant 0 : i32
    return %arg0, %c0_i32 : i32, i32
  }
  func.func @transform_1(%arg0: i32, %arg1: i32) -> (i32, i32) {
    %c0_i32 = arith.constant 0 : i32
    %c0_i32_0 = arith.constant 0 : i32
    %c0_i32_1 = arith.constant 0 : i32
    return %c0_i32, %c0_i32_0 : i32, i32
  }
  func.func @transform_2(%arg0: i32, %arg1: i32) -> (i32, i32) {
    %c0_i32 = arith.constant 0 : i32
    %c0_i32_0 = arith.constant 0 : i32
    %c0_i32_1 = arith.constant 0 : i32
    return %c0_i32, %c0_i32_0 : i32, i32
  }
  func.func @transform_3(%arg0: i32, %arg1: i32) -> (i32, i32) {
    %c0_i32 = arith.constant 0 : i32
    %c0_i32_0 = arith.constant 0 : i32
    return %c0_i32, %arg1 : i32, i32
  }
  func.func @transform_4(%arg0: i32, %arg1: i32) -> (i32, i32) {
    %c0_i32 = arith.constant 0 : i32
    %c0_i32_0 = arith.constant 0 : i32
    return %c0_i32, %arg1 : i32, i32
  }
  func.func @transform_5(%arg0: i32, %arg1: i32) -> (i32, i32) {
    %c0_i32 = arith.constant 0 : i32
    return %arg0, %arg1 : i32, i32
  }
}

module attributes {stable_mosaic.version = 11 : i64} {
  func.func @_matmul_kernel(%arg0: i32, %arg1: i32, %arg2: memref<16x128xbf16, #tpu.memory_space<vmem>>, %arg3: memref<128x128xbf16, #tpu.memory_space<vmem>>, %arg4: memref<1x128xf32, #tpu.memory_space<vmem>>, %arg5: memref<16x128xf32, #tpu.memory_space<vmem>>, %arg6: memref<16x128xf32, #tpu.memory_space<vmem>>) attributes {dimension_semantics = [#tpu.dimension_semantics<parallel>, #tpu.dimension_semantics<parallel>], iteration_bounds = array<i64: 1, 1>, scalar_prefetch = 0 : i64, scratch_operands = 0 : i64, tpu.core_type = #tpu.core_type<tc>, window_params = [{transform_indices = @transform_0, window_bounds = array<i64: 16, 128>}, {transform_indices = @transform_1, window_bounds = array<i64: 128, 128>}, {transform_indices = @transform_2, window_bounds = array<i64: 1, 128>}, {transform_indices = @transform_3, window_bounds = array<i64: 16, 128>}, {transform_indices = @transform_4, window_bounds = array<i64: 16, 128>}]} {
    %c0 = arith.constant 0 : index
    %c0_0 = arith.constant 0 : index
    %0 = vector.load %arg2[%c0, %c0_0] : memref<16x128xbf16, #tpu.memory_space<vmem>>, vector<16x128xbf16>
    %c0_1 = arith.constant 0 : index
    %c0_2 = arith.constant 0 : index
    %1 = vector.load %arg3[%c0_1, %c0_2] : memref<128x128xbf16, #tpu.memory_space<vmem>>, vector<128x128xbf16>
    %cst = arith.constant dense<0.000000e+00> : vector<16x128xf32>
    %2 = tpu.matmul %0, %1, %cst {dimension_numbers = #tpu.dot_dimension_numbers<[1], [0], [0], [1], [0, 0, 1, 1], [], []>} : vector<16x128xbf16>, vector<128x128xbf16>, vector<16x128xf32> -> vector<16x128xf32>
    %c0_3 = arith.constant 0 : index
    %c0_4 = arith.constant 0 : index
    %3 = vector.load %arg4[%c0_3, %c0_4] : memref<1x128xf32, #tpu.memory_space<vmem>>, vector<1x128xf32>
    %4 = vector.broadcast %3 : vector<1x128xf32> to vector<16x128xf32>
    %5 = arith.addf %2, %4 : vector<16x128xf32>
    %c0_5 = arith.constant 0 : index
    %c0_6 = arith.constant 0 : index
    %6 = vector.load %arg5[%c0_5, %c0_6] : memref<16x128xf32, #tpu.memory_space<vmem>>, vector<16x128xf32>
    %7 = arith.addf %5, %6 : vector<16x128xf32>
    %c0_7 = arith.constant 0 : index
    %c0_8 = arith.constant 0 : index
    %8 = vector.load %arg6[%c0_7, %c0_8] : memref<16x128xf32, #tpu.memory_space<vmem>>, vector<16x128xf32>
    tpu.vector_store %arg6[%c0_7, %c0_8], %7 {strides = array<i32>} : memref<16x128xf32, #tpu.memory_space<vmem>>, vector<16x128xf32>,
    return
  }
  func.func @transform_0(%arg0: i32, %arg1: i32) -> (i32, i32) {
    %c0_i32 = arith.constant 0 : i32
    %c0_i32_0 = arith.constant 0 : i32
    return %arg0, %c0_i32 : i32, i32
  }
  func.func @transform_1(%arg0: i32, %arg1: i32) -> (i32, i32) {
    %c0_i32 = arith.constant 0 : i32
    %c0_i32_0 = arith.constant 0 : i32
    return %c0_i32, %arg1 : i32, i32
  }
  func.func @transform_2(%arg0: i32, %arg1: i32) -> (i32, i32) {
    %c0_i32 = arith.constant 0 : i32
    %c0_i32_0 = arith.constant 0 : i32
    return %c0_i32, %arg1 : i32, i32
  }
  func.func @transform_3(%arg0: i32, %arg1: i32) -> (i32, i32) {
    %c0_i32 = arith.constant 0 : i32
    return %arg0, %arg1 : i32, i32
  }
  func.func @transform_4(%arg0: i32, %arg1: i32) -> (i32, i32) {
    %c0_i32 = arith.constant 0 : i32
    return %arg0, %arg1 : i32, i32
  }
}

module attributes {stable_mosaic.version = 11 : i64} {
  func.func @_ln_linear_kernel(%arg0: i32, %arg1: i32, %arg2: memref<16x128xf32, #tpu.memory_space<vmem>>, %arg3: memref<1x128xf32, #tpu.memory_space<vmem>>, %arg4: memref<1x128xf32, #tpu.memory_space<vmem>>, %arg5: memref<128x128xbf16, #tpu.memory_space<vmem>>, %arg6: memref<1x128xf32, #tpu.memory_space<vmem>>, %arg7: memref<16x128xbf16, #tpu.memory_space<vmem>>, %arg8: memref<16x128xbf16, #tpu.memory_space<vmem>>) attributes {dimension_semantics = [#tpu.dimension_semantics<parallel>, #tpu.dimension_semantics<arbitrary>], iteration_bounds = array<i64: 1, 1>, scalar_prefetch = 0 : i64, scratch_operands = 1 : i64, tpu.core_type = #tpu.core_type<tc>, window_params = [{transform_indices = @transform_0, window_bounds = array<i64: 16, 128>}, {pipeline_mode = #tpu.pipeline_mode<synchronous>, transform_indices = @transform_1, window_bounds = array<i64: 1, 128>}, {pipeline_mode = #tpu.pipeline_mode<synchronous>, transform_indices = @transform_2, window_bounds = array<i64: 1, 128>}, {transform_indices = @transform_3, window_bounds = array<i64: 128, 128>}, {transform_indices = @transform_4, window_bounds = array<i64: 1, 128>}, {transform_indices = @transform_5, window_bounds = array<i64: 16, 128>}]} {
    %c0_i32 = arith.constant 0 : i32
    %0 = arith.cmpi eq, %arg1, %c0_i32 : i32
    %1 = arith.extui %0 : i1 to i32
    %c0_i32_0 = arith.constant 0 : i32
    %2 = arith.cmpi ne, %1, %c0_i32_0 : i32
    scf.if %2 {
      %c0_10 = arith.constant 0 : index
      %c0_11 = arith.constant 0 : index
      %19 = vector.load %arg2[%c0_10, %c0_11] : memref<16x128xf32, #tpu.memory_space<vmem>>, vector<16x128xf32>
      %cst_12 = arith.constant dense<0.000000e+00> : vector<16xf32>
      %20 = vector.multi_reduction <add>, %19, %cst_12 [1] : vector<16x128xf32> to vector<16xf32>
      %21 = vector.shape_cast %20 : vector<16xf32> to vector<16x1xf32>
      %cst_13 = arith.constant 3.125000e-02 : f32
      %22 = vector.broadcast %cst_13 : f32 to vector<16x1xf32>
      %23 = arith.mulf %21, %22 : vector<16x1xf32>
      %24 = vector.broadcast %23 : vector<16x1xf32> to vector<16x128xf32>
      %25 = arith.subf %19, %24 : vector<16x128xf32>
      %26 = tpu.iota {dimensions = array<i32: 1>} : vector<16x128xi32>
      %c32_i32 = arith.constant 32 : i32
      %27 = vector.broadcast %c32_i32 : i32 to vector<16x128xi32>
      %28 = arith.cmpi slt, %26, %27 : vector<16x128xi32>
      %cst_14 = arith.constant 0.000000e+00 : f32
      %29 = vector.broadcast %cst_14 : f32 to vector<16x128xf32>
      %30 = arith.select %28, %25, %29 : vector<16x128xi1>, vector<16x128xf32>
      %31 = arith.mulf %30, %30 : vector<16x128xf32>
      %cst_15 = arith.constant dense<0.000000e+00> : vector<16xf32>
      %32 = vector.multi_reduction <add>, %31, %cst_15 [1] : vector<16x128xf32> to vector<16xf32>
      %33 = vector.shape_cast %32 : vector<16xf32> to vector<16x1xf32>
      %cst_16 = arith.constant 3.125000e-02 : f32
      %34 = vector.broadcast %cst_16 : f32 to vector<16x1xf32>
      %35 = arith.mulf %33, %34 : vector<16x1xf32>
      %cst_17 = arith.constant 9.99999974E-6 : f32
      %36 = vector.broadcast %cst_17 : f32 to vector<16x1xf32>
      %37 = arith.addf %35, %36 : vector<16x1xf32>
      %38 = math.rsqrt %37 : vector<16x1xf32>
      %39 = vector.broadcast %38 : vector<16x1xf32> to vector<16x128xf32>
      %40 = arith.mulf %30, %39 : vector<16x128xf32>
      %c0_18 = arith.constant 0 : index
      %c0_19 = arith.constant 0 : index
      %41 = vector.load %arg3[%c0_18, %c0_19] : memref<1x128xf32, #tpu.memory_space<vmem>>, vector<1x128xf32>
      %42 = vector.broadcast %41 : vector<1x128xf32> to vector<16x128xf32>
      %43 = arith.mulf %40, %42 : vector<16x128xf32>
      %c0_20 = arith.constant 0 : index
      %c0_21 = arith.constant 0 : index
      %44 = vector.load %arg4[%c0_20, %c0_21] : memref<1x128xf32, #tpu.memory_space<vmem>>, vector<1x128xf32>
      %45 = vector.broadcast %44 : vector<1x128xf32> to vector<16x128xf32>
      %46 = arith.addf %43, %45 : vector<16x128xf32>
      %47 = arith.truncf %46 : vector<16x128xf32> to vector<16x128xbf16>
      %c0_22 = arith.constant 0 : index
      %c0_23 = arith.constant 0 : index
      %48 = vector.load %arg8[%c0_22, %c0_23] : memref<16x128xbf16, #tpu.memory_space<vmem>>, vector<16x128xbf16>
      tpu.vector_store %arg8[%c0_22, %c0_23], %47 {strides = array<i32>} : memref<16x128xbf16, #tpu.memory_space<vmem>>, vector<16x128xbf16>,
    } else {
    }
    %c0 = arith.constant 0 : index
    %c0_1 = arith.constant 0 : index
    %3 = vector.load %arg8[%c0, %c0_1] : memref<16x128xbf16, #tpu.memory_space<vmem>>, vector<16x128xbf16>
    %c0_2 = arith.constant 0 : index
    %c0_3 = arith.constant 0 : index
    %4 = vector.load %arg5[%c0_2, %c0_3] : memref<128x128xbf16, #tpu.memory_space<vmem>>, vector<128x128xbf16>
    %cst = arith.constant dense<0.000000e+00> : vector<16x128xf32>
    %5 = tpu.matmul %3, %4, %cst {dimension_numbers = #tpu.dot_dimension_numbers<[1], [0], [0], [1], [0, 0, 1, 1], [], []>} : vector<16x128xbf16>, vector<128x128xbf16>, vector<16x128xf32> -> vector<16x128xf32>
    %c0_4 = arith.constant 0 : index
    %c0_5 = arith.constant 0 : index
    %6 = vector.load %arg6[%c0_4, %c0_5] : memref<1x128xf32, #tpu.memory_space<vmem>>, vector<1x128xf32>
    %7 = vector.broadcast %6 : vector<1x128xf32> to vector<16x128xf32>
    %8 = arith.addf %5, %7 : vector<16x128xf32>
    %cst_6 = arith.constant 1.702000e+00 : f32
    %9 = vector.broadcast %cst_6 : f32 to vector<16x128xf32>
    %10 = arith.mulf %9, %8 : vector<16x128xf32>
    %11 = arith.negf %10 : vector<16x128xf32>
    %12 = math.exp %11 : vector<16x128xf32>
    %cst_7 = arith.constant 1.000000e+00 : f32
    %13 = vector.broadcast %cst_7 : f32 to vector<16x128xf32>
    %14 = arith.addf %13, %12 : vector<16x128xf32>
    %15 = arith.divf %13, %14 : vector<16x128xf32>
    %16 = arith.mulf %8, %15 : vector<16x128xf32>
    %17 = arith.truncf %16 : vector<16x128xf32> to vector<16x128xbf16>
    %c0_8 = arith.constant 0 : index
    %c0_9 = arith.constant 0 : index
    %18 = vector.load %arg7[%c0_8, %c0_9] : memref<16x128xbf16, #tpu.memory_space<vmem>>, vector<16x128xbf16>
    tpu.vector_store %arg7[%c0_8, %c0_9], %17 {strides = array<i32>} : memref<16x128xbf16, #tpu.memory_space<vmem>>, vector<16x128xbf16>,
    return
  }
  func.func @transform_0(%arg0: i32, %arg1: i32) -> (i32, i32) {
    %c0_i32 = arith.constant 0 : i32
    %c0_i32_0 = arith.constant 0 : i32
    return %arg0, %c0_i32 : i32, i32
  }
  func.func @transform_1(%arg0: i32, %arg1: i32) -> (i32, i32) {
    %c0_i32 = arith.constant 0 : i32
    %c0_i32_0 = arith.constant 0 : i32
    %c0_i32_1 = arith.constant 0 : i32
    return %c0_i32, %c0_i32_0 : i32, i32
  }
  func.func @transform_2(%arg0: i32, %arg1: i32) -> (i32, i32) {
    %c0_i32 = arith.constant 0 : i32
    %c0_i32_0 = arith.constant 0 : i32
    %c0_i32_1 = arith.constant 0 : i32
    return %c0_i32, %c0_i32_0 : i32, i32
  }
  func.func @transform_3(%arg0: i32, %arg1: i32) -> (i32, i32) {
    %c0_i32 = arith.constant 0 : i32
    %c0_i32_0 = arith.constant 0 : i32
    return %c0_i32, %arg1 : i32, i32
  }
  func.func @transform_4(%arg0: i32, %arg1: i32) -> (i32, i32) {
    %c0_i32 = arith.constant 0 : i32
    %c0_i32_0 = arith.constant 0 : i32
    return %c0_i32, %arg1 : i32, i32
  }
  func.func @transform_5(%arg0: i32, %arg1: i32) -> (i32, i32) {
    %c0_i32 = arith.constant 0 : i32
    return %arg0, %arg1 : i32, i32
  }
}

module attributes {stable_mosaic.version = 11 : i64} {
  func.func @_layernorm_kernel(%arg0: i32, %arg1: memref<8x128xf32, #tpu.memory_space<vmem>>, %arg2: memref<1x128xf32, #tpu.memory_space<vmem>>, %arg3: memref<1x128xf32, #tpu.memory_space<vmem>>, %arg4: memref<8x128xf32, #tpu.memory_space<vmem>>) attributes {dimension_semantics = [#tpu.dimension_semantics<parallel>], iteration_bounds = array<i64: 1>, scalar_prefetch = 0 : i64, scratch_operands = 0 : i64, tpu.core_type = #tpu.core_type<tc>, window_params = [{transform_indices = @transform_0, window_bounds = array<i64: 8, 128>}, {pipeline_mode = #tpu.pipeline_mode<synchronous>, transform_indices = @transform_1, window_bounds = array<i64: 1, 128>}, {pipeline_mode = #tpu.pipeline_mode<synchronous>, transform_indices = @transform_2, window_bounds = array<i64: 1, 128>}, {transform_indices = @transform_3, window_bounds = array<i64: 8, 128>}]} {
    %c0 = arith.constant 0 : index
    %c0_0 = arith.constant 0 : index
    %0 = vector.load %arg1[%c0, %c0_0] : memref<8x128xf32, #tpu.memory_space<vmem>>, vector<8x128xf32>
    %cst = arith.constant dense<0.000000e+00> : vector<8xf32>
    %1 = vector.multi_reduction <add>, %0, %cst [1] : vector<8x128xf32> to vector<8xf32>
    %2 = vector.shape_cast %1 : vector<8xf32> to vector<8x1xf32>
    %cst_1 = arith.constant 3.125000e-02 : f32
    %3 = vector.broadcast %cst_1 : f32 to vector<8x1xf32>
    %4 = arith.mulf %2, %3 : vector<8x1xf32>
    %5 = vector.broadcast %4 : vector<8x1xf32> to vector<8x128xf32>
    %6 = arith.subf %0, %5 : vector<8x128xf32>
    %7 = tpu.iota {dimensions = array<i32: 1>} : vector<8x128xi32>
    %c32_i32 = arith.constant 32 : i32
    %8 = vector.broadcast %c32_i32 : i32 to vector<8x128xi32>
    %9 = arith.cmpi slt, %7, %8 : vector<8x128xi32>
    %cst_2 = arith.constant 0.000000e+00 : f32
    %10 = vector.broadcast %cst_2 : f32 to vector<8x128xf32>
    %11 = arith.select %9, %6, %10 : vector<8x128xi1>, vector<8x128xf32>
    %12 = arith.mulf %11, %11 : vector<8x128xf32>
    %cst_3 = arith.constant dense<0.000000e+00> : vector<8xf32>
    %13 = vector.multi_reduction <add>, %12, %cst_3 [1] : vector<8x128xf32> to vector<8xf32>
    %14 = vector.shape_cast %13 : vector<8xf32> to vector<8x1xf32>
    %cst_4 = arith.constant 3.125000e-02 : f32
    %15 = vector.broadcast %cst_4 : f32 to vector<8x1xf32>
    %16 = arith.mulf %14, %15 : vector<8x1xf32>
    %cst_5 = arith.constant 9.99999974E-6 : f32
    %17 = vector.broadcast %cst_5 : f32 to vector<8x1xf32>
    %18 = arith.addf %16, %17 : vector<8x1xf32>
    %19 = math.rsqrt %18 : vector<8x1xf32>
    %20 = vector.broadcast %19 : vector<8x1xf32> to vector<8x128xf32>
    %21 = arith.mulf %11, %20 : vector<8x128xf32>
    %c0_6 = arith.constant 0 : index
    %c0_7 = arith.constant 0 : index
    %22 = vector.load %arg2[%c0_6, %c0_7] : memref<1x128xf32, #tpu.memory_space<vmem>>, vector<1x128xf32>
    %23 = vector.broadcast %22 : vector<1x128xf32> to vector<8x128xf32>
    %24 = arith.mulf %21, %23 : vector<8x128xf32>
    %c0_8 = arith.constant 0 : index
    %c0_9 = arith.constant 0 : index
    %25 = vector.load %arg3[%c0_8, %c0_9] : memref<1x128xf32, #tpu.memory_space<vmem>>, vector<1x128xf32>
    %26 = vector.broadcast %25 : vector<1x128xf32> to vector<8x128xf32>
    %27 = arith.addf %24, %26 : vector<8x128xf32>
    %c0_10 = arith.constant 0 : index
    %c0_11 = arith.constant 0 : index
    %28 = vector.load %arg4[%c0_10, %c0_11] : memref<8x128xf32, #tpu.memory_space<vmem>>, vector<8x128xf32>
    tpu.vector_store %arg4[%c0_10, %c0_11], %27 {strides = array<i32>} : memref<8x128xf32, #tpu.memory_space<vmem>>, vector<8x128xf32>,
    return
  }
  func.func @transform_0(%arg0: i32) -> (i32, i32) {
    %c0_i32 = arith.constant 0 : i32
    %c0_i32_0 = arith.constant 0 : i32
    return %arg0, %c0_i32 : i32, i32
  }
  func.func @transform_1(%arg0: i32) -> (i32, i32) {
    %c0_i32 = arith.constant 0 : i32
    %c0_i32_0 = arith.constant 0 : i32
    %c0_i32_1 = arith.constant 0 : i32
    return %c0_i32, %c0_i32_0 : i32, i32
  }
  func.func @transform_2(%arg0: i32) -> (i32, i32) {
    %c0_i32 = arith.constant 0 : i32
    %c0_i32_0 = arith.constant 0 : i32
    %c0_i32_1 = arith.constant 0 : i32
    return %c0_i32, %c0_i32_0 : i32, i32
  }
  func.func @transform_3(%arg0: i32) -> (i32, i32) {
    %c0_i32 = arith.constant 0 : i32
    %c0_i32_0 = arith.constant 0 : i32
    return %arg0, %c0_i32 : i32, i32
  }
}

module attributes {stable_mosaic.version = 11 : i64} {
  func.func @_matmul_kernel(%arg0: i32, %arg1: i32, %arg2: memref<8x128xf32, #tpu.memory_space<vmem>>, %arg3: memref<128x128xbf16, #tpu.memory_space<vmem>>, %arg4: memref<8x128xf32, #tpu.memory_space<vmem>>) attributes {dimension_semantics = [#tpu.dimension_semantics<parallel>, #tpu.dimension_semantics<parallel>], iteration_bounds = array<i64: 1, 1>, scalar_prefetch = 0 : i64, scratch_operands = 0 : i64, tpu.core_type = #tpu.core_type<tc>, window_params = [{transform_indices = @transform_0, window_bounds = array<i64: 8, 128>}, {transform_indices = @transform_1, window_bounds = array<i64: 128, 128>}, {transform_indices = @transform_2, window_bounds = array<i64: 8, 128>}]} {
    %c0 = arith.constant 0 : index
    %c0_0 = arith.constant 0 : index
    %0 = vector.load %arg2[%c0, %c0_0] : memref<8x128xf32, #tpu.memory_space<vmem>>, vector<8x128xf32>
    %1 = arith.truncf %0 : vector<8x128xf32> to vector<8x128xbf16>
    %c0_1 = arith.constant 0 : index
    %c0_2 = arith.constant 0 : index
    %2 = vector.load %arg3[%c0_1, %c0_2] : memref<128x128xbf16, #tpu.memory_space<vmem>>, vector<128x128xbf16>
    %cst = arith.constant dense<0.000000e+00> : vector<8x128xf32>
    %3 = tpu.matmul %1, %2, %cst {dimension_numbers = #tpu.dot_dimension_numbers<[1], [0], [0], [1], [0, 0, 1, 1], [], []>} : vector<8x128xbf16>, vector<128x128xbf16>, vector<8x128xf32> -> vector<8x128xf32>
    %c0_3 = arith.constant 0 : index
    %c0_4 = arith.constant 0 : index
    %4 = vector.load %arg4[%c0_3, %c0_4] : memref<8x128xf32, #tpu.memory_space<vmem>>, vector<8x128xf32>
    tpu.vector_store %arg4[%c0_3, %c0_4], %3 {strides = array<i32>} : memref<8x128xf32, #tpu.memory_space<vmem>>, vector<8x128xf32>,
    return
  }
  func.func @transform_0(%arg0: i32, %arg1: i32) -> (i32, i32) {
    %c0_i32 = arith.constant 0 : i32
    %c0_i32_0 = arith.constant 0 : i32
    return %arg0, %c0_i32 : i32, i32
  }
  func.func @transform_1(%arg0: i32, %arg1: i32) -> (i32, i32) {
    %c0_i32 = arith.constant 0 : i32
    %c0_i32_0 = arith.constant 0 : i32
    return %c0_i32, %arg1 : i32, i32
  }
  func.func @transform_2(%arg0: i32, %arg1: i32) -> (i32, i32) {
    %c0_i32 = arith.constant 0 : i32
    return %arg0, %arg1 : i32, i32
  }
}

module attributes {stable_mosaic.version = 11 : i64} {
  func.func @_l2norm_kernel(%arg0: i32, %arg1: memref<8x128xf32, #tpu.memory_space<vmem>>, %arg2: memref<8x128xf32, #tpu.memory_space<vmem>>) attributes {dimension_semantics = [#tpu.dimension_semantics<arbitrary>], iteration_bounds = array<i64: 1>, scalar_prefetch = 0 : i64, scratch_operands = 0 : i64, tpu.core_type = #tpu.core_type<tc>, window_params = [{pipeline_mode = #tpu.pipeline_mode<synchronous>, transform_indices = @transform_0, window_bounds = array<i64: 8, 128>}, {pipeline_mode = #tpu.pipeline_mode<synchronous>, transform_indices = @transform_1, window_bounds = array<i64: 8, 128>}]} {
    %c0 = arith.constant 0 : index
    %c0_0 = arith.constant 0 : index
    %0 = vector.load %arg1[%c0, %c0_0] : memref<8x128xf32, #tpu.memory_space<vmem>>, vector<8x128xf32>
    %1 = arith.mulf %0, %0 : vector<8x128xf32>
    %cst = arith.constant dense<0.000000e+00> : vector<8xf32>
    %2 = vector.multi_reduction <add>, %1, %cst [1] : vector<8x128xf32> to vector<8xf32>
    %3 = vector.shape_cast %2 : vector<8xf32> to vector<8x1xf32>
    %cst_1 = arith.constant 9.99999996E-13 : f32
    %4 = vector.broadcast %cst_1 : f32 to vector<8x1xf32>
    %5 = arith.addf %3, %4 : vector<8x1xf32>
    %6 = math.rsqrt %5 : vector<8x1xf32>
    %7 = vector.broadcast %6 : vector<8x1xf32> to vector<8x128xf32>
    %8 = arith.mulf %0, %7 : vector<8x128xf32>
    %c0_2 = arith.constant 0 : index
    %c0_3 = arith.constant 0 : index
    %9 = vector.load %arg2[%c0_2, %c0_3] : memref<8x128xf32, #tpu.memory_space<vmem>>, vector<8x128xf32>
    tpu.vector_store %arg2[%c0_2, %c0_3], %8 {strides = array<i32>} : memref<8x128xf32, #tpu.memory_space<vmem>>, vector<8x128xf32>,
    return
  }
  func.func @transform_0(%arg0: i32) -> (i32, i32) {
    %c0_i32 = arith.constant 0 : i32
    %c0_i32_0 = arith.constant 0 : i32
    %c0_i32_1 = arith.constant 0 : i32
    return %c0_i32, %c0_i32_0 : i32, i32
  }
  func.func @transform_1(%arg0: i32) -> (i32, i32) {
    %c0_i32 = arith.constant 0 : i32
    %c0_i32_0 = arith.constant 0 : i32
    %c0_i32_1 = arith.constant 0 : i32
    return %c0_i32, %c0_i32_0 : i32, i32
  }
}

module attributes {stable_mosaic.version = 11 : i64} {
  func.func @_attention_slab_kernel(%arg0: i32, %arg1: memref<1x8x96xbf16, #tpu.memory_space<vmem>>, %arg2: memref<1x1x8xf32, #tpu.memory_space<vmem>>, %arg3: memref<1x8x32xbf16, #tpu.memory_space<vmem>>) attributes {dimension_semantics = [#tpu.dimension_semantics<parallel>], iteration_bounds = array<i64: 2>, scalar_prefetch = 0 : i64, scratch_operands = 0 : i64, tpu.core_type = #tpu.core_type<tc>, window_params = [{transform_indices = @transform_0, window_bounds = array<i64: 1, 8, 96>}, {transform_indices = @transform_1, window_bounds = array<i64: 1, 1, 8>}, {transform_indices = @transform_2, window_bounds = array<i64: 1, 8, 32>}]} {
    %c0 = arith.constant 0 : index
    %c0_0 = arith.constant 0 : index
    %c0_1 = arith.constant 0 : index
    %0 = vector.load %arg2[%c0, %c0_0, %c0_1] : memref<1x1x8xf32, #tpu.memory_space<vmem>>, vector<1x1x8xf32>
    %1 = vector.shape_cast %0 : vector<1x1x8xf32> to vector<1x8xf32>
    %c0_2 = arith.constant 0 : index
    %c0_3 = arith.constant 0 : index
    %c0_4 = arith.constant 0 : index
    %2 = vector.load %arg1[%c0_2, %c0_3, %c0_4] : memref<1x8x96xbf16, #tpu.memory_space<vmem>>, vector<1x8x96xbf16>
    %3 = vector.shape_cast %2 : vector<1x8x96xbf16> to vector<8x96xbf16>
    %4 = tpu.iota {dimensions = array<i32: 0>} : vector<8x8xi32>
    %5 = tpu.iota {dimensions = array<i32: 1>} : vector<8x8xi32>
    %6 = arith.cmpi sgt, %5, %4 : vector<8x8xi32>
    %cst = arith.constant -1.000000e+09 : f32
    %cst_5 = arith.constant 0.000000e+00 : f32
    %7 = vector.broadcast %cst : f32 to vector<8x8xf32>
    %8 = vector.broadcast %cst_5 : f32 to vector<8x8xf32>
    %9 = arith.select %6, %7, %8 : vector<8x8xi1>, vector<8x8xf32>
    %cst_6 = arith.constant 1.000000e+00 : f32
    %10 = vector.broadcast %cst_6 : f32 to vector<1x8xf32>
    %11 = arith.subf %10, %1 : vector<1x8xf32>
    %cst_7 = arith.constant -1.000000e+09 : f32
    %12 = vector.broadcast %cst_7 : f32 to vector<1x8xf32>
    %13 = arith.mulf %11, %12 : vector<1x8xf32>
    %14 = vector.broadcast %13 : vector<1x8xf32> to vector<8x8xf32>
    %15 = arith.addf %9, %14 : vector<8x8xf32>
    %16 = vector.extract_strided_slice %3 {offsets = [0, 0], sizes = [8, 32], strides = [1, 1]} : vector<8x96xbf16> to vector<8x32xbf16>
    %17 = vector.extract_strided_slice %3 {offsets = [0, 32], sizes = [8, 32], strides = [1, 1]} : vector<8x96xbf16> to vector<8x32xbf16>
    %18 = vector.extract_strided_slice %3 {offsets = [0, 64], sizes = [8, 32], strides = [1, 1]} : vector<8x96xbf16> to vector<8x32xbf16>
    %19 = vector.extract_strided_slice %16 {offsets = [0, 0], sizes = [8, 8], strides = [1, 1]} : vector<8x32xbf16> to vector<8x8xbf16>
    %cst_8 = arith.constant 3.535160e-01 : bf16
    %20 = vector.broadcast %cst_8 : bf16 to vector<8x8xbf16>
    %21 = arith.mulf %19, %20 : vector<8x8xbf16>
    %22 = vector.extract_strided_slice %17 {offsets = [0, 0], sizes = [8, 8], strides = [1, 1]} : vector<8x32xbf16> to vector<8x8xbf16>
    %23 = vector.extract_strided_slice %18 {offsets = [0, 0], sizes = [8, 8], strides = [1, 1]} : vector<8x32xbf16> to vector<8x8xbf16>
    %cst_9 = arith.constant dense<0.000000e+00> : vector<8x8xf32>
    %24 = tpu.matmul %21, %22, %cst_9 {dimension_numbers = #tpu.dot_dimension_numbers<[1], [1], [0], [0], [0, 0, 1, 0], [], []>} : vector<8x8xbf16>, vector<8x8xbf16>, vector<8x8xf32> -> vector<8x8xf32>
    %25 = arith.addf %24, %15 : vector<8x8xf32>
    %cst_10 = arith.constant dense<0xFF800000> : vector<8xf32>
    %26 = vector.multi_reduction <maximumf>, %25, %cst_10 [1] : vector<8x8xf32> to vector<8xf32>
    %27 = vector.shape_cast %26 : vector<8xf32> to vector<8x1xf32>
    %28 = vector.broadcast %27 : vector<8x1xf32> to vector<8x8xf32>
    %29 = arith.subf %25, %28 : vector<8x8xf32>
    %30 = math.exp %29 : vector<8x8xf32>
    %cst_11 = arith.constant dense<0.000000e+00> : vector<8xf32>
    %31 = vector.multi_reduction <add>, %30, %cst_11 [1] : vector<8x8xf32> to vector<8xf32>
    %32 = vector.shape_cast %31 : vector<8xf32> to vector<8x1xf32>
    %33 = tpu.reciprocal %32 {approx = true} : vector<8x1xf32> -> vector<8x1xf32>
    %34 = vector.broadcast %33 : vector<8x1xf32> to vector<8x8xf32>
    %35 = arith.mulf %30, %34 : vector<8x8xf32>
    %36 = arith.truncf %35 : vector<8x8xf32> to vector<8x8xbf16>
    %cst_12 = arith.constant dense<0.000000e+00> : vector<8x8xf32>
    %37 = tpu.matmul %36, %23, %cst_12 {dimension_numbers = #tpu.dot_dimension_numbers<[1], [0], [0], [1], [0, 0, 1, 1], [], []>} : vector<8x8xbf16>, vector<8x8xbf16>, vector<8x8xf32> -> vector<8x8xf32>
    %38 = arith.truncf %37 : vector<8x8xf32> to vector<8x8xbf16>
    %39 = vector.extract_strided_slice %16 {offsets = [0, 8], sizes = [8, 8], strides = [1, 1]} : vector<8x32xbf16> to vector<8x8xbf16>
    %cst_13 = arith.constant 3.535160e-01 : bf16
    %40 = vector.broadcast %cst_13 : bf16 to vector<8x8xbf16>
    %41 = arith.mulf %39, %40 : vector<8x8xbf16>
    %42 = vector.extract_strided_slice %17 {offsets = [0, 8], sizes = [8, 8], strides = [1, 1]} : vector<8x32xbf16> to vector<8x8xbf16>
    %43 = vector.extract_strided_slice %18 {offsets = [0, 8], sizes = [8, 8], strides = [1, 1]} : vector<8x32xbf16> to vector<8x8xbf16>
    %cst_14 = arith.constant dense<0.000000e+00> : vector<8x8xf32>
    %44 = tpu.matmul %41, %42, %cst_14 {dimension_numbers = #tpu.dot_dimension_numbers<[1], [1], [0], [0], [0, 0, 1, 0], [], []>} : vector<8x8xbf16>, vector<8x8xbf16>, vector<8x8xf32> -> vector<8x8xf32>
    %45 = arith.addf %44, %15 : vector<8x8xf32>
    %cst_15 = arith.constant dense<0xFF800000> : vector<8xf32>
    %46 = vector.multi_reduction <maximumf>, %45, %cst_15 [1] : vector<8x8xf32> to vector<8xf32>
    %47 = vector.shape_cast %46 : vector<8xf32> to vector<8x1xf32>
    %48 = vector.broadcast %47 : vector<8x1xf32> to vector<8x8xf32>
    %49 = arith.subf %45, %48 : vector<8x8xf32>
    %50 = math.exp %49 : vector<8x8xf32>
    %cst_16 = arith.constant dense<0.000000e+00> : vector<8xf32>
    %51 = vector.multi_reduction <add>, %50, %cst_16 [1] : vector<8x8xf32> to vector<8xf32>
    %52 = vector.shape_cast %51 : vector<8xf32> to vector<8x1xf32>
    %53 = tpu.reciprocal %52 {approx = true} : vector<8x1xf32> -> vector<8x1xf32>
    %54 = vector.broadcast %53 : vector<8x1xf32> to vector<8x8xf32>
    %55 = arith.mulf %50, %54 : vector<8x8xf32>
    %56 = arith.truncf %55 : vector<8x8xf32> to vector<8x8xbf16>
    %cst_17 = arith.constant dense<0.000000e+00> : vector<8x8xf32>
    %57 = tpu.matmul %56, %43, %cst_17 {dimension_numbers = #tpu.dot_dimension_numbers<[1], [0], [0], [1], [0, 0, 1, 1], [], []>} : vector<8x8xbf16>, vector<8x8xbf16>, vector<8x8xf32> -> vector<8x8xf32>
    %58 = arith.truncf %57 : vector<8x8xf32> to vector<8x8xbf16>
    %59 = vector.extract_strided_slice %16 {offsets = [0, 16], sizes = [8, 8], strides = [1, 1]} : vector<8x32xbf16> to vector<8x8xbf16>
    %cst_18 = arith.constant 3.535160e-01 : bf16
    %60 = vector.broadcast %cst_18 : bf16 to vector<8x8xbf16>
    %61 = arith.mulf %59, %60 : vector<8x8xbf16>
    %62 = vector.extract_strided_slice %17 {offsets = [0, 16], sizes = [8, 8], strides = [1, 1]} : vector<8x32xbf16> to vector<8x8xbf16>
    %63 = vector.extract_strided_slice %18 {offsets = [0, 16], sizes = [8, 8], strides = [1, 1]} : vector<8x32xbf16> to vector<8x8xbf16>
    %cst_19 = arith.constant dense<0.000000e+00> : vector<8x8xf32>
    %64 = tpu.matmul %61, %62, %cst_19 {dimension_numbers = #tpu.dot_dimension_numbers<[1], [1], [0], [0], [0, 0, 1, 0], [], []>} : vector<8x8xbf16>, vector<8x8xbf16>, vector<8x8xf32> -> vector<8x8xf32>
    %65 = arith.addf %64, %15 : vector<8x8xf32>
    %cst_20 = arith.constant dense<0xFF800000> : vector<8xf32>
    %66 = vector.multi_reduction <maximumf>, %65, %cst_20 [1] : vector<8x8xf32> to vector<8xf32>
    %67 = vector.shape_cast %66 : vector<8xf32> to vector<8x1xf32>
    %68 = vector.broadcast %67 : vector<8x1xf32> to vector<8x8xf32>
    %69 = arith.subf %65, %68 : vector<8x8xf32>
    %70 = math.exp %69 : vector<8x8xf32>
    %cst_21 = arith.constant dense<0.000000e+00> : vector<8xf32>
    %71 = vector.multi_reduction <add>, %70, %cst_21 [1] : vector<8x8xf32> to vector<8xf32>
    %72 = vector.shape_cast %71 : vector<8xf32> to vector<8x1xf32>
    %73 = tpu.reciprocal %72 {approx = true} : vector<8x1xf32> -> vector<8x1xf32>
    %74 = vector.broadcast %73 : vector<8x1xf32> to vector<8x8xf32>
    %75 = arith.mulf %70, %74 : vector<8x8xf32>
    %76 = arith.truncf %75 : vector<8x8xf32> to vector<8x8xbf16>
    %cst_22 = arith.constant dense<0.000000e+00> : vector<8x8xf32>
    %77 = tpu.matmul %76, %63, %cst_22 {dimension_numbers = #tpu.dot_dimension_numbers<[1], [0], [0], [1], [0, 0, 1, 1], [], []>} : vector<8x8xbf16>, vector<8x8xbf16>, vector<8x8xf32> -> vector<8x8xf32>
    %78 = arith.truncf %77 : vector<8x8xf32> to vector<8x8xbf16>
    %79 = vector.extract_strided_slice %16 {offsets = [0, 24], sizes = [8, 8], strides = [1, 1]} : vector<8x32xbf16> to vector<8x8xbf16>
    %cst_23 = arith.constant 3.535160e-01 : bf16
    %80 = vector.broadcast %cst_23 : bf16 to vector<8x8xbf16>
    %81 = arith.mulf %79, %80 : vector<8x8xbf16>
    %82 = vector.extract_strided_slice %17 {offsets = [0, 24], sizes = [8, 8], strides = [1, 1]} : vector<8x32xbf16> to vector<8x8xbf16>
    %83 = vector.extract_strided_slice %18 {offsets = [0, 24], sizes = [8, 8], strides = [1, 1]} : vector<8x32xbf16> to vector<8x8xbf16>
    %cst_24 = arith.constant dense<0.000000e+00> : vector<8x8xf32>
    %84 = tpu.matmul %81, %82, %cst_24 {dimension_numbers = #tpu.dot_dimension_numbers<[1], [1], [0], [0], [0, 0, 1, 0], [], []>} : vector<8x8xbf16>, vector<8x8xbf16>, vector<8x8xf32> -> vector<8x8xf32>
    %85 = arith.addf %84, %15 : vector<8x8xf32>
    %cst_25 = arith.constant dense<0xFF800000> : vector<8xf32>
    %86 = vector.multi_reduction <maximumf>, %85, %cst_25 [1] : vector<8x8xf32> to vector<8xf32>
    %87 = vector.shape_cast %86 : vector<8xf32> to vector<8x1xf32>
    %88 = vector.broadcast %87 : vector<8x1xf32> to vector<8x8xf32>
    %89 = arith.subf %85, %88 : vector<8x8xf32>
    %90 = math.exp %89 : vector<8x8xf32>
    %cst_26 = arith.constant dense<0.000000e+00> : vector<8xf32>
    %91 = vector.multi_reduction <add>, %90, %cst_26 [1] : vector<8x8xf32> to vector<8xf32>
    %92 = vector.shape_cast %91 : vector<8xf32> to vector<8x1xf32>
    %93 = tpu.reciprocal %92 {approx = true} : vector<8x1xf32> -> vector<8x1xf32>
    %94 = vector.broadcast %93 : vector<8x1xf32> to vector<8x8xf32>
    %95 = arith.mulf %90, %94 : vector<8x8xf32>
    %96 = arith.truncf %95 : vector<8x8xf32> to vector<8x8xbf16>
    %cst_27 = arith.constant dense<0.000000e+00> : vector<8x8xf32>
    %97 = tpu.matmul %96, %83, %cst_27 {dimension_numbers = #tpu.dot_dimension_numbers<[1], [0], [0], [1], [0, 0, 1, 1], [], []>} : vector<8x8xbf16>, vector<8x8xbf16>, vector<8x8xf32> -> vector<8x8xf32>
    %98 = arith.truncf %97 : vector<8x8xf32> to vector<8x8xbf16>
    %99 = tpu.concatenate %38, %58, %78, %98 in 1 : vector<8x8xbf16>, vector<8x8xbf16>, vector<8x8xbf16>, vector<8x8xbf16> -> vector<8x32xbf16>
    %c0_28 = arith.constant 0 : index
    %c0_29 = arith.constant 0 : index
    %c0_30 = arith.constant 0 : index
    %100 = vector.load %arg3[%c0_28, %c0_29, %c0_30] : memref<1x8x32xbf16, #tpu.memory_space<vmem>>, vector<1x8x32xbf16>
    %101 = vector.shape_cast %100 : vector<1x8x32xbf16> to vector<8x32xbf16>
    %102 = vector.shape_cast %99 : vector<8x32xbf16> to vector<1x8x32xbf16>
    tpu.vector_store %arg3[%c0_28, %c0_29, %c0_30], %102 {strides = array<i32>} : memref<1x8x32xbf16, #tpu.memory_space<vmem>>, vector<1x8x32xbf16>,
    return
  }
  func.func @transform_0(%arg0: i32) -> (i32, i32, i32) {
    %c0_i32 = arith.constant 0 : i32
    %c0_i32_0 = arith.constant 0 : i32
    %c0_i32_1 = arith.constant 0 : i32
    return %arg0, %c0_i32, %c0_i32_0 : i32, i32, i32
  }
  func.func @transform_1(%arg0: i32) -> (i32, i32, i32) {
    %c0_i32 = arith.constant 0 : i32
    %c0_i32_0 = arith.constant 0 : i32
    %c0_i32_1 = arith.constant 0 : i32
    return %arg0, %c0_i32, %c0_i32_0 : i32, i32, i32
  }
  func.func @transform_2(%arg0: i32) -> (i32, i32, i32) {
    %c0_i32 = arith.constant 0 : i32
    %c0_i32_0 = arith.constant 0 : i32
    %c0_i32_1 = arith.constant 0 : i32
    return %arg0, %c0_i32, %c0_i32_0 : i32, i32, i32
  }
}

</mosaic_0001>

<llo_original>
// kernel: clip_forward.30
$region0: #{clip_forward.30}
  #allocation0 [shape = 'u32[]', space=smem, size = 0x4, offset = 0x4, fixed_abs, tag = 'smem constant byte address 0x4 - core index']
  #allocation1 [shape = 'u32[144,128]{1,0:T(1,128)}', space=vmem, size = 0x12000, scoped, tag = 'internal scratch']
  #allocation2 [shape = 'bf16[16,128]{1,0:T(16,128)(2,1)}', space=vmem, size = 0x1000, scoped, tag = 'scratch operand']
  %s0 = inlined_call_operand.vmem [shape: f32[16,128], index: 0, kind: input, shape index: {}]
  %s1 = inlined_call_operand.vmem [shape: f32[1,128], index: 1, kind: input, shape index: {}]
  %s2 = inlined_call_operand.vmem [shape: f32[1,128], index: 2, kind: input, shape index: {}]
  %s3 = inlined_call_operand.vmem [shape: bf16[128,128], index: 3, kind: input, shape index: {}]
  %s4 = inlined_call_operand.vmem [shape: f32[1,128], index: 4, kind: input, shape index: {}]
  %s5 = inlined_call_operand.vmem [shape: bf16[16,128], index: 5, kind: output, shape index: {}]
  %s6 = sld [smem:[#allocation0]]
  $region34: #{clip_forward.30} parent=0
    _
  %s8 = ssub.s32 1, %s6
  %s9 = scalar_select 0, %s8, %s6
  // Predicated region
  $region2: #{clip_forward.30} parent=0 // pred_check
    _
  $region3: #{clip_forward.30} parent=0 // pred_check_branch
    %11 = sbr.rel (0) target = $region5
  $region4: #{clip_forward.30} parent=0 // pred_region
    _
  $region5: #{clip_forward.30} parent=0 // pred_fallthru
    _
  // Predicated region
  $region6: #{clip_forward.30} parent=0 // pred_check
    _
  $region7: #{clip_forward.30} parent=0 // pred_check_branch
    %13 = sbr.rel (0) target = $region9
  $region8: #{clip_forward.30} parent=0 // pred_region
    _
  $region9: #{clip_forward.30} parent=0 // pred_fallthru
    _
  // Predicated region
  $region10: #{clip_forward.30} parent=0 // pred_check
    _
  $region11: #{clip_forward.30} parent=0 // pred_check_branch
    %15 = sbr.rel (0) target = $region13
  $region12: #{clip_forward.30} parent=0 // pred_region
    _
  $region13: #{clip_forward.30} parent=0 // pred_fallthru
    _
  // Predicated region
  $region14: #{clip_forward.30} parent=0 // pred_check
    _
  $region15: #{clip_forward.30} parent=0 // pred_check_branch
    %17 = sbr.rel (0) target = $region17
  $region16: #{clip_forward.30} parent=0 // pred_region
    _
  $region17: #{clip_forward.30} parent=0 // pred_fallthru
    _
  // Predicated region
  $region18: #{clip_forward.30} parent=0 // pred_check
    _
  $region19: #{clip_forward.30} parent=0 // pred_check_branch
    %19 = sbr.rel (0) target = $region21
  $region20: #{clip_forward.30} parent=0 // pred_region
    _
  $region21: #{clip_forward.30} parent=0 // pred_fallthru
    _
  %p21 = scmp.eq.s32.totalorder 0, 0
  // Predicated region
  $region22: #{clip_forward.30} parent=0 // pred_check
    %p22 = pneg %p21
  $region23: #{clip_forward.30} parent=0 // pred_check_branch
    %24 = sbr.rel (%p22) target = $region25
  $region24: #{clip_forward.30} parent=0 // pred_region
    %v25 = vld [vmem:[%s0] sm:$0xff]
    %v26 = vld [vmem:[%s0 + $0x8] sm:$0xff]
    %27 = vadd.xlane.f32.xlu0 %v25
    %v28 = vpop.xlane.xlu0 %27
    %29 = vadd.xlane.f32.xlu0 %v26
    %v30 = vpop.xlane.xlu0 %29
    %v31 = vmul.f32 %v28, 0.03125
    %v32 = vmul.f32 %v30, 0.03125
    %v33 = vsub.f32 %v25, %v31
    %v34 = vsub.f32 %v26, %v32
    %v35 = vlaneseq
    %v36 = vand.u32 %v35, 127
    %vm37 = vcmp.lt.s32.totalorder %v36, 32
    %v38 = vsel %vm37, %v33, 0.0
    %v39 = vsel %vm37, %v34, 0.0
    %v40 = vmul.f32 %v38, %v38
    %v41 = vmul.f32 %v39, %v39
    %42 = vadd.xlane.f32.xlu0 %v40
    %v43 = vpop.xlane.xlu0 %42
    %44 = vadd.xlane.f32.xlu0 %v41
    %v45 = vpop.xlane.xlu0 %44
    %v46 = vmul.f32 %v43, 0.03125
    %v47 = vmul.f32 %v45, 0.03125
    %v48 = vadd.f32 %v46, 1e-05
    %v49 = vadd.f32 %v47, 1e-05
    %v50 = vrsqrt.pop %v48
    %v51 = vrsqrt.pop %v49
    %v52 = vmul.f32 %v38, %v50
    %v53 = vmul.f32 %v39, %v51
    %v54 = vld [vmem:[%s1] sm:$0x1]
    %v56 = vlaneseq
    %v57 = vshrl.u32 %v56, 7
    %v58 = vsub.s32 0, %v57
    %v59 = vrot.slane %v54, %v58
    %v61 = vmul.f32 %v52, %v59
    %v62 = vmul.f32 %v53, %v59
    %v63 = vld [vmem:[%s2] sm:$0x1]
    %v65 = vlaneseq
    %v66 = vshrl.u32 %v65, 7
    %v67 = vsub.s32 0, %v66
    %v68 = vrot.slane %v63, %v67
    %v70 = vadd.f32 %v61, %v68
    %v71 = vadd.f32 %v62, %v68
    %v72 = vpack.c.bf16 %v71, %v70
    %73 = vst [vmem:[#allocation2] sm:$0xff] %v72
  $region25: #{clip_forward.30} parent=0 // pred_fallthru
    _
  %v74 = vld [vmem:[#allocation2] sm:$0xff]
  %v75 = vld [vmem:[%s3] sm:$0xf]
  %v76 = vld [vmem:[%s3 + $0x4] sm:$0xf]
  %v77 = vld [vmem:[%s3 + $0x8] sm:$0xf]
  %v78 = vld [vmem:[%s3 + $0xc] sm:$0xf]
  %v79 = vld [vmem:[%s3 + $0x10] sm:$0xf]
  %v80 = vld [vmem:[%s3 + $0x14] sm:$0xf]
  %v81 = vld [vmem:[%s3 + $0x18] sm:$0xf]
  %v82 = vld [vmem:[%s3 + $0x1c] sm:$0xf]
  %v83 = vld [vmem:[%s3 + $0x20] sm:$0xf]
  %v84 = vld [vmem:[%s3 + $0x24] sm:$0xf]
  %v85 = vld [vmem:[%s3 + $0x28] sm:$0xf]
  %v86 = vld [vmem:[%s3 + $0x2c] sm:$0xf]
  %v87 = vld [vmem:[%s3 + $0x30] sm:$0xf]
  %v88 = vld [vmem:[%s3 + $0x34] sm:$0xf]
  %v89 = vld [vmem:[%s3 + $0x38] sm:$0xf]
  %v90 = vld [vmem:[%s3 + $0x3c] sm:$0xf]
  %v91 = vld [vmem:[%s4] sm:$0x1]
  %v93 = vlaneseq
  %v94 = vshrl.u32 %v93, 7
  %v95 = vsub.s32 0, %v94
  %v96 = vrot.slane %v91, %v95
  %v114 = vunpack.c.l.b16 %v75
  %v115 = vunpack.c.l.b16 %v76
  %v116 = vunpack.c.l.b16 %v77
  %v117 = vunpack.c.l.b16 %v78
  %v118 = vunpack.c.l.b16 %v79
  %v119 = vunpack.c.l.b16 %v80
  %v120 = vunpack.c.l.b16 %v81
  %v121 = vunpack.c.l.b16 %v82
  %v122 = vunpack.c.l.b16 %v83
  %v123 = vunpack.c.l.b16 %v84
  %v124 = vunpack.c.l.b16 %v85
  %v125 = vunpack.c.l.b16 %v86
  %v126 = vunpack.c.l.b16 %v87
  %v127 = vunpack.c.l.b16 %v88
  %v128 = vunpack.c.l.b16 %v89
  %v129 = vunpack.c.l.b16 %v90
  %v130 = vpack.c.b16 %v115, %v114
  %v131 = vpack.c.b16 %v117, %v116
  %v132 = vpack.c.b16 %v119, %v118
  %v133 = vpack.c.b16 %v121, %v120
  %v134 = vpack.c.b16 %v123, %v122
  %v135 = vpack.c.b16 %v125, %v124
  %v136 = vpack.c.b16 %v127, %v126
  %v137 = vpack.c.b16 %v129, %v128
  %146 = vmatprep.subr.bf16.mxu0 0
  %147 = vmatpush1.bf16.msra.mxu0 %v130
  %148 = vmatprep.subr.bf16.mxu0 0
  %149 = vmatpush1.bf16.msra.mxu0 %v131
  %150 = vmatprep.subr.bf16.mxu0 0
  %151 = vmatpush1.bf16.msra.mxu0 %v132
  %152 = vmatprep.subr.bf16.mxu0 0
  %153 = vmatpush1.bf16.msra.mxu0 %v133
  %154 = vmatprep.subr.bf16.mxu0 0
  %155 = vmatpush1.bf16.msra.mxu0 %v134
  %156 = vmatprep.subr.bf16.mxu0 0
  %157 = vmatpush1.bf16.msra.mxu0 %v135
  %158 = vmatprep.subr.bf16.mxu0 0
  %159 = vmatpush1.bf16.msra.mxu0 %v136
  %160 = vmatprep.subr.bf16.mxu0 0
  %161 = vmatpush1.bf16.msra.mxu0 %v137
  %162 = vmatprep.subr.bf16.mxu0 0
  %163 = vmatpush1.bf16.msra.mxu0 0
  %164 = vmatprep.subr.bf16.mxu0 0
  %165 = vmatpush1.bf16.msra.mxu0 0
  %166 = vmatprep.subr.bf16.mxu0 0
  %167 = vmatpush1.bf16.msra.mxu0 0
  %168 = vmatprep.subr.bf16.mxu0 0
  %169 = vmatpush1.bf16.msra.mxu0 0
  %170 = vmatprep.subr.bf16.mxu0 0
  %171 = vmatpush1.bf16.msra.mxu0 0
  %172 = vmatprep.subr.bf16.mxu0 0
  %173 = vmatpush1.bf16.msra.mxu0 0
  %174 = vmatprep.subr.bf16.mxu0 0
  %175 = vmatpush1.bf16.msra.mxu0 0
  %176 = vmatprep.subr.bf16.mxu0 0
  %177 = vmatpush1.bf16.msra.mxu0 0
  %178 = vmatprep.mubr.bf16.mxu0 0
  %179 = vmatmul.mubr.bf16.gmra.mrb[0].mxu0 %v74
  %v180 = vpop.f32.mrb[0].mxu0
  %v181 = vadd.f32 %v96, %v180
  %v182 = vpop.f32.mrb[0].mxu0
  %v183 = vpop.f32.mrb[0].mxu0
  %v184 = vadd.f32 %v96, %v183
  %v185 = vpop.f32.mrb[0].mxu0
  %186 = vdwg.mxu0
  %v187 = vpack.c.bf16 %v184, %v181
  %v189 = vunpack.c.l.b16 %v187
  %v190 = vunpack.c.h.b16 %v187
  %v191 = vpack.c.b16 %v189, %v189
  %v192 = vpack.c.b16 %v190, %v190
  %195 = vst [vmem:[%s5] sm:$0xf] %v191
  %196 = vst [vmem:[%s5 + $0x4] sm:$0xf] %v192
  // Predicated region
  $region26: #{clip_forward.30} parent=0 // pred_check
    _
  $region27: #{clip_forward.30} parent=0 // pred_check_branch
    %198 = sbr.rel (0) target = $region29
  $region28: #{clip_forward.30} parent=0 // pred_region
    _
  $region29: #{clip_forward.30} parent=0 // pred_fallthru
    _
  // Predicated region
  $region30: #{clip_forward.30} parent=0 // pred_check
    _
  $region31: #{clip_forward.30} parent=0 // pred_check_branch
    %200 = sbr.rel (0) target = $region33
  $region32: #{clip_forward.30} parent=0 // pred_region
    _
  $region33: #{clip_forward.30} parent=0 // pred_fallthru
    _

// kernel: clip_forward.29
$region0: #{clip_forward.29}
  #allocation0 [shape = 'u32[]', space=smem, size = 0x4, offset = 0x4, fixed_abs, tag = 'smem constant byte address 0x4 - core index']
  #allocation1 [shape = 'u32[144,128]{1,0:T(1,128)}', space=vmem, size = 0x12000, scoped, tag = 'internal scratch']
  %s0 = inlined_call_operand.vmem [shape: f32[16,128], index: 0, kind: input, shape index: {}]
  %s1 = inlined_call_operand.vmem [shape: f32[1,128], index: 1, kind: input, shape index: {}]
  %s2 = inlined_call_operand.vmem [shape: f32[1,128], index: 2, kind: input, shape index: {}]
  %s3 = inlined_call_operand.vmem [shape: f32[16,128], index: 3, kind: output, shape index: {}]
  %s4 = sld [smem:[#allocation0]]
  $region22: #{clip_forward.29} parent=0
    _
  %s6 = ssub.s32 1, %s4
  %s7 = scalar_select 0, %s6, %s4
  // Predicated region
  $region2: #{clip_forward.29} parent=0 // pred_check
    _
  $region3: #{clip_forward.29} parent=0 // pred_check_branch
    %9 = sbr.rel (0) target = $region5
  $region4: #{clip_forward.29} parent=0 // pred_region
    _
  $region5: #{clip_forward.29} parent=0 // pred_fallthru
    _
  // Predicated region
  $region6: #{clip_forward.29} parent=0 // pred_check
    _
  $region7: #{clip_forward.29} parent=0 // pred_check_branch
    %11 = sbr.rel (0) target = $region9
  $region8: #{clip_forward.29} parent=0 // pred_region
    _
  $region9: #{clip_forward.29} parent=0 // pred_fallthru
    _
  // Predicated region
  $region10: #{clip_forward.29} parent=0 // pred_check
    _
  $region11: #{clip_forward.29} parent=0 // pred_check_branch
    %13 = sbr.rel (0) target = $region13
  $region12: #{clip_forward.29} parent=0 // pred_region
    _
  $region13: #{clip_forward.29} parent=0 // pred_fallthru
    _
  %v14 = vld [vmem:[%s0] sm:$0xff]
  %v15 = vld [vmem:[%s0 + $0x8] sm:$0xff]
  %16 = vadd.xlane.f32.xlu0 %v14
  %v17 = vpop.xlane.xlu0 %16
  %18 = vadd.xlane.f32.xlu0 %v15
  %v19 = vpop.xlane.xlu0 %18
  %v20 = vmul.f32 %v17, 0.03125
  %v21 = vmul.f32 %v19, 0.03125
  %v22 = vsub.f32 %v14, %v20
  %v23 = vsub.f32 %v15, %v21
  %v24 = vlaneseq
  %v25 = vand.u32 %v24, 127
  %vm26 = vcmp.lt.s32.totalorder %v25, 32
  %v27 = vsel %vm26, %v22, 0.0
  %v28 = vsel %vm26, %v23, 0.0
  %v29 = vmul.f32 %v27, %v27
  %v30 = vmul.f32 %v28, %v28
  %31 = vadd.xlane.f32.xlu0 %v29
  %v32 = vpop.xlane.xlu0 %31
  %33 = vadd.xlane.f32.xlu0 %v30
  %v34 = vpop.xlane.xlu0 %33
  %v35 = vmul.f32 %v32, 0.03125
  %v36 = vmul.f32 %v34, 0.03125
  %v37 = vadd.f32 %v35, 1e-05
  %v38 = vadd.f32 %v36, 1e-05
  %v39 = vrsqrt.pop %v37
  %v40 = vrsqrt.pop %v38
  %v41 = vmul.f32 %v27, %v39
  %v42 = vmul.f32 %v28, %v40
  %v43 = vld [vmem:[%s1] sm:$0x1]
  %v45 = vlaneseq
  %v46 = vshrl.u32 %v45, 7
  %v47 = vsub.s32 0, %v46
  %v48 = vrot.slane %v43, %v47
  %v50 = vmul.f32 %v41, %v48
  %v51 = vmul.f32 %v42, %v48
  %v52 = vld [vmem:[%s2] sm:$0x1]
  %v54 = vlaneseq
  %v55 = vshrl.u32 %v54, 7
  %v56 = vsub.s32 0, %v55
  %v57 = vrot.slane %v52, %v56
  %v59 = vadd.f32 %v50, %v57
  %v60 = vadd.f32 %v51, %v57
  %61 = vst [vmem:[%s3] sm:$0xff] %v59
  %62 = vst [vmem:[%s3 + $0x8] sm:$0xff] %v60
  // Predicated region
  $region14: #{clip_forward.29} parent=0 // pred_check
    _
  $region15: #{clip_forward.29} parent=0 // pred_check_branch
    %64 = sbr.rel (0) target = $region17
  $region16: #{clip_forward.29} parent=0 // pred_region
    _
  $region17: #{clip_forward.29} parent=0 // pred_fallthru
    _
  // Predicated region
  $region18: #{clip_forward.29} parent=0 // pred_check
    _
  $region19: #{clip_forward.29} parent=0 // pred_check_branch
    %66 = sbr.rel (0) target = $region21
  $region20: #{clip_forward.29} parent=0 // pred_region
    _
  $region21: #{clip_forward.29} parent=0 // pred_fallthru
    _

// kernel: clip_forward.28
$region0: #{clip_forward.28}
  #allocation0 [shape = 'u32[]', space=smem, size = 0x4, offset = 0x4, fixed_abs, tag = 'smem constant byte address 0x4 - core index']
  #allocation1 [shape = 'u32[144,128]{1,0:T(1,128)}', space=vmem, size = 0x12000, scoped, tag = 'internal scratch']
  %s0 = inlined_call_operand.vmem [shape: bf16[8,256], index: 0, kind: input, shape index: {}]
  %s1 = inlined_call_operand.vmem [shape: bf16[256,128], index: 1, kind: input, shape index: {}]
  %s2 = inlined_call_operand.vmem [shape: f32[8,128], index: 2, kind: output, shape index: {}]
  %s3 = sld [smem:[#allocation0]]
  $region18: #{clip_forward.28} parent=0
    _
  %s5 = ssub.s32 1, %s3
  %s6 = scalar_select 0, %s5, %s3
  // Predicated region
  $region2: #{clip_forward.28} parent=0 // pred_check
    _
  $region3: #{clip_forward.28} parent=0 // pred_check_branch
    %8 = sbr.rel (0) target = $region5
  $region4: #{clip_forward.28} parent=0 // pred_region
    _
  $region5: #{clip_forward.28} parent=0 // pred_fallthru
    _
  // Predicated region
  $region6: #{clip_forward.28} parent=0 // pred_check
    _
  $region7: #{clip_forward.28} parent=0 // pred_check_branch
    %10 = sbr.rel (0) target = $region9
  $region8: #{clip_forward.28} parent=0 // pred_region
    _
  $region9: #{clip_forward.28} parent=0 // pred_fallthru
    _
  %v12 = vld [vmem:[%s0] sm:$0xff]
  %v13 = vld [vmem:[%s1] sm:$0xf]
  %v14 = vld [vmem:[%s1 + $0x4] sm:$0xf]
  %v15 = vld [vmem:[%s1 + $0x8] sm:$0xf]
  %v16 = vld [vmem:[%s1 + $0xc] sm:$0xf]
  %v17 = vld [vmem:[%s1 + $0x10] sm:$0xf]
  %v18 = vld [vmem:[%s1 + $0x14] sm:$0xf]
  %v19 = vld [vmem:[%s1 + $0x18] sm:$0xf]
  %v20 = vld [vmem:[%s1 + $0x1c] sm:$0xf]
  %v21 = vld [vmem:[%s1 + $0x20] sm:$0xf]
  %v22 = vld [vmem:[%s1 + $0x24] sm:$0xf]
  %v23 = vld [vmem:[%s1 + $0x28] sm:$0xf]
  %v24 = vld [vmem:[%s1 + $0x2c] sm:$0xf]
  %v25 = vld [vmem:[%s1 + $0x30] sm:$0xf]
  %v26 = vld [vmem:[%s1 + $0x34] sm:$0xf]
  %v27 = vld [vmem:[%s1 + $0x38] sm:$0xf]
  %v28 = vld [vmem:[%s1 + $0x3c] sm:$0xf]
  %v29 = vld [vmem:[%s1 + $0x40] sm:$0xf]
  %v30 = vld [vmem:[%s1 + $0x44] sm:$0xf]
  %v31 = vld [vmem:[%s1 + $0x48] sm:$0xf]
  %v32 = vld [vmem:[%s1 + $0x4c] sm:$0xf]
  %v33 = vld [vmem:[%s1 + $0x50] sm:$0xf]
  %v34 = vld [vmem:[%s1 + $0x54] sm:$0xf]
  %v35 = vld [vmem:[%s1 + $0x58] sm:$0xf]
  %v36 = vld [vmem:[%s1 + $0x5c] sm:$0xf]
  %v37 = vld [vmem:[%s1 + $0x60] sm:$0xf]
  %v38 = vld [vmem:[%s1 + $0x64] sm:$0xf]
  %v39 = vld [vmem:[%s1 + $0x68] sm:$0xf]
  %v40 = vld [vmem:[%s1 + $0x6c] sm:$0xf]
  %v41 = vld [vmem:[%s1 + $0x70] sm:$0xf]
  %v42 = vld [vmem:[%s1 + $0x74] sm:$0xf]
  %v43 = vld [vmem:[%s1 + $0x78] sm:$0xf]
  %v44 = vld [vmem:[%s1 + $0x7c] sm:$0xf]
  %v46 = vunpack.c.l.b16 %v12
  %v47 = vunpack.c.h.b16 %v12
  %v48 = vpack.c.b16 %v46, %v46
  %v49 = vpack.c.b16 %v47, %v47
  %v84 = vunpack.c.l.b16 %v13
  %v85 = vunpack.c.l.b16 %v14
  %v86 = vunpack.c.l.b16 %v15
  %v87 = vunpack.c.l.b16 %v16
  %v88 = vunpack.c.l.b16 %v17
  %v89 = vunpack.c.l.b16 %v18
  %v90 = vunpack.c.l.b16 %v19
  %v91 = vunpack.c.l.b16 %v20
  %v92 = vunpack.c.l.b16 %v21
  %v93 = vunpack.c.l.b16 %v22
  %v94 = vunpack.c.l.b16 %v23
  %v95 = vunpack.c.l.b16 %v24
  %v96 = vunpack.c.l.b16 %v25
  %v97 = vunpack.c.l.b16 %v26
  %v98 = vunpack.c.l.b16 %v27
  %v99 = vunpack.c.l.b16 %v28
  %v100 = vunpack.c.l.b16 %v29
  %v101 = vunpack.c.l.b16 %v30
  %v102 = vunpack.c.l.b16 %v31
  %v103 = vunpack.c.l.b16 %v32
  %v104 = vunpack.c.l.b16 %v33
  %v105 = vunpack.c.l.b16 %v34
  %v106 = vunpack.c.l.b16 %v35
  %v107 = vunpack.c.l.b16 %v36
  %v108 = vunpack.c.l.b16 %v37
  %v109 = vunpack.c.l.b16 %v38
  %v110 = vunpack.c.l.b16 %v39
  %v111 = vunpack.c.l.b16 %v40
  %v112 = vunpack.c.l.b16 %v41
  %v113 = vunpack.c.l.b16 %v42
  %v114 = vunpack.c.l.b16 %v43
  %v115 = vunpack.c.l.b16 %v44
  %v116 = vpack.c.b16 %v85, %v84
  %v117 = vpack.c.b16 %v87, %v86
  %v118 = vpack.c.b16 %v89, %v88
  %v119 = vpack.c.b16 %v91, %v90
  %v120 = vpack.c.b16 %v93, %v92
  %v121 = vpack.c.b16 %v95, %v94
  %v122 = vpack.c.b16 %v97, %v96
  %v123 = vpack.c.b16 %v99, %v98
  %v124 = vpack.c.b16 %v101, %v100
  %v125 = vpack.c.b16 %v103, %v102
  %v126 = vpack.c.b16 %v105, %v104
  %v127 = vpack.c.b16 %v107, %v106
  %v128 = vpack.c.b16 %v109, %v108
  %v129 = vpack.c.b16 %v111, %v110
  %v130 = vpack.c.b16 %v113, %v112
  %v131 = vpack.c.b16 %v115, %v114
  %148 = vmatprep.subr.bf16.mxu0 0
  %149 = vmatpush1.bf16.msra.mxu0 %v116
  %150 = vmatprep.subr.bf16.mxu0 0
  %151 = vmatpush1.bf16.msra.mxu0 %v117
  %152 = vmatprep.subr.bf16.mxu0 0
  %153 = vmatpush1.bf16.msra.mxu0 %v118
  %154 = vmatprep.subr.bf16.mxu0 0
  %155 = vmatpush1.bf16.msra.mxu0 %v119
  %156 = vmatprep.subr.bf16.mxu0 0
  %157 = vmatpush1.bf16.msra.mxu0 %v120
  %158 = vmatprep.subr.bf16.mxu0 0
  %159 = vmatpush1.bf16.msra.mxu0 %v121
  %160 = vmatprep.subr.bf16.mxu0 0
  %161 = vmatpush1.bf16.msra.mxu0 %v122
  %162 = vmatprep.subr.bf16.mxu0 0
  %163 = vmatpush1.bf16.msra.mxu0 %v123
  %164 = vmatprep.subr.bf16.mxu0 0
  %165 = vmatpush1.bf16.msra.mxu0 %v124
  %166 = vmatprep.subr.bf16.mxu0 0
  %167 = vmatpush1.bf16.msra.mxu0 %v125
  %168 = vmatprep.subr.bf16.mxu0 0
  %169 = vmatpush1.bf16.msra.mxu0 %v126
  %170 = vmatprep.subr.bf16.mxu0 0
  %171 = vmatpush1.bf16.msra.mxu0 %v127
  %172 = vmatprep.subr.bf16.mxu0 0
  %173 = vmatpush1.bf16.msra.mxu0 %v128
  %174 = vmatprep.subr.bf16.mxu0 0
  %175 = vmatpush1.bf16.msra.mxu0 %v129
  %176 = vmatprep.subr.bf16.mxu0 0
  %177 = vmatpush1.bf16.msra.mxu0 %v130
  %178 = vmatprep.subr.bf16.mxu0 0
  %179 = vmatpush1.bf16.msra.mxu0 %v131
  %180 = vmatprep.mubr.bf16.mxu0 %v49
  %181 = vmatmul.mubr.bf16.gmra.mrb[0].mxu0 %v48
  %v182 = vpop.f32.mrb[0].mxu0
  %v183 = vadd.f32 0.0, %v182
  %v184 = vpop.f32.mrb[0].mxu0
  %v185 = vpop.f32.mrb[0].mxu0
  %v186 = vpop.f32.mrb[0].mxu0
  %187 = vdwg.mxu0
  %188 = vst [vmem:[%s2] sm:$0xff] %v183
  // Predicated region
  $region10: #{clip_forward.28} parent=0 // pred_check
    _
  $region11: #{clip_forward.28} parent=0 // pred_check_branch
    %190 = sbr.rel (0) target = $region13
  $region12: #{clip_forward.28} parent=0 // pred_region
    _
  $region13: #{clip_forward.28} parent=0 // pred_fallthru
    _
  // Predicated region
  $region14: #{clip_forward.28} parent=0 // pred_check
    _
  $region15: #{clip_forward.28} parent=0 // pred_check_branch
    %192 = sbr.rel (0) target = $region17
  $region16: #{clip_forward.28} parent=0 // pred_region
    _
  $region17: #{clip_forward.28} parent=0 // pred_fallthru
    _

// kernel: clip_forward.31
$region0: #{clip_forward.31}
  #allocation0 [shape = 'u32[]', space=smem, size = 0x4, offset = 0x4, fixed_abs, tag = 'smem constant byte address 0x4 - core index']
  #allocation1 [shape = 'u32[144,128]{1,0:T(1,128)}', space=vmem, size = 0x12000, scoped, tag = 'internal scratch']
  %s0 = inlined_call_operand.vmem [shape: bf16[2,5,96], index: 0, kind: input, shape index: {}]
  %s1 = inlined_call_operand.vmem [shape: bf16[2,5,32], index: 1, kind: output, shape index: {}]
  %s2 = sld [smem:[#allocation0]]
  $region37: #{clip_forward.31} parent=0
    _
  %s4 = ssub.s32 1, %s2
  %s5 = scalar_select 0, %s4, %s2
  loop: start=0, step=1, limit=4
  $region2: #{clip_forward.31} parent=0 // loop_pre_header
    _
  $region3: #{clip_forward.31} parent=0 // loop_header
    %s7 = sphi 0, %s11
    %p8 = scmp.ge.s32.totalorder %s7, 4
    %s17 = sphi 0, %s19
    %s20 = sphi 0, %s17
    %s21 = sphi 0, %s20
    %s37 = sphi 0, %s21
    %s43 = sphi 0, %s45
    %s46 = sphi 0, %s43
    %s47 = sphi 0, %s46
    %s63 = sphi 0, %s47
  $region4: #{clip_forward.31} parent=0 // loop_header_branch
    %10 = sbr.rel (%p8) target = $region8
  $region5: #{clip_forward.31} parent=0 // loop_body
    %s12 = ssub.s32 %s7, 1
    %s13 = ssub.s32 %s7, 2
    %s14 = sadd.s32 %s7, 1
    %s15 = ssub.s32 %s7, %s14
    %p16 = scmp.eq.s32.totalorder %s15, 0
    %s18 = sadd.s32 %s17, 1
    %s19 = scalar_select %p16, %s17, %s18
    %p22 = pneg %p16
    %p23 = scmp.eq.s32.totalorder %s7, 1
    %p24 = por %p22, %p23
    %p25 = scmp.ne.s32.totalorder %s17, %s20
    %p26 = scmp.eq.s32.totalorder %s7, 0
    %p27 = por %p25, %p26
    %p28 = scmp.ne.s32.totalorder %s17, %s20
    %p29 = scmp.eq.s32.totalorder %s12, 1
    %p30 = por %p28, %p29
    %p31 = scmp.ne.s32.totalorder %s20, %s21
    %p32 = scmp.eq.s32.totalorder %s12, 0
    %p33 = por %p31, %p32
    %p34 = scmp.ne.s32.totalorder %s20, %s21
    %p35 = scmp.eq.s32.totalorder %s13, 1
    %p36 = por %p34, %p35
    %p38 = scmp.ne.s32.totalorder %s21, %s37
    %p39 = scmp.eq.s32.totalorder %s13, 0
    %p40 = por %p38, %p39
    %s41 = ssub.s32 %s7, %s14
    %p42 = scmp.eq.s32.totalorder %s41, 0
    %s44 = sadd.s32 %s43, 1
    %s45 = scalar_select %p42, %s43, %s44
    %p48 = pneg %p42
    %p49 = scmp.eq.s32.totalorder %s7, 1
    %p50 = por %p48, %p49
    %p51 = scmp.ne.s32.totalorder %s43, %s46
    %p52 = scmp.eq.s32.totalorder %s7, 0
    %p53 = por %p51, %p52
    %p54 = scmp.ne.s32.totalorder %s43, %s46
    %p55 = scmp.eq.s32.totalorder %s12, 1
    %p56 = por %p54, %p55
    %p57 = scmp.ne.s32.totalorder %s46, %s47
    %p58 = scmp.eq.s32.totalorder %s12, 0
    %p59 = por %p57, %p58
    %p60 = scmp.ne.s32.totalorder %s46, %s47
    %p61 = scmp.eq.s32.totalorder %s13, 1
    %p62 = por %p60, %p61
    %p64 = scmp.ne.s32.totalorder %s47, %s63
    %p65 = scmp.eq.s32.totalorder %s13, 0
    %p66 = por %p64, %p65
    %p67 = scmp.le.s32.totalorder 1, %s7
    %p68 = scmp.lt.s32.totalorder %s7, 3
    %p69 = pnand %p67, %p68
    %p70 = pneg %p69
    // Predicated region
    $region9: #{clip_forward.31} parent=5 // pred_check
      _
    $region10: #{clip_forward.31} parent=5 // pred_check_branch
      %72 = sbr.rel (%p69) target = $region12
    $region11: #{clip_forward.31} parent=5 // pred_region
      %s73 = ssub.s32 %s7, 1
    $region12: #{clip_forward.31} parent=5 // pred_fallthru
      _
    %p74 = scmp.lt.s32.totalorder %s7, 2
    // Predicated region
    $region13: #{clip_forward.31} parent=5 // pred_check
      %p75 = pneg %p74
    $region14: #{clip_forward.31} parent=5 // pred_check_branch
      %77 = sbr.rel (%p75) target = $region16
    $region15: #{clip_forward.31} parent=5 // pred_region
      // Predicated region
      $region17: #{clip_forward.31} parent=15 // pred_check
        %p78 = pneg %p27
      $region18: #{clip_forward.31} parent=15 // pred_check_branch
        %80 = sbr.rel (%p78) target = $region20
      $region19: #{clip_forward.31} parent=15 // pred_region
        %p81 = scmp.lt.s32.totalorder %s7, 1
        %s82 = scalar_select %p81, %s7, 1
        %s83 = smul.addr %s82, 4
        %s84 = scalar_lea.vmem %s0, %s83
      $region20: #{clip_forward.31} parent=15 // pred_fallthru
        _
    $region16: #{clip_forward.31} parent=5 // pred_fallthru
      _
    %p85 = scmp.le.s32.totalorder 1, %s7
    %p86 = scmp.lt.s32.totalorder %s7, 3
    %p87 = pnand %p85, %p86
    %p88 = pneg %p87
    // Predicated region
    $region21: #{clip_forward.31} parent=5 // pred_check
      _
    $region22: #{clip_forward.31} parent=5 // pred_check_branch
      %90 = sbr.rel (%p87) target = $region24
    $region23: #{clip_forward.31} parent=5 // pred_region
      %s91 = ssub.s32 %s7, 1
      %p92 = scmp.lt.s32.totalorder %s12, 1
      %s93 = scalar_select %p92, %s12, 1
      %s94 = smul.addr %s93, 4
      %s95 = scalar_lea.vmem %s0, %s94
      %p96 = pneg %p33
      %p97 = pneg %p30
      %p98 = pneg %p59
      %p99 = pneg %p56
      %p100 = scmp.lt.s32.totalorder %s12, 1
      %s101 = scalar_select %p100, %s12, 1
      %s102 = smul.addr %s101, 4
      %s103 = scalar_lea.vmem %s1, %s102
      %p104 = scmp.lt.s32.totalorder %s12, 1
      %s105 = scalar_select %p104, %s12, 1
      %s106 = smul.addr %s105, 4
      %s107 = scalar_lea.vmem %s0, %s106
      %p108 = scmp.lt.s32.totalorder %s12, 1
      %s109 = scalar_select %p108, %s12, 1
      %s110 = smul.addr %s109, 4
      %s111 = scalar_lea.vmem %s1, %s110
      %v114 = vld [vmem:[%s107] sm:$0x7]
      %v115 = vmul.bf16 %v114, 1052065461
      %v117 = vunpack.c.l.b16 %v114
      %v118 = vpack.c.b16 %v117, %v117
      %119 = vrot.lane.b32.xlu0 %v118, 96
      %v120 = vpop.permute.xlu0 %119
      %vm121 = vcmask 64512
      %v123 = vsel %vm121, %v115, 0
      %v126 = vsel %vm121, %v120, 0
      %128 = vmatprep.subr.bf16.mxu0 0
      %129 = vmatpush1.bf16.xpose.msra.mxu0 %v126
      %130 = vmatprep.subr.bf16.mxu0 0
      %131 = vmatpush1.bf16.xpose.msra.mxu0 0
      %132 = vmatprep.subr.bf16.mxu0 0
      %133 = vmatpush1.bf16.xpose.msra.mxu0 0
      %134 = vmatprep.subr.bf16.mxu0 0
      %135 = vmatpush1.bf16.xpose.msra.mxu0 0
      %136 = vmatprep.subr.bf16.mxu0 0
      %137 = vmatpush1.bf16.xpose.msra.mxu0 0
      %138 = vmatprep.subr.bf16.mxu0 0
      %139 = vmatpush1.bf16.xpose.msra.mxu0 0
      %140 = vmatprep.subr.bf16.mxu0 0
      %141 = vmatpush1.bf16.xpose.msra.mxu0 0
      %142 = vmatprep.subr.bf16.mxu0 0
      %143 = vmatpush1.bf16.xpose.msra.mxu0 0
      %144 = vmatprep.subr.bf16.mxu0 0
      %145 = vmatpush1.bf16.xpose.msra.mxu0 0
      %146 = vmatprep.subr.bf16.mxu0 0
      %147 = vmatpush1.bf16.xpose.msra.mxu0 0
      %148 = vmatprep.subr.bf16.mxu0 0
      %149 = vmatpush1.bf16.xpose.msra.mxu0 0
      %150 = vmatprep.subr.bf16.mxu0 0
      %151 = vmatpush1.bf16.xpose.msra.mxu0 0
      %152 = vmatprep.subr.bf16.mxu0 0
      %153 = vmatpush1.bf16.xpose.msra.mxu0 0
      %154 = vmatprep.subr.bf16.mxu0 0
      %155 = vmatpush1.bf16.xpose.msra.mxu0 0
      %156 = vmatprep.subr.bf16.mxu0 0
      %157 = vmatpush1.bf16.xpose.msra.mxu0 0
      %158 = vmatprep.subr.bf16.mxu0 0
      %159 = vmatpush1.bf16.xpose.msra.mxu0 0
      %160 = vmatprep.mubr.bf16.mxu0 0
      %161 = vmatmul.mubr.bf16.gmra.mrb[0].mxu0 %v123
      %v162 = vpop.f32.mrb[0].mxu0
      %v163 = vadd.f32 0.0, %v162
      %v164 = vpop.f32.mrb[0].mxu0
      %v165 = vpop.f32.mrb[0].mxu0
      %v166 = vpop.f32.mrb[0].mxu0
      %167 = vdwg.mxu0
      %vm168 = vcmask 36864
      %v169 = vsel %vm168, %v163, -inf
      %170 = vmax.xlane.f32.xlu0 %v169
      %v171 = vpop.xlane.xlu0 %170
      %v172 = vsub.f32 %v163, %v171
      %v173 = vmul.f32 %v172, 1.442695
      %v174 = vpow.pop %v173
      %v175 = vsel %vm168, %v174, 0.0
      %176 = vadd.xlane.f32.xlu0 %v175
      %v177 = vpop.xlane.xlu0 %176
      %v178 = vrcp.pop %v177
      %v179 = vmul.f32 %v174, %v178
      %v180 = vpack.c.bf16 %v179, %v179
      %181 = vrot.lane.b32.xlu0 %v118, 64
      %v182 = vpop.permute.xlu0 %181
      %vm183 = vcmask 39936
      %v185 = vsel %vm183, %v180, 0
      %vm187 = vcmask 1041408
      %vm188 = vcmask 1042432
      %v189 = vsel %vm187, 4294967295, 65535
      %v190 = vsel %vm188, %v189, 0
      %v192 = vand.u32 %v182, %v190
      %194 = vmatprep.subr.bf16.mxu0 0
      %195 = vmatpush1.bf16.msra.mxu0 %v192
      %196 = vmatprep.subr.bf16.mxu0 0
      %197 = vmatpush1.bf16.msra.mxu0 0
      %198 = vmatprep.subr.bf16.mxu0 0
      %199 = vmatpush1.bf16.msra.mxu0 0
      %200 = vmatprep.subr.bf16.mxu0 0
      %201 = vmatpush1.bf16.msra.mxu0 0
      %202 = vmatprep.subr.bf16.mxu0 0
      %203 = vmatpush1.bf16.msra.mxu0 0
      %204 = vmatprep.subr.bf16.mxu0 0
      %205 = vmatpush1.bf16.msra.mxu0 0
      %206 = vmatprep.subr.bf16.mxu0 0
      %207 = vmatpush1.bf16.msra.mxu0 0
      %208 = vmatprep.subr.bf16.mxu0 0
      %209 = vmatpush1.bf16.msra.mxu0 0
      %210 = vmatprep.subr.bf16.mxu0 0
      %211 = vmatpush1.bf16.msra.mxu0 0
      %212 = vmatprep.subr.bf16.mxu0 0
      %213 = vmatpush1.bf16.msra.mxu0 0
      %214 = vmatprep.subr.bf16.mxu0 0
      %215 = vmatpush1.bf16.msra.mxu0 0
      %216 = vmatprep.subr.bf16.mxu0 0
      %217 = vmatpush1.bf16.msra.mxu0 0
      %218 = vmatprep.subr.bf16.mxu0 0
      %219 = vmatpush1.bf16.msra.mxu0 0
      %220 = vmatprep.subr.bf16.mxu0 0
      %221 = vmatpush1.bf16.msra.mxu0 0
      %222 = vmatprep.subr.bf16.mxu0 0
      %223 = vmatpush1.bf16.msra.mxu0 0
      %224 = vmatprep.subr.bf16.mxu0 0
      %225 = vmatpush1.bf16.msra.mxu0 0
      %226 = vmatprep.mubr.bf16.mxu0 0
      %227 = vmatmul.mubr.bf16.gmra.mrb[0].mxu0 %v185
      %v228 = vpop.f32.mrb[0].mxu0
      %v229 = vadd.f32 0.0, %v228
      %v230 = vpop.f32.mrb[0].mxu0
      %v231 = vpop.f32.mrb[0].mxu0
      %v232 = vpop.f32.mrb[0].mxu0
      %233 = vdwg.mxu0
      %v234 = vpack.c.bf16 %v229, %v229
      %v236 = vunpack.c.l.b16 %v115
      %v237 = vpack.c.b16 %v236, %v236
      %238 = vrot.lane.b32.xlu0 %v237, 120
      %v239 = vpop.permute.xlu0 %238
      %240 = vrot.lane.b32.xlu0 %v118, 88
      %v241 = vpop.permute.xlu0 %240
      %v243 = vsel %vm121, %v239, 0
      %v246 = vsel %vm121, %v241, 0
      %248 = vmatprep.subr.bf16.mxu0 0
      %249 = vmatpush1.bf16.xpose.msra.mxu0 %v246
      %250 = vmatprep.subr.bf16.mxu0 0
      %251 = vmatpush1.bf16.xpose.msra.mxu0 0
      %252 = vmatprep.subr.bf16.mxu0 0
      %253 = vmatpush1.bf16.xpose.msra.mxu0 0
      %254 = vmatprep.subr.bf16.mxu0 0
      %255 = vmatpush1.bf16.xpose.msra.mxu0 0
      %256 = vmatprep.subr.bf16.mxu0 0
      %257 = vmatpush1.bf16.xpose.msra.mxu0 0
      %258 = vmatprep.subr.bf16.mxu0 0
      %259 = vmatpush1.bf16.xpose.msra.mxu0 0
      %260 = vmatprep.subr.bf16.mxu0 0
      %261 = vmatpush1.bf16.xpose.msra.mxu0 0
      %262 = vmatprep.subr.bf16.mxu0 0
      %263 = vmatpush1.bf16.xpose.msra.mxu0 0
      %264 = vmatprep.subr.bf16.mxu0 0
      %265 = vmatpush1.bf16.xpose.msra.mxu0 0
      %266 = vmatprep.subr.bf16.mxu0 0
      %267 = vmatpush1.bf16.xpose.msra.mxu0 0
      %268 = vmatprep.subr.bf16.mxu0 0
      %269 = vmatpush1.bf16.xpose.msra.mxu0 0
      %270 = vmatprep.subr.bf16.mxu0 0
      %271 = vmatpush1.bf16.xpose.msra.mxu0 0
      %272 = vmatprep.subr.bf16.mxu0 0
      %273 = vmatpush1.bf16.xpose.msra.mxu0 0
      %274 = vmatprep.subr.bf16.mxu0 0
      %275 = vmatpush1.bf16.xpose.msra.mxu0 0
      %276 = vmatprep.subr.bf16.mxu0 0
      %277 = vmatpush1.bf16.xpose.msra.mxu0 0
      %278 = vmatprep.subr.bf16.mxu0 0
      %279 = vmatpush1.bf16.xpose.msra.mxu0 0
      %280 = vmatprep.mubr.bf16.mxu0 0
      %281 = vmatmul.mubr.bf16.gmra.mrb[0].mxu0 %v243
      %v282 = vpop.f32.mrb[0].mxu0
      %v283 = vadd.f32 0.0, %v282
      %v284 = vpop.f32.mrb[0].mxu0
      %v285 = vpop.f32.mrb[0].mxu0
      %v286 = vpop.f32.mrb[0].mxu0
      %287 = vdwg.mxu0
      %v288 = vsel %vm168, %v283, -inf
      %289 = vmax.xlane.f32.xlu0 %v288
      %v290 = vpop.xlane.xlu0 %289
      %v291 = vsub.f32 %v283, %v290
      %v292 = vmul.f32 %v291, 1.442695
      %v293 = vpow.pop %v292
      %v294 = vsel %vm168, %v293, 0.0
      %295 = vadd.xlane.f32.xlu0 %v294
      %v296 = vpop.xlane.xlu0 %295
      %v297 = vrcp.pop %v296
      %v298 = vmul.f32 %v293, %v297
      %v299 = vpack.c.bf16 %v298, %v298
      %300 = vrot.lane.b32.xlu0 %v118, 56
      %v301 = vpop.permute.xlu0 %300
      %v303 = vsel %vm183, %v299, 0
      %v306 = vand.u32 %v301, %v190
      %308 = vmatprep.subr.bf16.mxu0 0
      %309 = vmatpush1.bf16.msra.mxu0 %v306
      %310 = vmatprep.subr.bf16.mxu0 0
      %311 = vmatpush1.bf16.msra.mxu0 0
      %312 = vmatprep.subr.bf16.mxu0 0
      %313 = vmatpush1.bf16.msra.mxu0 0
      %314 = vmatprep.subr.bf16.mxu0 0
      %315 = vmatpush1.bf16.msra.mxu0 0
      %316 = vmatprep.subr.bf16.mxu0 0
      %317 = vmatpush1.bf16.msra.mxu0 0
      %318 = vmatprep.subr.bf16.mxu0 0
      %319 = vmatpush1.bf16.msra.mxu0 0
      %320 = vmatprep.subr.bf16.mxu0 0
      %321 = vmatpush1.bf16.msra.mxu0 0
      %322 = vmatprep.subr.bf16.mxu0 0
      %323 = vmatpush1.bf16.msra.mxu0 0
      %324 = vmatprep.subr.bf16.mxu0 0
      %325 = vmatpush1.bf16.msra.mxu0 0
      %326 = vmatprep.subr.bf16.mxu0 0
      %327 = vmatpush1.bf16.msra.mxu0 0
      %328 = vmatprep.subr.bf16.mxu0 0
      %329 = vmatpush1.bf16.msra.mxu0 0
      %330 = vmatprep.subr.bf16.mxu0 0
      %331 = vmatpush1.bf16.msra.mxu0 0
      %332 = vmatprep.subr.bf16.mxu0 0
      %333 = vmatpush1.bf16.msra.mxu0 0
      %334 = vmatprep.subr.bf16.mxu0 0
      %335 = vmatpush1.bf16.msra.mxu0 0
      %336 = vmatprep.subr.bf16.mxu0 0
      %337 = vmatpush1.bf16.msra.mxu0 0
      %338 = vmatprep.subr.bf16.mxu0 0
      %339 = vmatpush1.bf16.msra.mxu0 0
      %340 = vmatprep.mubr.bf16.mxu0 0
      %341 = vmatmul.mubr.bf16.gmra.mrb[0].mxu0 %v303
      %v342 = vpop.f32.mrb[0].mxu0
      %v343 = vadd.f32 0.0, %v342
      %v344 = vpop.f32.mrb[0].mxu0
      %v345 = vpop.f32.mrb[0].mxu0
      %v346 = vpop.f32.mrb[0].mxu0
      %347 = vdwg.mxu0
      %v348 = vpack.c.bf16 %v343, %v343
      %349 = vrot.lane.b32.xlu0 %v237, 112
      %v350 = vpop.permute.xlu0 %349
      %351 = vrot.lane.b32.xlu0 %v118, 80
      %v352 = vpop.permute.xlu0 %351
      %v354 = vsel %vm121, %v350, 0
      %v357 = vsel %vm121, %v352, 0
      %359 = vmatprep.subr.bf16.mxu0 0
      %360 = vmatpush1.bf16.xpose.msra.mxu0 %v357
      %361 = vmatprep.subr.bf16.mxu0 0
      %362 = vmatpush1.bf16.xpose.msra.mxu0 0
      %363 = vmatprep.subr.bf16.mxu0 0
      %364 = vmatpush1.bf16.xpose.msra.mxu0 0
      %365 = vmatprep.subr.bf16.mxu0 0
      %366 = vmatpush1.bf16.xpose.msra.mxu0 0
      %367 = vmatprep.subr.bf16.mxu0 0
      %368 = vmatpush1.bf16.xpose.msra.mxu0 0
      %369 = vmatprep.subr.bf16.mxu0 0
      %370 = vmatpush1.bf16.xpose.msra.mxu0 0
      %371 = vmatprep.subr.bf16.mxu0 0
      %372 = vmatpush1.bf16.xpose.msra.mxu0 0
      %373 = vmatprep.subr.bf16.mxu0 0
      %374 = vmatpush1.bf16.xpose.msra.mxu0 0
      %375 = vmatprep.subr.bf16.mxu0 0
      %376 = vmatpush1.bf16.xpose.msra.mxu0 0
      %377 = vmatprep.subr.bf16.mxu0 0
      %378 = vmatpush1.bf16.xpose.msra.mxu0 0
      %379 = vmatprep.subr.bf16.mxu0 0
      %380 = vmatpush1.bf16.xpose.msra.mxu0 0
      %381 = vmatprep.subr.bf16.mxu0 0
      %382 = vmatpush1.bf16.xpose.msra.mxu0 0
      %383 = vmatprep.subr.bf16.mxu0 0
      %384 = vmatpush1.bf16.xpose.msra.mxu0 0
      %385 = vmatprep.subr.bf16.mxu0 0
      %386 = vmatpush1.bf16.xpose.msra.mxu0 0
      %387 = vmatprep.subr.bf16.mxu0 0
      %388 = vmatpush1.bf16.xpose.msra.mxu0 0
      %389 = vmatprep.subr.bf16.mxu0 0
      %390 = vmatpush1.bf16.xpose.msra.mxu0 0
      %391 = vmatprep.mubr.bf16.mxu0 0
      %392 = vmatmul.mubr.bf16.gmra.mrb[0].mxu0 %v354
      %v393 = vpop.f32.mrb[0].mxu0
      %v394 = vadd.f32 0.0, %v393
      %v395 = vpop.f32.mrb[0].mxu0
      %v396 = vpop.f32.mrb[0].mxu0
      %v397 = vpop.f32.mrb[0].mxu0
      %398 = vdwg.mxu0
      %v399 = vsel %vm168, %v394, -inf
      %400 = vmax.xlane.f32.xlu0 %v399
      %v401 = vpop.xlane.xlu0 %400
      %v402 = vsub.f32 %v394, %v401
      %v403 = vmul.f32 %v402, 1.442695
      %v404 = vpow.pop %v403
      %v405 = vsel %vm168, %v404, 0.0
      %406 = vadd.xlane.f32.xlu0 %v405
      %v407 = vpop.xlane.xlu0 %406
      %v408 = vrcp.pop %v407
      %v409 = vmul.f32 %v404, %v408
      %v410 = vpack.c.bf16 %v409, %v409
      %411 = vrot.lane.b32.xlu0 %v118, 48
      %v412 = vpop.permute.xlu0 %411
      %v414 = vsel %vm183, %v410, 0
      %v417 = vand.u32 %v412, %v190
      %419 = vmatprep.subr.bf16.mxu0 0
      %420 = vmatpush1.bf16.msra.mxu0 %v417
      %421 = vmatprep.subr.bf16.mxu0 0
      %422 = vmatpush1.bf16.msra.mxu0 0
      %423 = vmatprep.subr.bf16.mxu0 0
      %424 = vmatpush1.bf16.msra.mxu0 0
      %425 = vmatprep.subr.bf16.mxu0 0
      %426 = vmatpush1.bf16.msra.mxu0 0
      %427 = vmatprep.subr.bf16.mxu0 0
      %428 = vmatpush1.bf16.msra.mxu0 0
      %429 = vmatprep.subr.bf16.mxu0 0
      %430 = vmatpush1.bf16.msra.mxu0 0
      %431 = vmatprep.subr.bf16.mxu0 0
      %432 = vmatpush1.bf16.msra.mxu0 0
      %433 = vmatprep.subr.bf16.mxu0 0
      %434 = vmatpush1.bf16.msra.mxu0 0
      %435 = vmatprep.subr.bf16.mxu0 0
      %436 = vmatpush1.bf16.msra.mxu0 0
      %437 = vmatprep.subr.bf16.mxu0 0
      %438 = vmatpush1.bf16.msra.mxu0 0
      %439 = vmatprep.subr.bf16.mxu0 0
      %440 = vmatpush1.bf16.msra.mxu0 0
      %441 = vmatprep.subr.bf16.mxu0 0
      %442 = vmatpush1.bf16.msra.mxu0 0
      %443 = vmatprep.subr.bf16.mxu0 0
      %444 = vmatpush1.bf16.msra.mxu0 0
      %445 = vmatprep.subr.bf16.mxu0 0
      %446 = vmatpush1.bf16.msra.mxu0 0
      %447 = vmatprep.subr.bf16.mxu0 0
      %448 = vmatpush1.bf16.msra.mxu0 0
      %449 = vmatprep.subr.bf16.mxu0 0
      %450 = vmatpush1.bf16.msra.mxu0 0
      %451 = vmatprep.mubr.bf16.mxu0 0
      %452 = vmatmul.mubr.bf16.gmra.mrb[0].mxu0 %v414
      %v453 = vpop.f32.mrb[0].mxu0
      %v454 = vadd.f32 0.0, %v453
      %v455 = vpop.f32.mrb[0].mxu0
      %v456 = vpop.f32.mrb[0].mxu0
      %v457 = vpop.f32.mrb[0].mxu0
      %458 = vdwg.mxu0
      %v459 = vpack.c.bf16 %v454, %v454
      %460 = vrot.lane.b32.xlu0 %v237, 104
      %v461 = vpop.permute.xlu0 %460
      %462 = vrot.lane.b32.xlu0 %v118, 72
      %v463 = vpop.permute.xlu0 %462
      %v465 = vsel %vm121, %v461, 0
      %v468 = vsel %vm121, %v463, 0
      %470 = vmatprep.subr.bf16.mxu0 0
      %471 = vmatpush1.bf16.xpose.msra.mxu0 %v468
      %472 = vmatprep.subr.bf16.mxu0 0
      %473 = vmatpush1.bf16.xpose.msra.mxu0 0
      %474 = vmatprep.subr.bf16.mxu0 0
      %475 = vmatpush1.bf16.xpose.msra.mxu0 0
      %476 = vmatprep.subr.bf16.mxu0 0
      %477 = vmatpush1.bf16.xpose.msra.mxu0 0
      %478 = vmatprep.subr.bf16.mxu0 0
      %479 = vmatpush1.bf16.xpose.msra.mxu0 0
      %480 = vmatprep.subr.bf16.mxu0 0
      %481 = vmatpush1.bf16.xpose.msra.mxu0 0
      %482 = vmatprep.subr.bf16.mxu0 0
      %483 = vmatpush1.bf16.xpose.msra.mxu0 0
      %484 = vmatprep.subr.bf16.mxu0 0
      %485 = vmatpush1.bf16.xpose.msra.mxu0 0
      %486 = vmatprep.subr.bf16.mxu0 0
      %487 = vmatpush1.bf16.xpose.msra.mxu0 0
      %488 = vmatprep.subr.bf16.mxu0 0
      %489 = vmatpush1.bf16.xpose.msra.mxu0 0
      %490 = vmatprep.subr.bf16.mxu0 0
      %491 = vmatpush1.bf16.xpose.msra.mxu0 0
      %492 = vmatprep.subr.bf16.mxu0 0
      %493 = vmatpush1.bf16.xpose.msra.mxu0 0
      %494 = vmatprep.subr.bf16.mxu0 0
      %495 = vmatpush1.bf16.xpose.msra.mxu0 0
      %496 = vmatprep.subr.bf16.mxu0 0
      %497 = vmatpush1.bf16.xpose.msra.mxu0 0
      %498 = vmatprep.subr.bf16.mxu0 0
      %499 = vmatpush1.bf16.xpose.msra.mxu0 0
      %500 = vmatprep.subr.bf16.mxu0 0
      %501 = vmatpush1.bf16.xpose.msra.mxu0 0
      %502 = vmatprep.mubr.bf16.mxu0 0
      %503 = vmatmul.mubr.bf16.gmra.mrb[0].mxu0 %v465
      %v504 = vpop.f32.mrb[0].mxu0
      %v505 = vadd.f32 0.0, %v504
      %v506 = vpop.f32.mrb[0].mxu0
      %v507 = vpop.f32.mrb[0].mxu0
      %v508 = vpop.f32.mrb[0].mxu0
      %509 = vdwg.mxu0
      %v510 = vsel %vm168, %v505, -inf
      %511 = vmax.xlane.f32.xlu0 %v510
      %v512 = vpop.xlane.xlu0 %511
      %v513 = vsub.f32 %v505, %v512
      %v514 = vmul.f32 %v513, 1.442695
      %v515 = vpow.pop %v514
      %v516 = vsel %vm168, %v515, 0.0
      %517 = vadd.xlane.f32.xlu0 %v516
      %v518 = vpop.xlane.xlu0 %517
      %v519 = vrcp.pop %v518
      %v520 = vmul.f32 %v515, %v519
      %v521 = vpack.c.bf16 %v520, %v520
      %522 = vrot.lane.b32.xlu0 %v118, 40
      %v523 = vpop.permute.xlu0 %522
      %v525 = vsel %vm183, %v521, 0
      %v528 = vand.u32 %v523, %v190
      %530 = vmatprep.subr.bf16.mxu0 0
      %531 = vmatpush1.bf16.msra.mxu0 %v528
      %532 = vmatprep.subr.bf16.mxu0 0
      %533 = vmatpush1.bf16.msra.mxu0 0
      %534 = vmatprep.subr.bf16.mxu0 0
      %535 = vmatpush1.bf16.msra.mxu0 0
      %536 = vmatprep.subr.bf16.mxu0 0
      %537 = vmatpush1.bf16.msra.mxu0 0
      %538 = vmatprep.subr.bf16.mxu0 0
      %539 = vmatpush1.bf16.msra.mxu0 0
      %540 = vmatprep.subr.bf16.mxu0 0
      %541 = vmatpush1.bf16.msra.mxu0 0
      %542 = vmatprep.subr.bf16.mxu0 0
      %543 = vmatpush1.bf16.msra.mxu0 0
      %544 = vmatprep.subr.bf16.mxu0 0
      %545 = vmatpush1.bf16.msra.mxu0 0
      %546 = vmatprep.subr.bf16.mxu0 0
      %547 = vmatpush1.bf16.msra.mxu0 0
      %548 = vmatprep.subr.bf16.mxu0 0
      %549 = vmatpush1.bf16.msra.mxu0 0
      %550 = vmatprep.subr.bf16.mxu0 0
      %551 = vmatpush1.bf16.msra.mxu0 0
      %552 = vmatprep.subr.bf16.mxu0 0
      %553 = vmatpush1.bf16.msra.mxu0 0
      %554 = vmatprep.subr.bf16.mxu0 0
      %555 = vmatpush1.bf16.msra.mxu0 0
      %556 = vmatprep.subr.bf16.mxu0 0
      %557 = vmatpush1.bf16.msra.mxu0 0
      %558 = vmatprep.subr.bf16.mxu0 0
      %559 = vmatpush1.bf16.msra.mxu0 0
      %560 = vmatprep.subr.bf16.mxu0 0
      %561 = vmatpush1.bf16.msra.mxu0 0
      %562 = vmatprep.mubr.bf16.mxu0 0
      %563 = vmatmul.mubr.bf16.gmra.mrb[0].mxu0 %v525
      %v564 = vpop.f32.mrb[0].mxu0
      %v565 = vadd.f32 0.0, %v564
      %v566 = vpop.f32.mrb[0].mxu0
      %v567 = vpop.f32.mrb[0].mxu0
      %v568 = vpop.f32.mrb[0].mxu0
      %569 = vdwg.mxu0
      %v570 = vpack.c.bf16 %v565, %v565
      %572 = vrot.lane.b32.xlu0 %v348, 8
      %v573 = vpop.permute.xlu0 %572
      %575 = vrot.lane.b32.xlu0 %v459, 16
      %v576 = vpop.permute.xlu0 %575
      %578 = vrot.lane.b32.xlu0 %v570, 24
      %v579 = vpop.permute.xlu0 %578
      %v582 = vsel %vm121, %v234, %v573
      %vm583 = vcmask 130048
      %v585 = vsel %vm583, %v582, %v576
      %vm586 = vcmask 195584
      %v588 = vsel %vm586, %v585, %v579
      %vm590 = vcmask 256000
      %vm591 = vsmask.f32 2304
      %vm592 = vmand %vm590, %vm591
      %v593 = vld [vmem:[%s111] sm:$0x7]
      %v594 = vsel %vm592, %v588, %v593
      %595 = vst [vmem:[%s111] sm:$0x7] %v594
      %p596 = scmp.lt.s32.totalorder %s12, 1
      %s597 = scalar_select %p596, %s12, 1
      %s598 = smul.addr %s597, 4
      %s599 = scalar_lea.vmem %s1, %s598
      // Predicated region
      $region25: #{clip_forward.31} parent=23 // pred_check
        %p600 = pneg %p56
      $region26: #{clip_forward.31} parent=23 // pred_check_branch
        %602 = sbr.rel (%p600) target = $region28
      $region27: #{clip_forward.31} parent=23 // pred_region
        _
      $region28: #{clip_forward.31} parent=23 // pred_fallthru
        _
    $region24: #{clip_forward.31} parent=5 // pred_fallthru
      _
    %p603 = scmp.le.s32.totalorder 2, %s7
    // Predicated region
    $region29: #{clip_forward.31} parent=5 // pred_check
      %p604 = pneg %p603
    $region30: #{clip_forward.31} parent=5 // pred_check_branch
      %606 = sbr.rel (%p604) target = $region32
    $region31: #{clip_forward.31} parent=5 // pred_region
      %s607 = ssub.s32 %s7, 2
      // Predicated region
      $region33: #{clip_forward.31} parent=31 // pred_check
        %p608 = pneg %p62
      $region34: #{clip_forward.31} parent=31 // pred_check_branch
        %610 = sbr.rel (%p608) target = $region36
      $region35: #{clip_forward.31} parent=31 // pred_region
        %p611 = scmp.lt.s32.totalorder %s13, 1
        %s612 = scalar_select %p611, %s13, 1
        %s613 = smul.addr %s612, 4
        %s614 = scalar_lea.vmem %s1, %s613
      $region36: #{clip_forward.31} parent=31 // pred_fallthru
        _
    $region32: #{clip_forward.31} parent=5 // pred_fallthru
      _
  $region6: #{clip_forward.31} parent=0 // loop_footer
    %s11 = sadd.s32 1, %s7
  $region7: #{clip_forward.31} parent=0 // loop_footer_branch
    %6 = sbr.rel target = $region3
  $region8: #{clip_forward.31} parent=0 // loop_exit
    _

// kernel: clip_forward.32
$region0: #{clip_forward.32}
  #allocation0 [shape = 'u32[]', space=smem, size = 0x4, offset = 0x4, fixed_abs, tag = 'smem constant byte address 0x4 - core index']
  #allocation1 [shape = 'u32[144,128]{1,0:T(1,128)}', space=vmem, size = 0x12000, scoped, tag = 'internal scratch']
  %s0 = inlined_call_operand.vmem [shape: bf16[16,128], index: 0, kind: input, shape index: {}]
  %s1 = inlined_call_operand.vmem [shape: bf16[128,128], index: 1, kind: input, shape index: {}]
  %s2 = inlined_call_operand.vmem [shape: f32[1,128], index: 2, kind: input, shape index: {}]
  %s3 = inlined_call_operand.vmem [shape: f32[16,128], index: 3, kind: input, shape index: {}]
  %s4 = inlined_call_operand.vmem [shape: f32[16,128], index: 4, kind: output, shape index: {}]
  %s5 = sld [smem:[#allocation0]]
  $region26: #{clip_forward.32} parent=0
    _
  %s7 = ssub.s32 1, %s5
  %s8 = scalar_select 0, %s7, %s5
  // Predicated region
  $region2: #{clip_forward.32} parent=0 // pred_check
    _
  $region3: #{clip_forward.32} parent=0 // pred_check_branch
    %10 = sbr.rel (0) target = $region5
  $region4: #{clip_forward.32} parent=0 // pred_region
    _
  $region5: #{clip_forward.32} parent=0 // pred_fallthru
    _
  // Predicated region
  $region6: #{clip_forward.32} parent=0 // pred_check
    _
  $region7: #{clip_forward.32} parent=0 // pred_check_branch
    %12 = sbr.rel (0) target = $region9
  $region8: #{clip_forward.32} parent=0 // pred_region
    _
  $region9: #{clip_forward.32} parent=0 // pred_fallthru
    _
  // Predicated region
  $region10: #{clip_forward.32} parent=0 // pred_check
    _
  $region11: #{clip_forward.32} parent=0 // pred_check_branch
    %14 = sbr.rel (0) target = $region13
  $region12: #{clip_forward.32} parent=0 // pred_region
    _
  $region13: #{clip_forward.32} parent=0 // pred_fallthru
    _
  // Predicated region
  $region14: #{clip_forward.32} parent=0 // pred_check
    _
  $region15: #{clip_forward.32} parent=0 // pred_check_branch
    %16 = sbr.rel (0) target = $region17
  $region16: #{clip_forward.32} parent=0 // pred_region
    _
  $region17: #{clip_forward.32} parent=0 // pred_fallthru
    _
  %v18 = vld [vmem:[%s0] sm:$0xf]
  %v19 = vld [vmem:[%s0 + $0x4] sm:$0xf]
  %v20 = vld [vmem:[%s1] sm:$0xf]
  %v21 = vld [vmem:[%s1 + $0x4] sm:$0xf]
  %v22 = vld [vmem:[%s1 + $0x8] sm:$0xf]
  %v23 = vld [vmem:[%s1 + $0xc] sm:$0xf]
  %v24 = vld [vmem:[%s1 + $0x10] sm:$0xf]
  %v25 = vld [vmem:[%s1 + $0x14] sm:$0xf]
  %v26 = vld [vmem:[%s1 + $0x18] sm:$0xf]
  %v27 = vld [vmem:[%s1 + $0x1c] sm:$0xf]
  %v28 = vld [vmem:[%s1 + $0x20] sm:$0xf]
  %v29 = vld [vmem:[%s1 + $0x24] sm:$0xf]
  %v30 = vld [vmem:[%s1 + $0x28] sm:$0xf]
  %v31 = vld [vmem:[%s1 + $0x2c] sm:$0xf]
  %v32 = vld [vmem:[%s1 + $0x30] sm:$0xf]
  %v33 = vld [vmem:[%s1 + $0x34] sm:$0xf]
  %v34 = vld [vmem:[%s1 + $0x38] sm:$0xf]
  %v35 = vld [vmem:[%s1 + $0x3c] sm:$0xf]
  %v36 = vld [vmem:[%s2] sm:$0x1]
  %v38 = vlaneseq
  %v39 = vshrl.u32 %v38, 7
  %v40 = vsub.s32 0, %v39
  %v41 = vrot.slane %v36, %v40
  %v45 = vunpack.c.l.b16 %v18
  %v46 = vunpack.c.l.b16 %v19
  %v47 = vpack.c.b16 %v46, %v45
  %v65 = vunpack.c.l.b16 %v20
  %v66 = vunpack.c.l.b16 %v21
  %v67 = vunpack.c.l.b16 %v22
  %v68 = vunpack.c.l.b16 %v23
  %v69 = vunpack.c.l.b16 %v24
  %v70 = vunpack.c.l.b16 %v25
  %v71 = vunpack.c.l.b16 %v26
  %v72 = vunpack.c.l.b16 %v27
  %v73 = vunpack.c.l.b16 %v28
  %v74 = vunpack.c.l.b16 %v29
  %v75 = vunpack.c.l.b16 %v30
  %v76 = vunpack.c.l.b16 %v31
  %v77 = vunpack.c.l.b16 %v32
  %v78 = vunpack.c.l.b16 %v33
  %v79 = vunpack.c.l.b16 %v34
  %v80 = vunpack.c.l.b16 %v35
  %v81 = vpack.c.b16 %v66, %v65
  %v82 = vpack.c.b16 %v68, %v67
  %v83 = vpack.c.b16 %v70, %v69
  %v84 = vpack.c.b16 %v72, %v71
  %v85 = vpack.c.b16 %v74, %v73
  %v86 = vpack.c.b16 %v76, %v75
  %v87 = vpack.c.b16 %v78, %v77
  %v88 = vpack.c.b16 %v80, %v79
  %97 = vmatprep.subr.bf16.mxu0 0
  %98 = vmatpush1.bf16.msra.mxu0 %v81
  %99 = vmatprep.subr.bf16.mxu0 0
  %100 = vmatpush1.bf16.msra.mxu0 %v82
  %101 = vmatprep.subr.bf16.mxu0 0
  %102 = vmatpush1.bf16.msra.mxu0 %v83
  %103 = vmatprep.subr.bf16.mxu0 0
  %104 = vmatpush1.bf16.msra.mxu0 %v84
  %105 = vmatprep.subr.bf16.mxu0 0
  %106 = vmatpush1.bf16.msra.mxu0 %v85
  %107 = vmatprep.subr.bf16.mxu0 0
  %108 = vmatpush1.bf16.msra.mxu0 %v86
  %109 = vmatprep.subr.bf16.mxu0 0
  %110 = vmatpush1.bf16.msra.mxu0 %v87
  %111 = vmatprep.subr.bf16.mxu0 0
  %112 = vmatpush1.bf16.msra.mxu0 %v88
  %113 = vmatprep.subr.bf16.mxu0 0
  %114 = vmatpush1.bf16.msra.mxu0 0
  %115 = vmatprep.subr.bf16.mxu0 0
  %116 = vmatpush1.bf16.msra.mxu0 0
  %117 = vmatprep.subr.bf16.mxu0 0
  %118 = vmatpush1.bf16.msra.mxu0 0
  %119 = vmatprep.subr.bf16.mxu0 0
  %120 = vmatpush1.bf16.msra.mxu0 0
  %121 = vmatprep.subr.bf16.mxu0 0
  %122 = vmatpush1.bf16.msra.mxu0 0
  %123 = vmatprep.subr.bf16.mxu0 0
  %124 = vmatpush1.bf16.msra.mxu0 0
  %125 = vmatprep.subr.bf16.mxu0 0
  %126 = vmatpush1.bf16.msra.mxu0 0
  %127 = vmatprep.subr.bf16.mxu0 0
  %128 = vmatpush1.bf16.msra.mxu0 0
  %129 = vmatprep.mubr.bf16.mxu0 0
  %130 = vmatmul.mubr.bf16.gmra.mrb[0].mxu0 %v47
  %v131 = vpop.f32.mrb[0].mxu0
  %v132 = vadd.f32 %v41, %v131
  %v133 = vpop.f32.mrb[0].mxu0
  %v134 = vpop.f32.mrb[0].mxu0
  %v135 = vadd.f32 %v41, %v134
  %v136 = vpop.f32.mrb[0].mxu0
  %137 = vdwg.mxu0
  %v138 = vld [vmem:[%s3] sm:$0xff]
  %v139 = vld [vmem:[%s3 + $0x8] sm:$0xff]
  %v140 = vadd.f32 %v132, %v138
  %v141 = vadd.f32 %v135, %v139
  %142 = vst [vmem:[%s4] sm:$0xff] %v140
  %143 = vst [vmem:[%s4 + $0x8] sm:$0xff] %v141
  // Predicated region
  $region18: #{clip_forward.32} parent=0 // pred_check
    _
  $region19: #{clip_forward.32} parent=0 // pred_check_branch
    %145 = sbr.rel (0) target = $region21
  $region20: #{clip_forward.32} parent=0 // pred_region
    _
  $region21: #{clip_forward.32} parent=0 // pred_fallthru
    _
  // Predicated region
  $region22: #{clip_forward.32} parent=0 // pred_check
    _
  $region23: #{clip_forward.32} parent=0 // pred_check_branch
    %147 = sbr.rel (0) target = $region25
  $region24: #{clip_forward.32} parent=0 // pred_region
    _
  $region25: #{clip_forward.32} parent=0 // pred_fallthru
    _

// kernel: clip_forward.40
$region0: #{clip_forward.40}
  #allocation0 [shape = 'u32[]', space=smem, size = 0x4, offset = 0x4, fixed_abs, tag = 'smem constant byte address 0x4 - core index']
  #allocation1 [shape = 'u32[144,128]{1,0:T(1,128)}', space=vmem, size = 0x12000, scoped, tag = 'internal scratch']
  %s0 = inlined_call_operand.vmem [shape: f32[8,128], index: 0, kind: input, shape index: {}]
  %s1 = inlined_call_operand.vmem [shape: f32[1,128], index: 1, kind: input, shape index: {}]
  %s2 = inlined_call_operand.vmem [shape: f32[1,128], index: 2, kind: input, shape index: {}]
  %s3 = inlined_call_operand.vmem [shape: f32[8,128], index: 3, kind: output, shape index: {}]
  %s4 = sld [smem:[#allocation0]]
  $region22: #{clip_forward.40} parent=0
    _
  %s6 = ssub.s32 1, %s4
  %s7 = scalar_select 0, %s6, %s4
  // Predicated region
  $region2: #{clip_forward.40} parent=0 // pred_check
    _
  $region3: #{clip_forward.40} parent=0 // pred_check_branch
    %9 = sbr.rel (0) target = $region5
  $region4: #{clip_forward.40} parent=0 // pred_region
    _
  $region5: #{clip_forward.40} parent=0 // pred_fallthru
    _
  // Predicated region
  $region6: #{clip_forward.40} parent=0 // pred_check
    _
  $region7: #{clip_forward.40} parent=0 // pred_check_branch
    %11 = sbr.rel (0) target = $region9
  $region8: #{clip_forward.40} parent=0 // pred_region
    _
  $region9: #{clip_forward.40} parent=0 // pred_fallthru
    _
  // Predicated region
  $region10: #{clip_forward.40} parent=0 // pred_check
    _
  $region11: #{clip_forward.40} parent=0 // pred_check_branch
    %13 = sbr.rel (0) target = $region13
  $region12: #{clip_forward.40} parent=0 // pred_region
    _
  $region13: #{clip_forward.40} parent=0 // pred_fallthru
    _
  %v14 = vld [vmem:[%s0] sm:$0xff]
  %15 = vadd.xlane.f32.xlu0 %v14
  %v16 = vpop.xlane.xlu0 %15
  %v17 = vmul.f32 %v16, 0.03125
  %v18 = vsub.f32 %v14, %v17
  %v19 = vlaneseq
  %v20 = vand.u32 %v19, 127
  %vm21 = vcmp.lt.s32.totalorder %v20, 32
  %v22 = vsel %vm21, %v18, 0.0
  %v23 = vmul.f32 %v22, %v22
  %24 = vadd.xlane.f32.xlu0 %v23
  %v25 = vpop.xlane.xlu0 %24
  %v26 = vmul.f32 %v25, 0.03125
  %v27 = vadd.f32 %v26, 1e-05
  %v28 = vrsqrt.pop %v27
  %v29 = vmul.f32 %v22, %v28
  %v30 = vld [vmem:[%s1] sm:$0x1]
  %v32 = vlaneseq
  %v33 = vshrl.u32 %v32, 7
  %v34 = vsub.s32 0, %v33
  %v35 = vrot.slane %v30, %v34
  %v37 = vmul.f32 %v29, %v35
  %v38 = vld [vmem:[%s2] sm:$0x1]
  %v40 = vlaneseq
  %v41 = vshrl.u32 %v40, 7
  %v42 = vsub.s32 0, %v41
  %v43 = vrot.slane %v38, %v42
  %v45 = vadd.f32 %v37, %v43
  %46 = vst [vmem:[%s3] sm:$0xff] %v45
  // Predicated region
  $region14: #{clip_forward.40} parent=0 // pred_check
    _
  $region15: #{clip_forward.40} parent=0 // pred_check_branch
    %48 = sbr.rel (0) target = $region17
  $region16: #{clip_forward.40} parent=0 // pred_region
    _
  $region17: #{clip_forward.40} parent=0 // pred_fallthru
    _
  // Predicated region
  $region18: #{clip_forward.40} parent=0 // pred_check
    _
  $region19: #{clip_forward.40} parent=0 // pred_check_branch
    %50 = sbr.rel (0) target = $region21
  $region20: #{clip_forward.40} parent=0 // pred_region
    _
  $region21: #{clip_forward.40} parent=0 // pred_fallthru
    _

// kernel: clip_forward.33
$region0: #{clip_forward.33}
  #allocation0 [shape = 'u32[]', space=smem, size = 0x4, offset = 0x4, fixed_abs, tag = 'smem constant byte address 0x4 - core index']
  #allocation1 [shape = 'u32[144,128]{1,0:T(1,128)}', space=vmem, size = 0x12000, scoped, tag = 'internal scratch']
  #allocation2 [shape = 'bf16[16,128]{1,0:T(16,128)(2,1)}', space=vmem, size = 0x1000, scoped, tag = 'scratch operand']
  %s0 = inlined_call_operand.vmem [shape: f32[16,128], index: 0, kind: input, shape index: {}]
  %s1 = inlined_call_operand.vmem [shape: f32[1,128], index: 1, kind: input, shape index: {}]
  %s2 = inlined_call_operand.vmem [shape: f32[1,128], index: 2, kind: input, shape index: {}]
  %s3 = inlined_call_operand.vmem [shape: bf16[128,128], index: 3, kind: input, shape index: {}]
  %s4 = inlined_call_operand.vmem [shape: f32[1,128], index: 4, kind: input, shape index: {}]
  %s5 = inlined_call_operand.vmem [shape: bf16[16,128], index: 5, kind: output, shape index: {}]
  %s6 = sld [smem:[#allocation0]]
  $region34: #{clip_forward.33} parent=0
    _
  %s8 = ssub.s32 1, %s6
  %s9 = scalar_select 0, %s8, %s6
  // Predicated region
  $region2: #{clip_forward.33} parent=0 // pred_check
    _
  $region3: #{clip_forward.33} parent=0 // pred_check_branch
    %11 = sbr.rel (0) target = $region5
  $region4: #{clip_forward.33} parent=0 // pred_region
    _
  $region5: #{clip_forward.33} parent=0 // pred_fallthru
    _
  // Predicated region
  $region6: #{clip_forward.33} parent=0 // pred_check
    _
  $region7: #{clip_forward.33} parent=0 // pred_check_branch
    %13 = sbr.rel (0) target = $region9
  $region8: #{clip_forward.33} parent=0 // pred_region
    _
  $region9: #{clip_forward.33} parent=0 // pred_fallthru
    _
  // Predicated region
  $region10: #{clip_forward.33} parent=0 // pred_check
    _
  $region11: #{clip_forward.33} parent=0 // pred_check_branch
    %15 = sbr.rel (0) target = $region13
  $region12: #{clip_forward.33} parent=0 // pred_region
    _
  $region13: #{clip_forward.33} parent=0 // pred_fallthru
    _
  // Predicated region
  $region14: #{clip_forward.33} parent=0 // pred_check
    _
  $region15: #{clip_forward.33} parent=0 // pred_check_branch
    %17 = sbr.rel (0) target = $region17
  $region16: #{clip_forward.33} parent=0 // pred_region
    _
  $region17: #{clip_forward.33} parent=0 // pred_fallthru
    _
  // Predicated region
  $region18: #{clip_forward.33} parent=0 // pred_check
    _
  $region19: #{clip_forward.33} parent=0 // pred_check_branch
    %19 = sbr.rel (0) target = $region21
  $region20: #{clip_forward.33} parent=0 // pred_region
    _
  $region21: #{clip_forward.33} parent=0 // pred_fallthru
    _
  %p21 = scmp.eq.s32.totalorder 0, 0
  // Predicated region
  $region22: #{clip_forward.33} parent=0 // pred_check
    %p22 = pneg %p21
  $region23: #{clip_forward.33} parent=0 // pred_check_branch
    %24 = sbr.rel (%p22) target = $region25
  $region24: #{clip_forward.33} parent=0 // pred_region
    %v25 = vld [vmem:[%s0] sm:$0xff]
    %v26 = vld [vmem:[%s0 + $0x8] sm:$0xff]
    %27 = vadd.xlane.f32.xlu0 %v25
    %v28 = vpop.xlane.xlu0 %27
    %29 = vadd.xlane.f32.xlu0 %v26
    %v30 = vpop.xlane.xlu0 %29
    %v31 = vmul.f32 %v28, 0.03125
    %v32 = vmul.f32 %v30, 0.03125
    %v33 = vsub.f32 %v25, %v31
    %v34 = vsub.f32 %v26, %v32
    %v35 = vlaneseq
    %v36 = vand.u32 %v35, 127
    %vm37 = vcmp.lt.s32.totalorder %v36, 32
    %v38 = vsel %vm37, %v33, 0.0
    %v39 = vsel %vm37, %v34, 0.0
    %v40 = vmul.f32 %v38, %v38
    %v41 = vmul.f32 %v39, %v39
    %42 = vadd.xlane.f32.xlu0 %v40
    %v43 = vpop.xlane.xlu0 %42
    %44 = vadd.xlane.f32.xlu0 %v41
    %v45 = vpop.xlane.xlu0 %44
    %v46 = vmul.f32 %v43, 0.03125
    %v47 = vmul.f32 %v45, 0.03125
    %v48 = vadd.f32 %v46, 1e-05
    %v49 = vadd.f32 %v47, 1e-05
    %v50 = vrsqrt.pop %v48
    %v51 = vrsqrt.pop %v49
    %v52 = vmul.f32 %v38, %v50
    %v53 = vmul.f32 %v39, %v51
    %v54 = vld [vmem:[%s1] sm:$0x1]
    %v56 = vlaneseq
    %v57 = vshrl.u32 %v56, 7
    %v58 = vsub.s32 0, %v57
    %v59 = vrot.slane %v54, %v58
    %v61 = vmul.f32 %v52, %v59
    %v62 = vmul.f32 %v53, %v59
    %v63 = vld [vmem:[%s2] sm:$0x1]
    %v65 = vlaneseq
    %v66 = vshrl.u32 %v65, 7
    %v67 = vsub.s32 0, %v66
    %v68 = vrot.slane %v63, %v67
    %v70 = vadd.f32 %v61, %v68
    %v71 = vadd.f32 %v62, %v68
    %v72 = vpack.c.bf16 %v71, %v70
    %73 = vst [vmem:[#allocation2] sm:$0xff] %v72
  $region25: #{clip_forward.33} parent=0 // pred_fallthru
    _
  %v74 = vld [vmem:[#allocation2] sm:$0xff]
  %v75 = vld [vmem:[%s3] sm:$0xf]
  %v76 = vld [vmem:[%s3 + $0x4] sm:$0xf]
  %v77 = vld [vmem:[%s3 + $0x8] sm:$0xf]
  %v78 = vld [vmem:[%s3 + $0xc] sm:$0xf]
  %v79 = vld [vmem:[%s3 + $0x10] sm:$0xf]
  %v80 = vld [vmem:[%s3 + $0x14] sm:$0xf]
  %v81 = vld [vmem:[%s3 + $0x18] sm:$0xf]
  %v82 = vld [vmem:[%s3 + $0x1c] sm:$0xf]
  %v83 = vld [vmem:[%s3 + $0x20] sm:$0xf]
  %v84 = vld [vmem:[%s3 + $0x24] sm:$0xf]
  %v85 = vld [vmem:[%s3 + $0x28] sm:$0xf]
  %v86 = vld [vmem:[%s3 + $0x2c] sm:$0xf]
  %v87 = vld [vmem:[%s3 + $0x30] sm:$0xf]
  %v88 = vld [vmem:[%s3 + $0x34] sm:$0xf]
  %v89 = vld [vmem:[%s3 + $0x38] sm:$0xf]
  %v90 = vld [vmem:[%s3 + $0x3c] sm:$0xf]
  %v91 = vld [vmem:[%s4] sm:$0x1]
  %v93 = vlaneseq
  %v94 = vshrl.u32 %v93, 7
  %v95 = vsub.s32 0, %v94
  %v96 = vrot.slane %v91, %v95
  %v114 = vunpack.c.l.b16 %v75
  %v115 = vunpack.c.l.b16 %v76
  %v116 = vunpack.c.l.b16 %v77
  %v117 = vunpack.c.l.b16 %v78
  %v118 = vunpack.c.l.b16 %v79
  %v119 = vunpack.c.l.b16 %v80
  %v120 = vunpack.c.l.b16 %v81
  %v121 = vunpack.c.l.b16 %v82
  %v122 = vunpack.c.l.b16 %v83
  %v123 = vunpack.c.l.b16 %v84
  %v124 = vunpack.c.l.b16 %v85
  %v125 = vunpack.c.l.b16 %v86
  %v126 = vunpack.c.l.b16 %v87
  %v127 = vunpack.c.l.b16 %v88
  %v128 = vunpack.c.l.b16 %v89
  %v129 = vunpack.c.l.b16 %v90
  %v130 = vpack.c.b16 %v115, %v114
  %v131 = vpack.c.b16 %v117, %v116
  %v132 = vpack.c.b16 %v119, %v118
  %v133 = vpack.c.b16 %v121, %v120
  %v134 = vpack.c.b16 %v123, %v122
  %v135 = vpack.c.b16 %v125, %v124
  %v136 = vpack.c.b16 %v127, %v126
  %v137 = vpack.c.b16 %v129, %v128
  %146 = vmatprep.subr.bf16.mxu0 0
  %147 = vmatpush1.bf16.msra.mxu0 %v130
  %148 = vmatprep.subr.bf16.mxu0 0
  %149 = vmatpush1.bf16.msra.mxu0 %v131
  %150 = vmatprep.subr.bf16.mxu0 0
  %151 = vmatpush1.bf16.msra.mxu0 %v132
  %152 = vmatprep.subr.bf16.mxu0 0
  %153 = vmatpush1.bf16.msra.mxu0 %v133
  %154 = vmatprep.subr.bf16.mxu0 0
  %155 = vmatpush1.bf16.msra.mxu0 %v134
  %156 = vmatprep.subr.bf16.mxu0 0
  %157 = vmatpush1.bf16.msra.mxu0 %v135
  %158 = vmatprep.subr.bf16.mxu0 0
  %159 = vmatpush1.bf16.msra.mxu0 %v136
  %160 = vmatprep.subr.bf16.mxu0 0
  %161 = vmatpush1.bf16.msra.mxu0 %v137
  %162 = vmatprep.subr.bf16.mxu0 0
  %163 = vmatpush1.bf16.msra.mxu0 0
  %164 = vmatprep.subr.bf16.mxu0 0
  %165 = vmatpush1.bf16.msra.mxu0 0
  %166 = vmatprep.subr.bf16.mxu0 0
  %167 = vmatpush1.bf16.msra.mxu0 0
  %168 = vmatprep.subr.bf16.mxu0 0
  %169 = vmatpush1.bf16.msra.mxu0 0
  %170 = vmatprep.subr.bf16.mxu0 0
  %171 = vmatpush1.bf16.msra.mxu0 0
  %172 = vmatprep.subr.bf16.mxu0 0
  %173 = vmatpush1.bf16.msra.mxu0 0
  %174 = vmatprep.subr.bf16.mxu0 0
  %175 = vmatpush1.bf16.msra.mxu0 0
  %176 = vmatprep.subr.bf16.mxu0 0
  %177 = vmatpush1.bf16.msra.mxu0 0
  %178 = vmatprep.mubr.bf16.mxu0 0
  %179 = vmatmul.mubr.bf16.gmra.mrb[0].mxu0 %v74
  %v180 = vpop.f32.mrb[0].mxu0
  %v181 = vadd.f32 %v96, %v180
  %v182 = vpop.f32.mrb[0].mxu0
  %v183 = vpop.f32.mrb[0].mxu0
  %v184 = vadd.f32 %v96, %v183
  %v185 = vpop.f32.mrb[0].mxu0
  %186 = vdwg.mxu0
  %v187 = vmul.f32 %v181, 1.702
  %v188 = vmul.f32 %v184, 1.702
  %v189 = vxor.u32 %v187, 2147483648
  %v190 = vxor.u32 %v188, 2147483648
  %v191 = vmul.f32 %v189, 1.442695
  %v192 = vpow.pop %v191
  %v193 = vmul.f32 %v190, 1.442695
  %v194 = vpow.pop %v193
  %v195 = vadd.f32 %v192, 1.0
  %v196 = vadd.f32 %v194, 1.0
  %v197 = vrcp.pop %v195
  %v198 = vmul.f32 1.0, %v197
  %v199 = vrcp.pop %v196
  %v200 = vmul.f32 1.0, %v199
  %v201 = vmul.f32 %v181, %v198
  %v202 = vmul.f32 %v184, %v200
  %v203 = vpack.c.bf16 %v202, %v201
  %v205 = vunpack.c.l.b16 %v203
  %v206 = vunpack.c.h.b16 %v203
  %v207 = vpack.c.b16 %v205, %v205
  %v208 = vpack.c.b16 %v206, %v206
  %211 = vst [vmem:[%s5] sm:$0xf] %v207
  %212 = vst [vmem:[%s5 + $0x4] sm:$0xf] %v208
  // Predicated region
  $region26: #{clip_forward.33} parent=0 // pred_check
    _
  $region27: #{clip_forward.33} parent=0 // pred_check_branch
    %214 = sbr.rel (0) target = $region29
  $region28: #{clip_forward.33} parent=0 // pred_region
    _
  $region29: #{clip_forward.33} parent=0 // pred_fallthru
    _
  // Predicated region
  $region30: #{clip_forward.33} parent=0 // pred_check
    _
  $region31: #{clip_forward.33} parent=0 // pred_check_branch
    %216 = sbr.rel (0) target = $region33
  $region32: #{clip_forward.33} parent=0 // pred_region
    _
  $region33: #{clip_forward.33} parent=0 // pred_fallthru
    _

// kernel: clip_forward.41
$region0: #{clip_forward.41}
  #allocation0 [shape = 'u32[]', space=smem, size = 0x4, offset = 0x4, fixed_abs, tag = 'smem constant byte address 0x4 - core index']
  #allocation1 [shape = 'u32[144,128]{1,0:T(1,128)}', space=vmem, size = 0x12000, scoped, tag = 'internal scratch']
  %s0 = inlined_call_operand.vmem [shape: f32[8,128], index: 0, kind: input, shape index: {}]
  %s1 = inlined_call_operand.vmem [shape: bf16[128,128], index: 1, kind: input, shape index: {}]
  %s2 = inlined_call_operand.vmem [shape: f32[8,128], index: 2, kind: output, shape index: {}]
  %s3 = sld [smem:[#allocation0]]
  $region18: #{clip_forward.41} parent=0
    _
  %s5 = ssub.s32 1, %s3
  %s6 = scalar_select 0, %s5, %s3
  // Predicated region
  $region2: #{clip_forward.41} parent=0 // pred_check
    _
  $region3: #{clip_forward.41} parent=0 // pred_check_branch
    %8 = sbr.rel (0) target = $region5
  $region4: #{clip_forward.41} parent=0 // pred_region
    _
  $region5: #{clip_forward.41} parent=0 // pred_fallthru
    _
  // Predicated region
  $region6: #{clip_forward.41} parent=0 // pred_check
    _
  $region7: #{clip_forward.41} parent=0 // pred_check_branch
    %10 = sbr.rel (0) target = $region9
  $region8: #{clip_forward.41} parent=0 // pred_region
    _
  $region9: #{clip_forward.41} parent=0 // pred_fallthru
    _
  %v12 = vld [vmem:[%s0] sm:$0xff]
  %v13 = vpack.c.bf16 %v12, %v12
  %v14 = vld [vmem:[%s1] sm:$0xf]
  %v15 = vld [vmem:[%s1 + $0x4] sm:$0xf]
  %v16 = vld [vmem:[%s1 + $0x8] sm:$0xf]
  %v17 = vld [vmem:[%s1 + $0xc] sm:$0xf]
  %v18 = vld [vmem:[%s1 + $0x10] sm:$0xf]
  %v19 = vld [vmem:[%s1 + $0x14] sm:$0xf]
  %v20 = vld [vmem:[%s1 + $0x18] sm:$0xf]
  %v21 = vld [vmem:[%s1 + $0x1c] sm:$0xf]
  %v22 = vld [vmem:[%s1 + $0x20] sm:$0xf]
  %v23 = vld [vmem:[%s1 + $0x24] sm:$0xf]
  %v24 = vld [vmem:[%s1 + $0x28] sm:$0xf]
  %v25 = vld [vmem:[%s1 + $0x2c] sm:$0xf]
  %v26 = vld [vmem:[%s1 + $0x30] sm:$0xf]
  %v27 = vld [vmem:[%s1 + $0x34] sm:$0xf]
  %v28 = vld [vmem:[%s1 + $0x38] sm:$0xf]
  %v29 = vld [vmem:[%s1 + $0x3c] sm:$0xf]
  %v46 = vunpack.c.l.b16 %v14
  %v47 = vunpack.c.l.b16 %v15
  %v48 = vunpack.c.l.b16 %v16
  %v49 = vunpack.c.l.b16 %v17
  %v50 = vunpack.c.l.b16 %v18
  %v51 = vunpack.c.l.b16 %v19
  %v52 = vunpack.c.l.b16 %v20
  %v53 = vunpack.c.l.b16 %v21
  %v54 = vunpack.c.l.b16 %v22
  %v55 = vunpack.c.l.b16 %v23
  %v56 = vunpack.c.l.b16 %v24
  %v57 = vunpack.c.l.b16 %v25
  %v58 = vunpack.c.l.b16 %v26
  %v59 = vunpack.c.l.b16 %v27
  %v60 = vunpack.c.l.b16 %v28
  %v61 = vunpack.c.l.b16 %v29
  %v62 = vpack.c.b16 %v47, %v46
  %v63 = vpack.c.b16 %v49, %v48
  %v64 = vpack.c.b16 %v51, %v50
  %v65 = vpack.c.b16 %v53, %v52
  %v66 = vpack.c.b16 %v55, %v54
  %v67 = vpack.c.b16 %v57, %v56
  %v68 = vpack.c.b16 %v59, %v58
  %v69 = vpack.c.b16 %v61, %v60
  %78 = vmatprep.subr.bf16.mxu0 0
  %79 = vmatpush1.bf16.msra.mxu0 %v62
  %80 = vmatprep.subr.bf16.mxu0 0
  %81 = vmatpush1.bf16.msra.mxu0 %v63
  %82 = vmatprep.subr.bf16.mxu0 0
  %83 = vmatpush1.bf16.msra.mxu0 %v64
  %84 = vmatprep.subr.bf16.mxu0 0
  %85 = vmatpush1.bf16.msra.mxu0 %v65
  %86 = vmatprep.subr.bf16.mxu0 0
  %87 = vmatpush1.bf16.msra.mxu0 %v66
  %88 = vmatprep.subr.bf16.mxu0 0
  %89 = vmatpush1.bf16.msra.mxu0 %v67
  %90 = vmatprep.subr.bf16.mxu0 0
  %91 = vmatpush1.bf16.msra.mxu0 %v68
  %92 = vmatprep.subr.bf16.mxu0 0
  %93 = vmatpush1.bf16.msra.mxu0 %v69
  %94 = vmatprep.subr.bf16.mxu0 0
  %95 = vmatpush1.bf16.msra.mxu0 0
  %96 = vmatprep.subr.bf16.mxu0 0
  %97 = vmatpush1.bf16.msra.mxu0 0
  %98 = vmatprep.subr.bf16.mxu0 0
  %99 = vmatpush1.bf16.msra.mxu0 0
  %100 = vmatprep.subr.bf16.mxu0 0
  %101 = vmatpush1.bf16.msra.mxu0 0
  %102 = vmatprep.subr.bf16.mxu0 0
  %103 = vmatpush1.bf16.msra.mxu0 0
  %104 = vmatprep.subr.bf16.mxu0 0
  %105 = vmatpush1.bf16.msra.mxu0 0
  %106 = vmatprep.subr.bf16.mxu0 0
  %107 = vmatpush1.bf16.msra.mxu0 0
  %108 = vmatprep.subr.bf16.mxu0 0
  %109 = vmatpush1.bf16.msra.mxu0 0
  %110 = vmatprep.mubr.bf16.mxu0 0
  %111 = vmatmul.mubr.bf16.gmra.mrb[0].mxu0 %v13
  %v112 = vpop.f32.mrb[0].mxu0
  %v113 = vadd.f32 0.0, %v112
  %v114 = vpop.f32.mrb[0].mxu0
  %v115 = vpop.f32.mrb[0].mxu0
  %v116 = vpop.f32.mrb[0].mxu0
  %117 = vdwg.mxu0
  %118 = vst [vmem:[%s2] sm:$0xff] %v113
  // Predicated region
  $region10: #{clip_forward.41} parent=0 // pred_check
    _
  $region11: #{clip_forward.41} parent=0 // pred_check_branch
    %120 = sbr.rel (0) target = $region13
  $region12: #{clip_forward.41} parent=0 // pred_region
    _
  $region13: #{clip_forward.41} parent=0 // pred_fallthru
    _
  // Predicated region
  $region14: #{clip_forward.41} parent=0 // pred_check
    _
  $region15: #{clip_forward.41} parent=0 // pred_check_branch
    %122 = sbr.rel (0) target = $region17
  $region16: #{clip_forward.41} parent=0 // pred_region
    _
  $region17: #{clip_forward.41} parent=0 // pred_fallthru
    _

// kernel: clip_forward.42
$region0: #{clip_forward.42}
  #allocation0 [shape = 'u32[]', space=smem, size = 0x4, offset = 0x4, fixed_abs, tag = 'smem constant byte address 0x4 - core index']
  #allocation1 [shape = 'u32[144,128]{1,0:T(1,128)}', space=vmem, size = 0x12000, scoped, tag = 'internal scratch']
  %s0 = inlined_call_operand.vmem [shape: f32[8,128], index: 0, kind: input, shape index: {}]
  %s1 = inlined_call_operand.vmem [shape: f32[8,128], index: 1, kind: output, shape index: {}]
  %s2 = sld [smem:[#allocation0]]
  $region14: #{clip_forward.42} parent=0
    _
  %s4 = ssub.s32 1, %s2
  %s5 = scalar_select 0, %s4, %s2
  // Predicated region
  $region2: #{clip_forward.42} parent=0 // pred_check
    _
  $region3: #{clip_forward.42} parent=0 // pred_check_branch
    %7 = sbr.rel (0) target = $region5
  $region4: #{clip_forward.42} parent=0 // pred_region
    _
  $region5: #{clip_forward.42} parent=0 // pred_fallthru
    _
  %v8 = vld [vmem:[%s0] sm:$0xff]
  %v9 = vmul.f32 %v8, %v8
  %10 = vadd.xlane.f32.xlu0 %v9
  %v11 = vpop.xlane.xlu0 %10
  %v12 = vadd.f32 %v11, 1e-12
  %v13 = vrsqrt.pop %v12
  %v14 = vmul.f32 %v8, %v13
  %15 = vst [vmem:[%s1] sm:$0xff] %v14
  // Predicated region
  $region6: #{clip_forward.42} parent=0 // pred_check
    _
  $region7: #{clip_forward.42} parent=0 // pred_check_branch
    %17 = sbr.rel (0) target = $region9
  $region8: #{clip_forward.42} parent=0 // pred_region
    _
  $region9: #{clip_forward.42} parent=0 // pred_fallthru
    _
  // Predicated region
  $region10: #{clip_forward.42} parent=0 // pred_check
    _
  $region11: #{clip_forward.42} parent=0 // pred_check_branch
    %19 = sbr.rel (0) target = $region13
  $region12: #{clip_forward.42} parent=0 // pred_region
    _
  $region13: #{clip_forward.42} parent=0 // pred_fallthru
    _

// kernel: clip_forward.44
$region0: #{clip_forward.44}
  #allocation0 [shape = 'u32[]', space=smem, size = 0x4, offset = 0x4, fixed_abs, tag = 'smem constant byte address 0x4 - core index']
  #allocation1 [shape = 'u32[144,128]{1,0:T(1,128)}', space=vmem, size = 0x12000, scoped, tag = 'internal scratch']
  %s0 = inlined_call_operand.vmem [shape: bf16[2,8,96], index: 0, kind: input, shape index: {}]
  %s1 = inlined_call_operand.vmem [shape: f32[2,1,8], index: 1, kind: input, shape index: {}]
  %s2 = inlined_call_operand.vmem [shape: bf16[2,8,32], index: 2, kind: output, shape index: {}]
  %s3 = sld [smem:[#allocation0]]
  $region41: #{clip_forward.44} parent=0
    _
  %s5 = ssub.s32 1, %s3
  %s6 = scalar_select 0, %s5, %s3
  loop: start=0, step=1, limit=4
  $region2: #{clip_forward.44} parent=0 // loop_pre_header
    _
  $region3: #{clip_forward.44} parent=0 // loop_header
    %s8 = sphi 0, %s12
    %p9 = scmp.ge.s32.totalorder %s8, 4
    %s18 = sphi 0, %s20
    %s21 = sphi 0, %s18
    %s22 = sphi 0, %s21
    %s38 = sphi 0, %s22
    %s44 = sphi 0, %s46
    %s47 = sphi 0, %s44
    %s48 = sphi 0, %s47
    %s64 = sphi 0, %s48
    %s70 = sphi 0, %s72
    %s73 = sphi 0, %s70
    %s74 = sphi 0, %s73
    %s90 = sphi 0, %s74
  $region4: #{clip_forward.44} parent=0 // loop_header_branch
    %11 = sbr.rel (%p9) target = $region8
  $region5: #{clip_forward.44} parent=0 // loop_body
    %s13 = ssub.s32 %s8, 1
    %s14 = ssub.s32 %s8, 2
    %s15 = sadd.s32 %s8, 1
    %s16 = ssub.s32 %s8, %s15
    %p17 = scmp.eq.s32.totalorder %s16, 0
    %s19 = sadd.s32 %s18, 1
    %s20 = scalar_select %p17, %s18, %s19
    %p23 = pneg %p17
    %p24 = scmp.eq.s32.totalorder %s8, 1
    %p25 = por %p23, %p24
    %p26 = scmp.ne.s32.totalorder %s18, %s21
    %p27 = scmp.eq.s32.totalorder %s8, 0
    %p28 = por %p26, %p27
    %p29 = scmp.ne.s32.totalorder %s18, %s21
    %p30 = scmp.eq.s32.totalorder %s13, 1
    %p31 = por %p29, %p30
    %p32 = scmp.ne.s32.totalorder %s21, %s22
    %p33 = scmp.eq.s32.totalorder %s13, 0
    %p34 = por %p32, %p33
    %p35 = scmp.ne.s32.totalorder %s21, %s22
    %p36 = scmp.eq.s32.totalorder %s14, 1
    %p37 = por %p35, %p36
    %p39 = scmp.ne.s32.totalorder %s22, %s38
    %p40 = scmp.eq.s32.totalorder %s14, 0
    %p41 = por %p39, %p40
    %s42 = ssub.s32 %s8, %s15
    %p43 = scmp.eq.s32.totalorder %s42, 0
    %s45 = sadd.s32 %s44, 1
    %s46 = scalar_select %p43, %s44, %s45
    %p49 = pneg %p43
    %p50 = scmp.eq.s32.totalorder %s8, 1
    %p51 = por %p49, %p50
    %p52 = scmp.ne.s32.totalorder %s44, %s47
    %p53 = scmp.eq.s32.totalorder %s8, 0
    %p54 = por %p52, %p53
    %p55 = scmp.ne.s32.totalorder %s44, %s47
    %p56 = scmp.eq.s32.totalorder %s13, 1
    %p57 = por %p55, %p56
    %p58 = scmp.ne.s32.totalorder %s47, %s48
    %p59 = scmp.eq.s32.totalorder %s13, 0
    %p60 = por %p58, %p59
    %p61 = scmp.ne.s32.totalorder %s47, %s48
    %p62 = scmp.eq.s32.totalorder %s14, 1
    %p63 = por %p61, %p62
    %p65 = scmp.ne.s32.totalorder %s48, %s64
    %p66 = scmp.eq.s32.totalorder %s14, 0
    %p67 = por %p65, %p66
    %s68 = ssub.s32 %s8, %s15
    %p69 = scmp.eq.s32.totalorder %s68, 0
    %s71 = sadd.s32 %s70, 1
    %s72 = scalar_select %p69, %s70, %s71
    %p75 = pneg %p69
    %p76 = scmp.eq.s32.totalorder %s8, 1
    %p77 = por %p75, %p76
    %p78 = scmp.ne.s32.totalorder %s70, %s73
    %p79 = scmp.eq.s32.totalorder %s8, 0
    %p80 = por %p78, %p79
    %p81 = scmp.ne.s32.totalorder %s70, %s73
    %p82 = scmp.eq.s32.totalorder %s13, 1
    %p83 = por %p81, %p82
    %p84 = scmp.ne.s32.totalorder %s73, %s74
    %p85 = scmp.eq.s32.totalorder %s13, 0
    %p86 = por %p84, %p85
    %p87 = scmp.ne.s32.totalorder %s73, %s74
    %p88 = scmp.eq.s32.totalorder %s14, 1
    %p89 = por %p87, %p88
    %p91 = scmp.ne.s32.totalorder %s74, %s90
    %p92 = scmp.eq.s32.totalorder %s14, 0
    %p93 = por %p91, %p92
    %p94 = scmp.le.s32.totalorder 1, %s8
    %p95 = scmp.lt.s32.totalorder %s8, 3
    %p96 = pnand %p94, %p95
    %p97 = pneg %p96
    // Predicated region
    $region9: #{clip_forward.44} parent=5 // pred_check
      _
    $region10: #{clip_forward.44} parent=5 // pred_check_branch
      %99 = sbr.rel (%p96) target = $region12
    $region11: #{clip_forward.44} parent=5 // pred_region
      %s100 = ssub.s32 %s8, 1
    $region12: #{clip_forward.44} parent=5 // pred_fallthru
      _
    %p101 = scmp.lt.s32.totalorder %s8, 2
    // Predicated region
    $region13: #{clip_forward.44} parent=5 // pred_check
      %p102 = pneg %p101
    $region14: #{clip_forward.44} parent=5 // pred_check_branch
      %104 = sbr.rel (%p102) target = $region16
    $region15: #{clip_forward.44} parent=5 // pred_region
      // Predicated region
      $region17: #{clip_forward.44} parent=15 // pred_check
        %p105 = pneg %p28
      $region18: #{clip_forward.44} parent=15 // pred_check_branch
        %107 = sbr.rel (%p105) target = $region20
      $region19: #{clip_forward.44} parent=15 // pred_region
        %p108 = scmp.lt.s32.totalorder %s8, 1
        %s109 = scalar_select %p108, %s8, 1
        %s110 = smul.addr %s109, 4
        %s111 = scalar_lea.vmem %s0, %s110
      $region20: #{clip_forward.44} parent=15 // pred_fallthru
        _
      // Predicated region
      $region21: #{clip_forward.44} parent=15 // pred_check
        %p112 = pneg %p54
      $region22: #{clip_forward.44} parent=15 // pred_check_branch
        %114 = sbr.rel (%p112) target = $region24
      $region23: #{clip_forward.44} parent=15 // pred_region
        %p115 = scmp.lt.s32.totalorder %s8, 1
        %s116 = scalar_select %p115, %s8, 1
        %s117 = scalar_lea.vmem %s1, %s116
      $region24: #{clip_forward.44} parent=15 // pred_fallthru
        _
    $region16: #{clip_forward.44} parent=5 // pred_fallthru
      _
    %p118 = scmp.le.s32.totalorder 1, %s8
    %p119 = scmp.lt.s32.totalorder %s8, 3
    %p120 = pnand %p118, %p119
    %p121 = pneg %p120
    // Predicated region
    $region25: #{clip_forward.44} parent=5 // pred_check
      _
    $region26: #{clip_forward.44} parent=5 // pred_check_branch
      %123 = sbr.rel (%p120) target = $region28
    $region27: #{clip_forward.44} parent=5 // pred_region
      %s124 = ssub.s32 %s8, 1
      %p125 = scmp.lt.s32.totalorder %s13, 1
      %s126 = scalar_select %p125, %s13, 1
      %s127 = smul.addr %s126, 4
      %s128 = scalar_lea.vmem %s0, %s127
      %p129 = pneg %p34
      %p130 = pneg %p31
      %p131 = scmp.lt.s32.totalorder %s13, 1
      %s132 = scalar_select %p131, %s13, 1
      %s133 = scalar_lea.vmem %s1, %s132
      %p134 = pneg %p60
      %p135 = pneg %p57
      %p136 = pneg %p86
      %p137 = pneg %p83
      %p138 = scmp.lt.s32.totalorder %s13, 1
      %s139 = scalar_select %p138, %s13, 1
      %s140 = smul.addr %s139, 4
      %s141 = scalar_lea.vmem %s2, %s140
      %p142 = scmp.lt.s32.totalorder %s13, 1
      %s143 = scalar_select %p142, %s13, 1
      %s144 = smul.addr %s143, 4
      %s145 = scalar_lea.vmem %s0, %s144
      %p146 = scmp.lt.s32.totalorder %s13, 1
      %s147 = scalar_select %p146, %s13, 1
      %s148 = scalar_lea.vmem %s1, %s147
      %p149 = scmp.lt.s32.totalorder %s13, 1
      %s150 = scalar_select %p149, %s13, 1
      %s151 = smul.addr %s150, 4
      %s152 = scalar_lea.vmem %s2, %s151
      %v155 = vld [vmem:[%s148] sm:$0x1]
      %v156 = vld [vmem:[%s145] sm:$0xf]
      %v157 = vlaneseq
      %v158 = vshrl.u32 %v157, 7
      %v159 = vlaneseq
      %v160 = vand.u32 %v159, 127
      %vm161 = vcmp.gt.s32.totalorder %v160, %v158
      %v162 = vsel %vm161, -1e+09, 0.0
      %v163 = vsub.f32 1.0, %v155
      %v164 = vmul.f32 %v163, -1e+09
      %v166 = vlaneseq
      %v167 = vshrl.u32 %v166, 7
      %v168 = vsub.s32 0, %v167
      %v169 = vrot.slane %v164, %v168
      %v171 = vadd.f32 %v162, %v169
      %v172 = vmul.bf16 %v156, 1052065461
      %v174 = vunpack.c.l.b16 %v156
      %v175 = vpack.c.b16 %v174, %v174
      %176 = vrot.lane.b32.xlu0 %v175, 96
      %v177 = vpop.permute.xlu0 %176
      %vm178 = vcmask 64512
      %v180 = vsel %vm178, %v172, 0
      %v183 = vsel %vm178, %v177, 0
      %185 = vmatprep.subr.bf16.mxu0 0
      %186 = vmatpush1.bf16.xpose.msra.mxu0 %v183
      %187 = vmatprep.subr.bf16.mxu0 0
      %188 = vmatpush1.bf16.xpose.msra.mxu0 0
      %189 = vmatprep.subr.bf16.mxu0 0
      %190 = vmatpush1.bf16.xpose.msra.mxu0 0
      %191 = vmatprep.subr.bf16.mxu0 0
      %192 = vmatpush1.bf16.xpose.msra.mxu0 0
      %193 = vmatprep.subr.bf16.mxu0 0
      %194 = vmatpush1.bf16.xpose.msra.mxu0 0
      %195 = vmatprep.subr.bf16.mxu0 0
      %196 = vmatpush1.bf16.xpose.msra.mxu0 0
      %197 = vmatprep.subr.bf16.mxu0 0
      %198 = vmatpush1.bf16.xpose.msra.mxu0 0
      %199 = vmatprep.subr.bf16.mxu0 0
      %200 = vmatpush1.bf16.xpose.msra.mxu0 0
      %201 = vmatprep.subr.bf16.mxu0 0
      %202 = vmatpush1.bf16.xpose.msra.mxu0 0
      %203 = vmatprep.subr.bf16.mxu0 0
      %204 = vmatpush1.bf16.xpose.msra.mxu0 0
      %205 = vmatprep.subr.bf16.mxu0 0
      %206 = vmatpush1.bf16.xpose.msra.mxu0 0
      %207 = vmatprep.subr.bf16.mxu0 0
      %208 = vmatpush1.bf16.xpose.msra.mxu0 0
      %209 = vmatprep.subr.bf16.mxu0 0
      %210 = vmatpush1.bf16.xpose.msra.mxu0 0
      %211 = vmatprep.subr.bf16.mxu0 0
      %212 = vmatpush1.bf16.xpose.msra.mxu0 0
      %213 = vmatprep.subr.bf16.mxu0 0
      %214 = vmatpush1.bf16.xpose.msra.mxu0 0
      %215 = vmatprep.subr.bf16.mxu0 0
      %216 = vmatpush1.bf16.xpose.msra.mxu0 0
      %217 = vmatprep.mubr.bf16.mxu0 0
      %218 = vmatmul.mubr.bf16.gmra.mrb[0].mxu0 %v180
      %v219 = vpop.f32.mrb[0].mxu0
      %v220 = vadd.f32 %v171, %v219
      %v221 = vpop.f32.mrb[0].mxu0
      %v222 = vpop.f32.mrb[0].mxu0
      %v223 = vpop.f32.mrb[0].mxu0
      %224 = vdwg.mxu0
      %v225 = vsel %vm178, %v220, -inf
      %226 = vmax.xlane.f32.xlu0 %v225
      %v227 = vpop.xlane.xlu0 %226
      %v228 = vsub.f32 %v220, %v227
      %v229 = vmul.f32 %v228, 1.442695
      %v230 = vpow.pop %v229
      %v231 = vsel %vm178, %v230, 0.0
      %232 = vadd.xlane.f32.xlu0 %v231
      %v233 = vpop.xlane.xlu0 %232
      %v234 = vrcp.pop %v233
      %v235 = vmul.f32 %v230, %v234
      %v236 = vpack.c.bf16 %v235, %v235
      %237 = vrot.lane.b32.xlu0 %v175, 64
      %v238 = vpop.permute.xlu0 %237
      %v240 = vsel %vm178, %v236, 0
      %vm242 = vcmask 1043456
      %v244 = vsel %vm242, %v238, 0
      %246 = vmatprep.subr.bf16.mxu0 0
      %247 = vmatpush1.bf16.msra.mxu0 %v244
      %248 = vmatprep.subr.bf16.mxu0 0
      %249 = vmatpush1.bf16.msra.mxu0 0
      %250 = vmatprep.subr.bf16.mxu0 0
      %251 = vmatpush1.bf16.msra.mxu0 0
      %252 = vmatprep.subr.bf16.mxu0 0
      %253 = vmatpush1.bf16.msra.mxu0 0
      %254 = vmatprep.subr.bf16.mxu0 0
      %255 = vmatpush1.bf16.msra.mxu0 0
      %256 = vmatprep.subr.bf16.mxu0 0
      %257 = vmatpush1.bf16.msra.mxu0 0
      %258 = vmatprep.subr.bf16.mxu0 0
      %259 = vmatpush1.bf16.msra.mxu0 0
      %260 = vmatprep.subr.bf16.mxu0 0
      %261 = vmatpush1.bf16.msra.mxu0 0
      %262 = vmatprep.subr.bf16.mxu0 0
      %263 = vmatpush1.bf16.msra.mxu0 0
      %264 = vmatprep.subr.bf16.mxu0 0
      %265 = vmatpush1.bf16.msra.mxu0 0
      %266 = vmatprep.subr.bf16.mxu0 0
      %267 = vmatpush1.bf16.msra.mxu0 0
      %268 = vmatprep.subr.bf16.mxu0 0
      %269 = vmatpush1.bf16.msra.mxu0 0
      %270 = vmatprep.subr.bf16.mxu0 0
      %271 = vmatpush1.bf16.msra.mxu0 0
      %272 = vmatprep.subr.bf16.mxu0 0
      %273 = vmatpush1.bf16.msra.mxu0 0
      %274 = vmatprep.subr.bf16.mxu0 0
      %275 = vmatpush1.bf16.msra.mxu0 0
      %276 = vmatprep.subr.bf16.mxu0 0
      %277 = vmatpush1.bf16.msra.mxu0 0
      %278 = vmatprep.mubr.bf16.mxu0 0
      %279 = vmatmul.mubr.bf16.gmra.mrb[0].mxu0 %v240
      %v280 = vpop.f32.mrb[0].mxu0
      %v281 = vadd.f32 0.0, %v280
      %v282 = vpop.f32.mrb[0].mxu0
      %v283 = vpop.f32.mrb[0].mxu0
      %v284 = vpop.f32.mrb[0].mxu0
      %285 = vdwg.mxu0
      %v286 = vpack.c.bf16 %v281, %v281
      %v288 = vunpack.c.l.b16 %v172
      %v289 = vpack.c.b16 %v288, %v288
      %290 = vrot.lane.b32.xlu0 %v289, 120
      %v291 = vpop.permute.xlu0 %290
      %292 = vrot.lane.b32.xlu0 %v175, 88
      %v293 = vpop.permute.xlu0 %292
      %v295 = vsel %vm178, %v291, 0
      %v298 = vsel %vm178, %v293, 0
      %300 = vmatprep.subr.bf16.mxu0 0
      %301 = vmatpush1.bf16.xpose.msra.mxu0 %v298
      %302 = vmatprep.subr.bf16.mxu0 0
      %303 = vmatpush1.bf16.xpose.msra.mxu0 0
      %304 = vmatprep.subr.bf16.mxu0 0
      %305 = vmatpush1.bf16.xpose.msra.mxu0 0
      %306 = vmatprep.subr.bf16.mxu0 0
      %307 = vmatpush1.bf16.xpose.msra.mxu0 0
      %308 = vmatprep.subr.bf16.mxu0 0
      %309 = vmatpush1.bf16.xpose.msra.mxu0 0
      %310 = vmatprep.subr.bf16.mxu0 0
      %311 = vmatpush1.bf16.xpose.msra.mxu0 0
      %312 = vmatprep.subr.bf16.mxu0 0
      %313 = vmatpush1.bf16.xpose.msra.mxu0 0
      %314 = vmatprep.subr.bf16.mxu0 0
      %315 = vmatpush1.bf16.xpose.msra.mxu0 0
      %316 = vmatprep.subr.bf16.mxu0 0
      %317 = vmatpush1.bf16.xpose.msra.mxu0 0
      %318 = vmatprep.subr.bf16.mxu0 0
      %319 = vmatpush1.bf16.xpose.msra.mxu0 0
      %320 = vmatprep.subr.bf16.mxu0 0
      %321 = vmatpush1.bf16.xpose.msra.mxu0 0
      %322 = vmatprep.subr.bf16.mxu0 0
      %323 = vmatpush1.bf16.xpose.msra.mxu0 0
      %324 = vmatprep.subr.bf16.mxu0 0
      %325 = vmatpush1.bf16.xpose.msra.mxu0 0
      %326 = vmatprep.subr.bf16.mxu0 0
      %327 = vmatpush1.bf16.xpose.msra.mxu0 0
      %328 = vmatprep.subr.bf16.mxu0 0
      %329 = vmatpush1.bf16.xpose.msra.mxu0 0
      %330 = vmatprep.subr.bf16.mxu0 0
      %331 = vmatpush1.bf16.xpose.msra.mxu0 0
      %332 = vmatprep.mubr.bf16.mxu0 0
      %333 = vmatmul.mubr.bf16.gmra.mrb[0].mxu0 %v295
      %v334 = vpop.f32.mrb[0].mxu0
      %v335 = vadd.f32 %v171, %v334
      %v336 = vpop.f32.mrb[0].mxu0
      %v337 = vpop.f32.mrb[0].mxu0
      %v338 = vpop.f32.mrb[0].mxu0
      %339 = vdwg.mxu0
      %v340 = vsel %vm178, %v335, -inf
      %341 = vmax.xlane.f32.xlu0 %v340
      %v342 = vpop.xlane.xlu0 %341
      %v343 = vsub.f32 %v335, %v342
      %v344 = vmul.f32 %v343, 1.442695
      %v345 = vpow.pop %v344
      %v346 = vsel %vm178, %v345, 0.0
      %347 = vadd.xlane.f32.xlu0 %v346
      %v348 = vpop.xlane.xlu0 %347
      %v349 = vrcp.pop %v348
      %v350 = vmul.f32 %v345, %v349
      %v351 = vpack.c.bf16 %v350, %v350
      %352 = vrot.lane.b32.xlu0 %v175, 56
      %v353 = vpop.permute.xlu0 %352
      %v355 = vsel %vm178, %v351, 0
      %v358 = vsel %vm242, %v353, 0
      %360 = vmatprep.subr.bf16.mxu0 0
      %361 = vmatpush1.bf16.msra.mxu0 %v358
      %362 = vmatprep.subr.bf16.mxu0 0
      %363 = vmatpush1.bf16.msra.mxu0 0
      %364 = vmatprep.subr.bf16.mxu0 0
      %365 = vmatpush1.bf16.msra.mxu0 0
      %366 = vmatprep.subr.bf16.mxu0 0
      %367 = vmatpush1.bf16.msra.mxu0 0
      %368 = vmatprep.subr.bf16.mxu0 0
      %369 = vmatpush1.bf16.msra.mxu0 0
      %370 = vmatprep.subr.bf16.mxu0 0
      %371 = vmatpush1.bf16.msra.mxu0 0
      %372 = vmatprep.subr.bf16.mxu0 0
      %373 = vmatpush1.bf16.msra.mxu0 0
      %374 = vmatprep.subr.bf16.mxu0 0
      %375 = vmatpush1.bf16.msra.mxu0 0
      %376 = vmatprep.subr.bf16.mxu0 0
      %377 = vmatpush1.bf16.msra.mxu0 0
      %378 = vmatprep.subr.bf16.mxu0 0
      %379 = vmatpush1.bf16.msra.mxu0 0
      %380 = vmatprep.subr.bf16.mxu0 0
      %381 = vmatpush1.bf16.msra.mxu0 0
      %382 = vmatprep.subr.bf16.mxu0 0
      %383 = vmatpush1.bf16.msra.mxu0 0
      %384 = vmatprep.subr.bf16.mxu0 0
      %385 = vmatpush1.bf16.msra.mxu0 0
      %386 = vmatprep.subr.bf16.mxu0 0
      %387 = vmatpush1.bf16.msra.mxu0 0
      %388 = vmatprep.subr.bf16.mxu0 0
      %389 = vmatpush1.bf16.msra.mxu0 0
      %390 = vmatprep.subr.bf16.mxu0 0
      %391 = vmatpush1.bf16.msra.mxu0 0
      %392 = vmatprep.mubr.bf16.mxu0 0
      %393 = vmatmul.mubr.bf16.gmra.mrb[0].mxu0 %v355
      %v394 = vpop.f32.mrb[0].mxu0
      %v395 = vadd.f32 0.0, %v394
      %v396 = vpop.f32.mrb[0].mxu0
      %v397 = vpop.f32.mrb[0].mxu0
      %v398 = vpop.f32.mrb[0].mxu0
      %399 = vdwg.mxu0
      %v400 = vpack.c.bf16 %v395, %v395
      %401 = vrot.lane.b32.xlu0 %v289, 112
      %v402 = vpop.permute.xlu0 %401
      %403 = vrot.lane.b32.xlu0 %v175, 80
      %v404 = vpop.permute.xlu0 %403
      %v406 = vsel %vm178, %v402, 0
      %v409 = vsel %vm178, %v404, 0
      %411 = vmatprep.subr.bf16.mxu0 0
      %412 = vmatpush1.bf16.xpose.msra.mxu0 %v409
      %413 = vmatprep.subr.bf16.mxu0 0
      %414 = vmatpush1.bf16.xpose.msra.mxu0 0
      %415 = vmatprep.subr.bf16.mxu0 0
      %416 = vmatpush1.bf16.xpose.msra.mxu0 0
      %417 = vmatprep.subr.bf16.mxu0 0
      %418 = vmatpush1.bf16.xpose.msra.mxu0 0
      %419 = vmatprep.subr.bf16.mxu0 0
      %420 = vmatpush1.bf16.xpose.msra.mxu0 0
      %421 = vmatprep.subr.bf16.mxu0 0
      %422 = vmatpush1.bf16.xpose.msra.mxu0 0
      %423 = vmatprep.subr.bf16.mxu0 0
      %424 = vmatpush1.bf16.xpose.msra.mxu0 0
      %425 = vmatprep.subr.bf16.mxu0 0
      %426 = vmatpush1.bf16.xpose.msra.mxu0 0
      %427 = vmatprep.subr.bf16.mxu0 0
      %428 = vmatpush1.bf16.xpose.msra.mxu0 0
      %429 = vmatprep.subr.bf16.mxu0 0
      %430 = vmatpush1.bf16.xpose.msra.mxu0 0
      %431 = vmatprep.subr.bf16.mxu0 0
      %432 = vmatpush1.bf16.xpose.msra.mxu0 0
      %433 = vmatprep.subr.bf16.mxu0 0
      %434 = vmatpush1.bf16.xpose.msra.mxu0 0
      %435 = vmatprep.subr.bf16.mxu0 0
      %436 = vmatpush1.bf16.xpose.msra.mxu0 0
      %437 = vmatprep.subr.bf16.mxu0 0
      %438 = vmatpush1.bf16.xpose.msra.mxu0 0
      %439 = vmatprep.subr.bf16.mxu0 0
      %440 = vmatpush1.bf16.xpose.msra.mxu0 0
      %441 = vmatprep.subr.bf16.mxu0 0
      %442 = vmatpush1.bf16.xpose.msra.mxu0 0
      %443 = vmatprep.mubr.bf16.mxu0 0
      %444 = vmatmul.mubr.bf16.gmra.mrb[0].mxu0 %v406
      %v445 = vpop.f32.mrb[0].mxu0
      %v446 = vadd.f32 %v171, %v445
      %v447 = vpop.f32.mrb[0].mxu0
      %v448 = vpop.f32.mrb[0].mxu0
      %v449 = vpop.f32.mrb[0].mxu0
      %450 = vdwg.mxu0
      %v451 = vsel %vm178, %v446, -inf
      %452 = vmax.xlane.f32.xlu0 %v451
      %v453 = vpop.xlane.xlu0 %452
      %v454 = vsub.f32 %v446, %v453
      %v455 = vmul.f32 %v454, 1.442695
      %v456 = vpow.pop %v455
      %v457 = vsel %vm178, %v456, 0.0
      %458 = vadd.xlane.f32.xlu0 %v457
      %v459 = vpop.xlane.xlu0 %458
      %v460 = vrcp.pop %v459
      %v461 = vmul.f32 %v456, %v460
      %v462 = vpack.c.bf16 %v461, %v461
      %463 = vrot.lane.b32.xlu0 %v175, 48
      %v464 = vpop.permute.xlu0 %463
      %v466 = vsel %vm178, %v462, 0
      %v469 = vsel %vm242, %v464, 0
      %471 = vmatprep.subr.bf16.mxu0 0
      %472 = vmatpush1.bf16.msra.mxu0 %v469
      %473 = vmatprep.subr.bf16.mxu0 0
      %474 = vmatpush1.bf16.msra.mxu0 0
      %475 = vmatprep.subr.bf16.mxu0 0
      %476 = vmatpush1.bf16.msra.mxu0 0
      %477 = vmatprep.subr.bf16.mxu0 0
      %478 = vmatpush1.bf16.msra.mxu0 0
      %479 = vmatprep.subr.bf16.mxu0 0
      %480 = vmatpush1.bf16.msra.mxu0 0
      %481 = vmatprep.subr.bf16.mxu0 0
      %482 = vmatpush1.bf16.msra.mxu0 0
      %483 = vmatprep.subr.bf16.mxu0 0
      %484 = vmatpush1.bf16.msra.mxu0 0
      %485 = vmatprep.subr.bf16.mxu0 0
      %486 = vmatpush1.bf16.msra.mxu0 0
      %487 = vmatprep.subr.bf16.mxu0 0
      %488 = vmatpush1.bf16.msra.mxu0 0
      %489 = vmatprep.subr.bf16.mxu0 0
      %490 = vmatpush1.bf16.msra.mxu0 0
      %491 = vmatprep.subr.bf16.mxu0 0
      %492 = vmatpush1.bf16.msra.mxu0 0
      %493 = vmatprep.subr.bf16.mxu0 0
      %494 = vmatpush1.bf16.msra.mxu0 0
      %495 = vmatprep.subr.bf16.mxu0 0
      %496 = vmatpush1.bf16.msra.mxu0 0
      %497 = vmatprep.subr.bf16.mxu0 0
      %498 = vmatpush1.bf16.msra.mxu0 0
      %499 = vmatprep.subr.bf16.mxu0 0
      %500 = vmatpush1.bf16.msra.mxu0 0
      %501 = vmatprep.subr.bf16.mxu0 0
      %502 = vmatpush1.bf16.msra.mxu0 0
      %503 = vmatprep.mubr.bf16.mxu0 0
      %504 = vmatmul.mubr.bf16.gmra.mrb[0].mxu0 %v466
      %v505 = vpop.f32.mrb[0].mxu0
      %v506 = vadd.f32 0.0, %v505
      %v507 = vpop.f32.mrb[0].mxu0
      %v508 = vpop.f32.mrb[0].mxu0
      %v509 = vpop.f32.mrb[0].mxu0
      %510 = vdwg.mxu0
      %v511 = vpack.c.bf16 %v506, %v506
      %512 = vrot.lane.b32.xlu0 %v289, 104
      %v513 = vpop.permute.xlu0 %512
      %514 = vrot.lane.b32.xlu0 %v175, 72
      %v515 = vpop.permute.xlu0 %514
      %v517 = vsel %vm178, %v513, 0
      %v520 = vsel %vm178, %v515, 0
      %522 = vmatprep.subr.bf16.mxu0 0
      %523 = vmatpush1.bf16.xpose.msra.mxu0 %v520
      %524 = vmatprep.subr.bf16.mxu0 0
      %525 = vmatpush1.bf16.xpose.msra.mxu0 0
      %526 = vmatprep.subr.bf16.mxu0 0
      %527 = vmatpush1.bf16.xpose.msra.mxu0 0
      %528 = vmatprep.subr.bf16.mxu0 0
      %529 = vmatpush1.bf16.xpose.msra.mxu0 0
      %530 = vmatprep.subr.bf16.mxu0 0
      %531 = vmatpush1.bf16.xpose.msra.mxu0 0
      %532 = vmatprep.subr.bf16.mxu0 0
      %533 = vmatpush1.bf16.xpose.msra.mxu0 0
      %534 = vmatprep.subr.bf16.mxu0 0
      %535 = vmatpush1.bf16.xpose.msra.mxu0 0
      %536 = vmatprep.subr.bf16.mxu0 0
      %537 = vmatpush1.bf16.xpose.msra.mxu0 0
      %538 = vmatprep.subr.bf16.mxu0 0
      %539 = vmatpush1.bf16.xpose.msra.mxu0 0
      %540 = vmatprep.subr.bf16.mxu0 0
      %541 = vmatpush1.bf16.xpose.msra.mxu0 0
      %542 = vmatprep.subr.bf16.mxu0 0
      %543 = vmatpush1.bf16.xpose.msra.mxu0 0
      %544 = vmatprep.subr.bf16.mxu0 0
      %545 = vmatpush1.bf16.xpose.msra.mxu0 0
      %546 = vmatprep.subr.bf16.mxu0 0
      %547 = vmatpush1.bf16.xpose.msra.mxu0 0
      %548 = vmatprep.subr.bf16.mxu0 0
      %549 = vmatpush1.bf16.xpose.msra.mxu0 0
      %550 = vmatprep.subr.bf16.mxu0 0
      %551 = vmatpush1.bf16.xpose.msra.mxu0 0
      %552 = vmatprep.subr.bf16.mxu0 0
      %553 = vmatpush1.bf16.xpose.msra.mxu0 0
      %554 = vmatprep.mubr.bf16.mxu0 0
      %555 = vmatmul.mubr.bf16.gmra.mrb[0].mxu0 %v517
      %v556 = vpop.f32.mrb[0].mxu0
      %v557 = vadd.f32 %v171, %v556
      %v558 = vpop.f32.mrb[0].mxu0
      %v559 = vpop.f32.mrb[0].mxu0
      %v560 = vpop.f32.mrb[0].mxu0
      %561 = vdwg.mxu0
      %v562 = vsel %vm178, %v557, -inf
      %563 = vmax.xlane.f32.xlu0 %v562
      %v564 = vpop.xlane.xlu0 %563
      %v565 = vsub.f32 %v557, %v564
      %v566 = vmul.f32 %v565, 1.442695
      %v567 = vpow.pop %v566
      %v568 = vsel %vm178, %v567, 0.0
      %569 = vadd.xlane.f32.xlu0 %v568
      %v570 = vpop.xlane.xlu0 %569
      %v571 = vrcp.pop %v570
      %v572 = vmul.f32 %v567, %v571
      %v573 = vpack.c.bf16 %v572, %v572
      %574 = vrot.lane.b32.xlu0 %v175, 40
      %v575 = vpop.permute.xlu0 %574
      %v577 = vsel %vm178, %v573, 0
      %v580 = vsel %vm242, %v575, 0
      %582 = vmatprep.subr.bf16.mxu0 0
      %583 = vmatpush1.bf16.msra.mxu0 %v580
      %584 = vmatprep.subr.bf16.mxu0 0
      %585 = vmatpush1.bf16.msra.mxu0 0
      %586 = vmatprep.subr.bf16.mxu0 0
      %587 = vmatpush1.bf16.msra.mxu0 0
      %588 = vmatprep.subr.bf16.mxu0 0
      %589 = vmatpush1.bf16.msra.mxu0 0
      %590 = vmatprep.subr.bf16.mxu0 0
      %591 = vmatpush1.bf16.msra.mxu0 0
      %592 = vmatprep.subr.bf16.mxu0 0
      %593 = vmatpush1.bf16.msra.mxu0 0
      %594 = vmatprep.subr.bf16.mxu0 0
      %595 = vmatpush1.bf16.msra.mxu0 0
      %596 = vmatprep.subr.bf16.mxu0 0
      %597 = vmatpush1.bf16.msra.mxu0 0
      %598 = vmatprep.subr.bf16.mxu0 0
      %599 = vmatpush1.bf16.msra.mxu0 0
      %600 = vmatprep.subr.bf16.mxu0 0
      %601 = vmatpush1.bf16.msra.mxu0 0
      %602 = vmatprep.subr.bf16.mxu0 0
      %603 = vmatpush1.bf16.msra.mxu0 0
      %604 = vmatprep.subr.bf16.mxu0 0
      %605 = vmatpush1.bf16.msra.mxu0 0
      %606 = vmatprep.subr.bf16.mxu0 0
      %607 = vmatpush1.bf16.msra.mxu0 0
      %608 = vmatprep.subr.bf16.mxu0 0
      %609 = vmatpush1.bf16.msra.mxu0 0
      %610 = vmatprep.subr.bf16.mxu0 0
      %611 = vmatpush1.bf16.msra.mxu0 0
      %612 = vmatprep.subr.bf16.mxu0 0
      %613 = vmatpush1.bf16.msra.mxu0 0
      %614 = vmatprep.mubr.bf16.mxu0 0
      %615 = vmatmul.mubr.bf16.gmra.mrb[0].mxu0 %v577
      %v616 = vpop.f32.mrb[0].mxu0
      %v617 = vadd.f32 0.0, %v616
      %v618 = vpop.f32.mrb[0].mxu0
      %v619 = vpop.f32.mrb[0].mxu0
      %v620 = vpop.f32.mrb[0].mxu0
      %621 = vdwg.mxu0
      %v622 = vpack.c.bf16 %v617, %v617
      %624 = vrot.lane.b32.xlu0 %v400, 8
      %v625 = vpop.permute.xlu0 %624
      %627 = vrot.lane.b32.xlu0 %v511, 16
      %v628 = vpop.permute.xlu0 %627
      %630 = vrot.lane.b32.xlu0 %v622, 24
      %v631 = vpop.permute.xlu0 %630
      %v634 = vsel %vm178, %v286, %v625
      %vm635 = vcmask 130048
      %v637 = vsel %vm635, %v634, %v628
      %vm638 = vcmask 195584
      %v640 = vsel %vm638, %v637, %v631
      %vm642 = vcmask 257024
      %643 = vst.msk [vmem:[%s152] sm:$0xf] %vm642, %v640
      %p644 = scmp.lt.s32.totalorder %s13, 1
      %s645 = scalar_select %p644, %s13, 1
      %s646 = smul.addr %s645, 4
      %s647 = scalar_lea.vmem %s2, %s646
      // Predicated region
      $region29: #{clip_forward.44} parent=27 // pred_check
        %p648 = pneg %p83
      $region30: #{clip_forward.44} parent=27 // pred_check_branch
        %650 = sbr.rel (%p648) target = $region32
      $region31: #{clip_forward.44} parent=27 // pred_region
        _
      $region32: #{clip_forward.44} parent=27 // pred_fallthru
        _
    $region28: #{clip_forward.44} parent=5 // pred_fallthru
      _
    %p651 = scmp.le.s32.totalorder 2, %s8
    // Predicated region
    $region33: #{clip_forward.44} parent=5 // pred_check
      %p652 = pneg %p651
    $region34: #{clip_forward.44} parent=5 // pred_check_branch
      %654 = sbr.rel (%p652) target = $region36
    $region35: #{clip_forward.44} parent=5 // pred_region
      %s655 = ssub.s32 %s8, 2
      // Predicated region
      $region37: #{clip_forward.44} parent=35 // pred_check
        %p656 = pneg %p89
      $region38: #{clip_forward.44} parent=35 // pred_check_branch
        %658 = sbr.rel (%p656) target = $region40
      $region39: #{clip_forward.44} parent=35 // pred_region
        %p659 = scmp.lt.s32.totalorder %s14, 1
        %s660 = scalar_select %p659, %s14, 1
        %s661 = smul.addr %s660, 4
        %s662 = scalar_lea.vmem %s2, %s661
      $region40: #{clip_forward.44} parent=35 // pred_fallthru
        _
    $region36: #{clip_forward.44} parent=5 // pred_fallthru
      _
  $region6: #{clip_forward.44} parent=0 // loop_footer
    %s12 = sadd.s32 1, %s8
  $region7: #{clip_forward.44} parent=0 // loop_footer_branch
    %7 = sbr.rel target = $region3
  $region8: #{clip_forward.44} parent=0 // loop_exit
    _

</llo_original>
